<compile_context>
chip_gen: v6e
topology: v6e:2x2x1
jax: 0.10.0
libtpu: 0.0.40
codegen_flags: <defaults>
</compile_context>

<pallas_src>
import functools

import jax
import jax.numpy as jnp
from jax.experimental import pallas as pl
from jax.experimental.pallas import tpu as pltpu

# ---------------------------------------------------------------------------
# config (small, but shape-consistent with the module)
# ---------------------------------------------------------------------------
CONF = dict(
    adim=128,                 # BERT pooled-feature dim (conf['adim'])
    middle_hidden_size=64,    # mhs
    attention_nheads=4,
    out_hidden_size=64,
    num_labels=3,
)
RESNET_FEAT = 2048            # resnet50.fc.in_features
DIM_FF = 2048                 # nn.TransformerEncoderLayer default dim_feedforward
LN_EPS = 1e-5
BN_EPS = 1e-5
OUT_PAD = 128                 # lane-dense classifier output width

VMEM = pl.BlockSpec(memory_space=pltpu.MemorySpace.VMEM)
ANY = pl.BlockSpec(memory_space=pl.ANY)


# ---------------------------------------------------------------------------
# fused Pallas kernel
# ---------------------------------------------------------------------------
def _layernorm(x, gamma, beta):
    mu = jnp.mean(x, axis=-1, keepdims=True)
    var = jnp.mean((x - mu) ** 2, axis=-1, keepdims=True)
    return (x - mu) * jax.lax.rsqrt(var + LN_EPS) * gamma + beta


def _fused_kernel(cls_ref, img_ref,
                  imgw1_ref, imgb1_ref,             # img Linear(2048->2mhs), BN folded (bf16 W)
                  hcw_txt_ref, hcw_img_ref, hcb_ref,  # column-padded text/img head linears
                  wqkv_ref, bqkv_ref, wo_ref, bo_ref,
                  ln1g_ref, ln1b_ref,
                  ffw1_hbm, ffb1_ref, ffw2_hbm, ffb2_ref,
                  ln2g_ref, ln2b_ref,
                  cw1_ref, cb1_ref, cw2_ref, cb2_ref,
                  o_ref,
                  ffw1_buf, ffw2_buf, dma_sem, *, nheads):
    f32 = jnp.float32
    bf16 = jnp.bfloat16

    # ---- kick off the FFN weight DMAs (~1 MiB bf16) so they overlap the
    #      image-head / fused-head matmuls and attention ----
    cp1 = pltpu.make_async_copy(ffw1_hbm, ffw1_buf, dma_sem.at[0])
    cp2 = pltpu.make_async_copy(ffw2_hbm, ffw2_buf, dma_sem.at[1])
    cp1.start()
    cp2.start()

    # ---- image head: Linear(2048 -> 2*mhs) with BatchNorm1d(eval) folded in ----
    h_img = jnp.dot(img_ref[...], imgw1_ref[...],
                    preferred_element_type=f32) + imgb1_ref[...]

    # ---- fused feature == torch.cat([relu(text_lin), relu(img_lin)], dim=1),
    #      expressed as two column-padded dots summed (no runtime lane concat) ----
    fused = (jnp.dot(cls_ref[...], hcw_txt_ref[...], preferred_element_type=f32)
             + jnp.dot(h_img.astype(bf16), hcw_img_ref[...], preferred_element_type=f32)
             + hcb_ref[...])
    x = jnp.maximum(fused, 0.0)                                   # (L, D), D = 2*mhs

    # ---- TransformerEncoderLayer (post-norm, relu, eval dropout = identity),
    #      unbatched: sequence length L = batch size ----
    L, D = x.shape
    H = nheads
    hd = D // H

    # 1/sqrt(hd) is folded into the Q third of wqkv/bqkv at prep time.
    qkv = jnp.dot(x.astype(bf16), wqkv_ref[...],
                  preferred_element_type=f32) + bqkv_ref[...]
    q = jnp.transpose(qkv[:, 0 * D:1 * D].reshape(L, H, hd), (1, 0, 2)).astype(bf16)
    k = jnp.transpose(qkv[:, 1 * D:2 * D].reshape(L, H, hd), (1, 0, 2)).astype(bf16)
    v = jnp.transpose(qkv[:, 2 * D:3 * D].reshape(L, H, hd), (1, 0, 2)).astype(bf16)

    s = jnp.einsum('hqd,hkd->hqk', q, k, preferred_element_type=f32)   # (H, L, L)
    s = s - jnp.max(s, axis=-1, keepdims=True)
    p = jnp.exp(s)
    p = p * pl.reciprocal(jnp.sum(p, axis=-1, keepdims=True), approx=True)
    ctx = jnp.einsum('hqk,hkd->hqd', p.astype(bf16), v,
                     preferred_element_type=f32)                       # (H, L, hd)
    attn = jnp.transpose(ctx, (1, 0, 2)).reshape(L, D)                 # (L, D)
    attn = jnp.dot(attn.astype(bf16), wo_ref[...],
                   preferred_element_type=f32) + bo_ref[...]

    h1 = _layernorm(x + attn, ln1g_ref[...], ln1b_ref[...])

    # ---- FFN: wait for the manually-DMA'd weights just before use ----
    cp1.wait()
    ff = jnp.dot(h1.astype(bf16), ffw1_buf[...],
                 preferred_element_type=f32) + ffb1_ref[...]
    ff = jnp.maximum(ff, 0.0)
    cp2.wait()
    ff = jnp.dot(ff.astype(bf16), ffw2_buf[...],
                 preferred_element_type=f32) + ffb2_ref[...]
    h2 = _layernorm(h1 + ff, ln2g_ref[...], ln2b_ref[...])

    # ---- classifier: Linear -> ReLU -> Dropout(id) -> Linear (padded to 128 lanes) ----
    c = jnp.dot(h2.astype(bf16), cw1_ref[...], preferred_element_type=f32) + cb1_ref[...]
    c = jnp.maximum(c, 0.0)
    o_ref[...] = jnp.dot(c.astype(bf16), cw2_ref[...],
                         preferred_element_type=f32) + cb2_ref[...]


def fused_forward(clsfeat, imgfeat, kp):
    B = clsfeat.shape[0]
    d = 2 * CONF['middle_hidden_size']
    kern = functools.partial(_fused_kernel, nheads=CONF['attention_nheads'])
    args = (clsfeat.astype(jnp.bfloat16), imgfeat.astype(jnp.bfloat16),
            kp['img_w1'], kp['img_b1'],
            kp['hc_w_txt'], kp['hc_w_img'], kp['hc_b'],
            kp['attn_wqkv'], kp['attn_bqkv'], kp['attn_wo'], kp['attn_bo'],
            kp['ln1_g'], kp['ln1_b'],
            kp['ff_w1'], kp['ff_b1'], kp['ff_w2'], kp['ff_b2'],
            kp['ln2_g'], kp['ln2_b'],
            kp['cls_w1'], kp['cls_b1'], kp['cls_w2'], kp['cls_b2'])
    in_specs = [VMEM] * len(args)
    in_specs[13] = ANY   # ff_w1 stays in HBM; DMA'd manually inside the kernel
    in_specs[15] = ANY   # ff_w2 stays in HBM; DMA'd manually inside the kernel
    out = pl.pallas_call(
        kern,
        out_shape=jax.ShapeDtypeStruct((B, OUT_PAD), jnp.float32),
        in_specs=in_specs,
        out_specs=VMEM,
        scratch_shapes=[
            pltpu.VMEM((d, DIM_FF), jnp.bfloat16),
            pltpu.VMEM((DIM_FF, d), jnp.bfloat16),
            pltpu.SemaphoreType.DMA((2,)),
        ],
    )(*args)
    return out[:, :CONF['num_labels']]


# ---------------------------------------------------------------------------
# backbone stubs (plain JAX glue)
# ---------------------------------------------------------------------------
# TODO(synk): pretrained bert-base-multilingual-cased backbone is not reproducible
# here; this stub only produces a deterministic pooled (B, adim) feature.
def bert_backbone_stub(texts, masks, p):
    emb = p['tok_emb'][texts]                                    # (B, L, adim)
    m = masks[..., None].astype(jnp.float32)
    pooled = (emb * m).sum(axis=1) / jnp.maximum(m.sum(axis=1), 1.0)
    return jnp.tanh(pooled @ p['pool_w'] + p['pool_b'])          # (B, adim)


# TODO(synk): pretrained resnet50 backbone is not reproducible here; this stub
# only produces a deterministic (B, 2048) pooled feature from NCHW images.
def resnet_backbone_stub(imgs, p):
    pooled = imgs.mean(axis=(2, 3))                              # (B, C)
    return jnp.maximum(pooled @ p['rn_proj'], 0.0)               # (B, 2048)


# ---------------------------------------------------------------------------
# full model forward (one pallas_call + backbone stubs)
# ---------------------------------------------------------------------------
@jax.jit
def model_forward(texts, texts_mask, imgs, params, kparams):
    clsfeat = bert_backbone_stub(texts, texts_mask, params)      # (B, adim)
    imgfeat = resnet_backbone_stub(imgs, params)                 # (B, 2048)
    return fused_forward(clsfeat, imgfeat, kparams)              # (B, num_labels)


# ---------------------------------------------------------------------------
# deterministic parameter init (canonical per-layer params, (in, out) layout;
# real pretrained PyTorch nn.Linear weights are (out, in) and must be
# transposed when loaded)
# ---------------------------------------------------------------------------
def init_params(key):
    mhs = CONF['middle_hidden_size']
    adim = CONF['adim']
    d = 2 * mhs
    ks = iter(jax.random.split(key, 32))

    def w(shape, scale=0.02):
        return (scale * jax.random.normal(next(ks), shape)).astype(jnp.float32)

    return dict(
        # backbone stubs
        tok_emb=w((1000, adim)),
        pool_w=w((adim, adim)),
        pool_b=jnp.zeros((adim,), jnp.float32),
        rn_proj=w((3, RESNET_FEAT)),
        # text head: Linear(adim -> mhs)
        txt_w=w((adim, mhs)), txt_b=jnp.zeros((1, mhs), jnp.float32),
        # image head: Linear(2048 -> 2mhs) -> BN -> Linear(2mhs -> mhs)
        img_w1=w((RESNET_FEAT, d)), img_b1=jnp.zeros((1, d), jnp.float32),
        bn_gamma=jnp.ones((1, d), jnp.float32), bn_beta=jnp.zeros((1, d), jnp.float32),
        bn_mean=jnp.zeros((1, d), jnp.float32), bn_var=jnp.ones((1, d), jnp.float32),
        img_w2=w((d, mhs)), img_b2=jnp.zeros((1, mhs), jnp.float32),
        # transformer encoder layer
        attn_wqkv=w((d, 3 * d)), attn_bqkv=jnp.zeros((1, 3 * d), jnp.float32),
        attn_wo=w((d, d)), attn_bo=jnp.zeros((1, d), jnp.float32),
        ln1_g=jnp.ones((1, d), jnp.float32), ln1_b=jnp.zeros((1, d), jnp.float32),
        ff_w1=w((d, DIM_FF)), ff_b1=jnp.zeros((1, DIM_FF), jnp.float32),
        ff_w2=w((DIM_FF, d)), ff_b2=jnp.zeros((1, d), jnp.float32),
        ln2_g=jnp.ones((1, d), jnp.float32), ln2_b=jnp.zeros((1, d), jnp.float32),
        # classifier
        cls_w1=w((d, CONF['out_hidden_size'])),
        cls_b1=jnp.zeros((1, CONF['out_hidden_size']), jnp.float32),
        cls_w2=w((CONF['out_hidden_size'], CONF['num_labels'])),
        cls_b2=jnp.zeros((1, CONF['num_labels']), jnp.float32),
    )


def prepare_kernel_params(p):
    """Host-side prep: fold eval BatchNorm into the preceding Linear, fold the
    attention scale into the Q projection, column-pad the two head linears so
    their dots sum into the concatenated feature, pad the classifier output to
    128 lanes, and cast all MXU weights to bf16 (halves the weight DMA)."""
    mhs = CONF['middle_hidden_size']
    adim = CONF['adim']
    d = 2 * mhs
    hd = d // CONF['attention_nheads']
    f32, bf16 = jnp.float32, jnp.bfloat16

    # BN(eval)(x @ W1 + b1) == x @ (W1 * s) + (b1 * s + t)
    s = p['bn_gamma'] * jax.lax.rsqrt(p['bn_var'] + BN_EPS)          # (1, d)
    t = p['bn_beta'] - p['bn_mean'] * s
    img_w1 = (p['img_w1'] * s).astype(bf16)                           # (2048, d) bf16
    img_b1 = p['img_b1'] * s + t                                      # (1, d) f32

    # column-padded head weights: cls@hc_w_txt + h_img@hc_w_img ==
    # concat([cls@txt_w, h_img@img_w2], dim=1) without a runtime lane concat
    hc_w_txt = jnp.zeros((adim, d), f32).at[:, :mhs].set(p['txt_w']).astype(bf16)
    hc_w_img = jnp.zeros((d, d), f32).at[:, mhs:].set(p['img_w2']).astype(bf16)
    hc_b = jnp.concatenate([p['txt_b'], p['img_b2']], axis=-1)        # (1, d) f32

    # fold 1/sqrt(head_dim) into the Q third of the in_proj weight/bias
    scale = 1.0 / jnp.sqrt(jnp.float32(hd))
    wqkv = p['attn_wqkv'].at[:, :d].multiply(scale)
    bqkv = p['attn_bqkv'].at[:, :d].multiply(scale)

    # lane-dense classifier output (pad num_labels -> 128 zero columns)
    cls_w2 = jnp.zeros((CONF['out_hidden_size'], OUT_PAD), f32)
    cls_w2 = cls_w2.at[:, :CONF['num_labels']].set(p['cls_w2'])
    cls_b2 = jnp.zeros((1, OUT_PAD), f32).at[:, :CONF['num_labels']].set(p['cls_b2'])

    return dict(
        img_w1=img_w1, img_b1=img_b1,
        hc_w_txt=hc_w_txt, hc_w_img=hc_w_img, hc_b=hc_b,
        attn_wqkv=wqkv.astype(bf16), attn_bqkv=bqkv,
        attn_wo=p['attn_wo'].astype(bf16), attn_bo=p['attn_bo'],
        ln1_g=p['ln1_g'], ln1_b=p['ln1_b'],
        ff_w1=p['ff_w1'].astype(bf16), ff_b1=p['ff_b1'],
        ff_w2=p['ff_w2'].astype(bf16), ff_b2=p['ff_b2'],
        ln2_g=p['ln2_g'], ln2_b=p['ln2_b'],
        cls_w1=p['cls_w1'].astype(bf16), cls_b1=p['cls_b1'],
        cls_w2=cls_w2.astype(bf16), cls_b2=cls_b2,
    )


if __name__ == "__main__":
    key = jax.random.PRNGKey(0)
    k_p, k_t, k_i = jax.random.split(key, 3)

    B, L = 8, 16
    params = init_params(k_p)
    kparams = prepare_kernel_params(params)

    texts = jax.random.randint(k_t, (B, L), 0, 1000, dtype=jnp.int32)
    texts_mask = jnp.ones((B, L), jnp.float32)
    imgs = jax.random.normal(k_i, (B, 3, 16, 16), jnp.float32)   # NCHW like PyTorch

    out = model_forward(texts, texts_mask, imgs, params, kparams)
    jax.block_until_ready(out)
    assert out.shape == (B, CONF['num_labels'])
    print("KERNEL_OK")
</pallas_src>

<mosaic_0001>
module attributes {stable_mosaic.version = 11 : i64} {
  func.func @_fused_kernel(%arg0: memref<8x128xbf16, #tpu.memory_space<vmem>>, %arg1: memref<8x2048xbf16, #tpu.memory_space<vmem>>, %arg2: memref<2048x128xbf16, #tpu.memory_space<vmem>>, %arg3: memref<1x128xf32, #tpu.memory_space<vmem>>, %arg4: memref<128x128xbf16, #tpu.memory_space<vmem>>, %arg5: memref<128x128xbf16, #tpu.memory_space<vmem>>, %arg6: memref<1x128xf32, #tpu.memory_space<vmem>>, %arg7: memref<128x384xbf16, #tpu.memory_space<vmem>>, %arg8: memref<1x384xf32, #tpu.memory_space<vmem>>, %arg9: memref<128x128xbf16, #tpu.memory_space<vmem>>, %arg10: memref<1x128xf32, #tpu.memory_space<vmem>>, %arg11: memref<1x128xf32, #tpu.memory_space<vmem>>, %arg12: memref<1x128xf32, #tpu.memory_space<vmem>>, %arg13: memref<128x2048xbf16, #tpu.memory_space<any>>, %arg14: memref<1x2048xf32, #tpu.memory_space<vmem>>, %arg15: memref<2048x128xbf16, #tpu.memory_space<any>>, %arg16: memref<1x128xf32, #tpu.memory_space<vmem>>, %arg17: memref<1x128xf32, #tpu.memory_space<vmem>>, %arg18: memref<1x128xf32, #tpu.memory_space<vmem>>, %arg19: memref<128x64xbf16, #tpu.memory_space<vmem>>, %arg20: memref<1x64xf32, #tpu.memory_space<vmem>>, %arg21: memref<64x128xbf16, #tpu.memory_space<vmem>>, %arg22: memref<1x128xf32, #tpu.memory_space<vmem>>, %arg23: memref<8x128xf32, #tpu.memory_space<vmem>>, %arg24: memref<128x2048xbf16, #tpu.memory_space<vmem>>, %arg25: memref<2048x128xbf16, #tpu.memory_space<vmem>>, %arg26: memref<2x!tpu.dma_semaphore, #tpu.memory_space<semaphore_mem>>) attributes {dimension_semantics = [], scalar_prefetch = 0 : i64, scratch_operands = 3 : i64, tpu.core_type = #tpu.core_type<tc>} {
    %c0_i32 = arith.constant 0 : i32
    %0 = tpu.memref_slice %arg26[%c0_i32] : memref<2x!tpu.dma_semaphore, #tpu.memory_space<semaphore_mem>> -> memref<1x!tpu.dma_semaphore, #tpu.memory_space<semaphore_mem>>
    %1 = tpu.memref_squeeze %0 : memref<1x!tpu.dma_semaphore, #tpu.memory_space<semaphore_mem>> -> memref<!tpu.dma_semaphore, #tpu.memory_space<semaphore_mem>>
    tpu.enqueue_dma source(%arg13 : memref<128x2048xbf16, #tpu.memory_space<any>>) target(%arg24 : memref<128x2048xbf16, #tpu.memory_space<vmem>>) target_semaphore(%1 : memref<!tpu.dma_semaphore, #tpu.memory_space<semaphore_mem>>)
    %c1_i32 = arith.constant 1 : i32
    %2 = tpu.memref_slice %arg26[%c1_i32] : memref<2x!tpu.dma_semaphore, #tpu.memory_space<semaphore_mem>> -> memref<1x!tpu.dma_semaphore, #tpu.memory_space<semaphore_mem>>
    %3 = tpu.memref_squeeze %2 : memref<1x!tpu.dma_semaphore, #tpu.memory_space<semaphore_mem>> -> memref<!tpu.dma_semaphore, #tpu.memory_space<semaphore_mem>>
    tpu.enqueue_dma source(%arg15 : memref<2048x128xbf16, #tpu.memory_space<any>>) target(%arg25 : memref<2048x128xbf16, #tpu.memory_space<vmem>>) target_semaphore(%3 : memref<!tpu.dma_semaphore, #tpu.memory_space<semaphore_mem>>)
    %c0 = arith.constant 0 : index
    %c0_0 = arith.constant 0 : index
    %4 = vector.load %arg1[%c0, %c0_0] : memref<8x2048xbf16, #tpu.memory_space<vmem>>, vector<8x2048xbf16>
    %c0_1 = arith.constant 0 : index
    %c0_2 = arith.constant 0 : index
    %5 = vector.load %arg2[%c0_1, %c0_2] : memref<2048x128xbf16, #tpu.memory_space<vmem>>, vector<2048x128xbf16>
    %cst = arith.constant dense<0.000000e+00> : vector<8x128xf32>
    %6 = tpu.matmul %4, %5, %cst {dimension_numbers = #tpu.dot_dimension_numbers<[1], [0], [0], [1], [0, 0, 1, 1], [], []>} : vector<8x2048xbf16>, vector<2048x128xbf16>, vector<8x128xf32> -> vector<8x128xf32>
    %c0_3 = arith.constant 0 : index
    %c0_4 = arith.constant 0 : index
    %7 = vector.load %arg3[%c0_3, %c0_4] : memref<1x128xf32, #tpu.memory_space<vmem>>, vector<1x128xf32>
    %8 = vector.broadcast %7 : vector<1x128xf32> to vector<8x128xf32>
    %9 = arith.addf %6, %8 : vector<8x128xf32>
    %c0_5 = arith.constant 0 : index
    %c0_6 = arith.constant 0 : index
    %10 = vector.load %arg0[%c0_5, %c0_6] : memref<8x128xbf16, #tpu.memory_space<vmem>>, vector<8x128xbf16>
    %c0_7 = arith.constant 0 : index
    %c0_8 = arith.constant 0 : index
    %11 = vector.load %arg4[%c0_7, %c0_8] : memref<128x128xbf16, #tpu.memory_space<vmem>>, vector<128x128xbf16>
    %cst_9 = arith.constant dense<0.000000e+00> : vector<8x128xf32>
    %12 = tpu.matmul %10, %11, %cst_9 {dimension_numbers = #tpu.dot_dimension_numbers<[1], [0], [0], [1], [0, 0, 1, 1], [], []>} : vector<8x128xbf16>, vector<128x128xbf16>, vector<8x128xf32> -> vector<8x128xf32>
    %13 = arith.truncf %9 : vector<8x128xf32> to vector<8x128xbf16>
    %c0_10 = arith.constant 0 : index
    %c0_11 = arith.constant 0 : index
    %14 = vector.load %arg5[%c0_10, %c0_11] : memref<128x128xbf16, #tpu.memory_space<vmem>>, vector<128x128xbf16>
    %cst_12 = arith.constant dense<0.000000e+00> : vector<8x128xf32>
    %15 = tpu.matmul %13, %14, %cst_12 {dimension_numbers = #tpu.dot_dimension_numbers<[1], [0], [0], [1], [0, 0, 1, 1], [], []>} : vector<8x128xbf16>, vector<128x128xbf16>, vector<8x128xf32> -> vector<8x128xf32>
    %16 = arith.addf %12, %15 : vector<8x128xf32>
    %c0_13 = arith.constant 0 : index
    %c0_14 = arith.constant 0 : index
    %17 = vector.load %arg6[%c0_13, %c0_14] : memref<1x128xf32, #tpu.memory_space<vmem>>, vector<1x128xf32>
    %18 = vector.broadcast %17 : vector<1x128xf32> to vector<8x128xf32>
    %19 = arith.addf %16, %18 : vector<8x128xf32>
    %cst_15 = arith.constant 0.000000e+00 : f32
    %20 = vector.broadcast %cst_15 : f32 to vector<8x128xf32>
    %21 = arith.maximumf %19, %20 : vector<8x128xf32>
    %22 = arith.truncf %21 : vector<8x128xf32> to vector<8x128xbf16>
    %c0_16 = arith.constant 0 : index
    %c0_17 = arith.constant 0 : index
    %23 = vector.load %arg7[%c0_16, %c0_17] : memref<128x384xbf16, #tpu.memory_space<vmem>>, vector<128x384xbf16>
    %cst_18 = arith.constant dense<0.000000e+00> : vector<8x384xf32>
    %24 = tpu.matmul %22, %23, %cst_18 {dimension_numbers = #tpu.dot_dimension_numbers<[1], [0], [0], [1], [0, 0, 1, 1], [], []>} : vector<8x128xbf16>, vector<128x384xbf16>, vector<8x384xf32> -> vector<8x384xf32>
    %c0_19 = arith.constant 0 : index
    %c0_20 = arith.constant 0 : index
    %25 = vector.load %arg8[%c0_19, %c0_20] : memref<1x384xf32, #tpu.memory_space<vmem>>, vector<1x384xf32>
    %26 = vector.broadcast %25 : vector<1x384xf32> to vector<8x384xf32>
    %27 = arith.addf %24, %26 : vector<8x384xf32>
    %28 = vector.extract_strided_slice %27 {offsets = [0, 0], sizes = [8, 128], strides = [1, 1]} : vector<8x384xf32> to vector<8x128xf32>
    %29 = vector.shape_cast %28 : vector<8x128xf32> to vector<8x4x32xf32>
    %30 = tpu.transpose %29, [1, 0, 2] : vector<8x4x32xf32> -> vector<4x8x32xf32>
    %31 = arith.truncf %30 : vector<4x8x32xf32> to vector<4x8x32xbf16>
    %32 = vector.extract_strided_slice %27 {offsets = [0, 128], sizes = [8, 128], strides = [1, 1]} : vector<8x384xf32> to vector<8x128xf32>
    %33 = vector.shape_cast %32 : vector<8x128xf32> to vector<8x4x32xf32>
    %34 = tpu.transpose %33, [1, 0, 2] : vector<8x4x32xf32> -> vector<4x8x32xf32>
    %35 = arith.truncf %34 : vector<4x8x32xf32> to vector<4x8x32xbf16>
    %36 = vector.extract_strided_slice %27 {offsets = [0, 256], sizes = [8, 128], strides = [1, 1]} : vector<8x384xf32> to vector<8x128xf32>
    %37 = vector.shape_cast %36 : vector<8x128xf32> to vector<8x4x32xf32>
    %38 = tpu.transpose %37, [1, 0, 2] : vector<8x4x32xf32> -> vector<4x8x32xf32>
    %39 = arith.truncf %38 : vector<4x8x32xf32> to vector<4x8x32xbf16>
    "tpu.trace_start"() <{level = 10 : i32, message = "hqd,hkd->hqk"}> : () -> ()
    %cst_21 = arith.constant dense<0.000000e+00> : vector<4x8x8xf32>
    %40 = tpu.matmul %31, %35, %cst_21 {dimension_numbers = #tpu.dot_dimension_numbers<[2], [2], [1], [1], [0, 0, 0, 1, 1, 1], [0], [0]>} : vector<4x8x32xbf16>, vector<4x8x32xbf16>, vector<4x8x8xf32> -> vector<4x8x8xf32>
    "tpu.trace_stop"() : () -> ()
    %cst_22 = arith.constant dense<0xFF800000> : vector<4x8xf32>
    %41 = vector.multi_reduction <maximumf>, %40, %cst_22 [2] : vector<4x8x8xf32> to vector<4x8xf32>
    %42 = vector.shape_cast %41 : vector<4x8xf32> to vector<4x8x1xf32>
    %43 = vector.broadcast %42 : vector<4x8x1xf32> to vector<4x8x8xf32>
    %44 = arith.subf %40, %43 : vector<4x8x8xf32>
    %45 = math.exp %44 : vector<4x8x8xf32>
    %cst_23 = arith.constant dense<0.000000e+00> : vector<4x8xf32>
    %46 = vector.multi_reduction <add>, %45, %cst_23 [2] : vector<4x8x8xf32> to vector<4x8xf32>
    %47 = vector.shape_cast %46 : vector<4x8xf32> to vector<4x8x1xf32>
    %48 = tpu.reciprocal %47 {approx = true} : vector<4x8x1xf32> -> vector<4x8x1xf32>
    %49 = vector.broadcast %48 : vector<4x8x1xf32> to vector<4x8x8xf32>
    %50 = arith.mulf %45, %49 : vector<4x8x8xf32>
    %51 = arith.truncf %50 : vector<4x8x8xf32> to vector<4x8x8xbf16>
    "tpu.trace_start"() <{level = 10 : i32, message = "hqk,hkd->hqd"}> : () -> ()
    %cst_24 = arith.constant dense<0.000000e+00> : vector<4x8x32xf32>
    %52 = tpu.matmul %51, %39, %cst_24 {dimension_numbers = #tpu.dot_dimension_numbers<[2], [1], [1], [2], [0, 0, 0, 1, 1, 2], [0], [0]>} : vector<4x8x8xbf16>, vector<4x8x32xbf16>, vector<4x8x32xf32> -> vector<4x8x32xf32>
    "tpu.trace_stop"() : () -> ()
    %53 = tpu.transpose %52, [1, 0, 2] : vector<4x8x32xf32> -> vector<8x4x32xf32>
    %54 = vector.shape_cast %53 : vector<8x4x32xf32> to vector<8x128xf32>
    %55 = arith.truncf %54 : vector<8x128xf32> to vector<8x128xbf16>
    %c0_25 = arith.constant 0 : index
    %c0_26 = arith.constant 0 : index
    %56 = vector.load %arg9[%c0_25, %c0_26] : memref<128x128xbf16, #tpu.memory_space<vmem>>, vector<128x128xbf16>
    %cst_27 = arith.constant dense<0.000000e+00> : vector<8x128xf32>
    %57 = tpu.matmul %55, %56, %cst_27 {dimension_numbers = #tpu.dot_dimension_numbers<[1], [0], [0], [1], [0, 0, 1, 1], [], []>} : vector<8x128xbf16>, vector<128x128xbf16>, vector<8x128xf32> -> vector<8x128xf32>
    %c0_28 = arith.constant 0 : index
    %c0_29 = arith.constant 0 : index
    %58 = vector.load %arg10[%c0_28, %c0_29] : memref<1x128xf32, #tpu.memory_space<vmem>>, vector<1x128xf32>
    %59 = vector.broadcast %58 : vector<1x128xf32> to vector<8x128xf32>
    %60 = arith.addf %57, %59 : vector<8x128xf32>
    %61 = arith.addf %21, %60 : vector<8x128xf32>
    %c0_30 = arith.constant 0 : index
    %c0_31 = arith.constant 0 : index
    %62 = vector.load %arg11[%c0_30, %c0_31] : memref<1x128xf32, #tpu.memory_space<vmem>>, vector<1x128xf32>
    %c0_32 = arith.constant 0 : index
    %c0_33 = arith.constant 0 : index
    %63 = vector.load %arg12[%c0_32, %c0_33] : memref<1x128xf32, #tpu.memory_space<vmem>>, vector<1x128xf32>
    %cst_34 = arith.constant dense<0.000000e+00> : vector<8xf32>
    %64 = vector.multi_reduction <add>, %61, %cst_34 [1] : vector<8x128xf32> to vector<8xf32>
    %65 = vector.shape_cast %64 : vector<8xf32> to vector<8x1xf32>
    %cst_35 = arith.constant 1.280000e+02 : f32
    %66 = vector.broadcast %cst_35 : f32 to vector<8x1xf32>
    %67 = arith.divf %65, %66 : vector<8x1xf32>
    %68 = vector.broadcast %67 : vector<8x1xf32> to vector<8x128xf32>
    %69 = arith.subf %61, %68 : vector<8x128xf32>
    %70 = arith.mulf %69, %69 : vector<8x128xf32>
    %cst_36 = arith.constant dense<0.000000e+00> : vector<8xf32>
    %71 = vector.multi_reduction <add>, %70, %cst_36 [1] : vector<8x128xf32> to vector<8xf32>
    %72 = vector.shape_cast %71 : vector<8xf32> to vector<8x1xf32>
    %cst_37 = arith.constant 1.280000e+02 : f32
    %73 = vector.broadcast %cst_37 : f32 to vector<8x1xf32>
    %74 = arith.divf %72, %73 : vector<8x1xf32>
    %75 = vector.broadcast %67 : vector<8x1xf32> to vector<8x128xf32>
    %76 = arith.subf %61, %75 : vector<8x128xf32>
    %cst_38 = arith.constant 9.99999974E-6 : f32
    %77 = vector.broadcast %cst_38 : f32 to vector<8x1xf32>
    %78 = arith.addf %74, %77 : vector<8x1xf32>
    %79 = math.rsqrt %78 : vector<8x1xf32>
    %80 = vector.broadcast %79 : vector<8x1xf32> to vector<8x128xf32>
    %81 = arith.mulf %76, %80 : vector<8x128xf32>
    %82 = vector.broadcast %62 : vector<1x128xf32> to vector<8x128xf32>
    %83 = arith.mulf %81, %82 : vector<8x128xf32>
    %84 = vector.broadcast %63 : vector<1x128xf32> to vector<8x128xf32>
    %85 = arith.addf %83, %84 : vector<8x128xf32>
    %c0_i32_39 = arith.constant 0 : i32
    %86 = tpu.memref_slice %arg26[%c0_i32_39] : memref<2x!tpu.dma_semaphore, #tpu.memory_space<semaphore_mem>> -> memref<1x!tpu.dma_semaphore, #tpu.memory_space<semaphore_mem>>
    %87 = tpu.memref_squeeze %86 : memref<1x!tpu.dma_semaphore, #tpu.memory_space<semaphore_mem>> -> memref<!tpu.dma_semaphore, #tpu.memory_space<semaphore_mem>>
    tpu.wait_dma2 semaphore(%87 : memref<!tpu.dma_semaphore, #tpu.memory_space<semaphore_mem>>) src(%arg13 : memref<128x2048xbf16, #tpu.memory_space<any>>) dst(%arg24 : memref<128x2048xbf16, #tpu.memory_space<vmem>>)
    %88 = arith.truncf %85 : vector<8x128xf32> to vector<8x128xbf16>
    %c0_40 = arith.constant 0 : index
    %c0_41 = arith.constant 0 : index
    %89 = vector.load %arg24[%c0_40, %c0_41] : memref<128x2048xbf16, #tpu.memory_space<vmem>>, vector<128x2048xbf16>
    %cst_42 = arith.constant dense<0.000000e+00> : vector<8x2048xf32>
    %90 = tpu.matmul %88, %89, %cst_42 {dimension_numbers = #tpu.dot_dimension_numbers<[1], [0], [0], [1], [0, 0, 1, 1], [], []>} : vector<8x128xbf16>, vector<128x2048xbf16>, vector<8x2048xf32> -> vector<8x2048xf32>
    %c0_43 = arith.constant 0 : index
    %c0_44 = arith.constant 0 : index
    %91 = vector.load %arg14[%c0_43, %c0_44] : memref<1x2048xf32, #tpu.memory_space<vmem>>, vector<1x2048xf32>
    %92 = vector.broadcast %91 : vector<1x2048xf32> to vector<8x2048xf32>
    %93 = arith.addf %90, %92 : vector<8x2048xf32>
    %cst_45 = arith.constant 0.000000e+00 : f32
    %94 = vector.broadcast %cst_45 : f32 to vector<8x2048xf32>
    %95 = arith.maximumf %93, %94 : vector<8x2048xf32>
    %c1_i32_46 = arith.constant 1 : i32
    %96 = tpu.memref_slice %arg26[%c1_i32_46] : memref<2x!tpu.dma_semaphore, #tpu.memory_space<semaphore_mem>> -> memref<1x!tpu.dma_semaphore, #tpu.memory_space<semaphore_mem>>
    %97 = tpu.memref_squeeze %96 : memref<1x!tpu.dma_semaphore, #tpu.memory_space<semaphore_mem>> -> memref<!tpu.dma_semaphore, #tpu.memory_space<semaphore_mem>>
    tpu.wait_dma2 semaphore(%97 : memref<!tpu.dma_semaphore, #tpu.memory_space<semaphore_mem>>) src(%arg15 : memref<2048x128xbf16, #tpu.memory_space<any>>) dst(%arg25 : memref<2048x128xbf16, #tpu.memory_space<vmem>>)
    %98 = arith.truncf %95 : vector<8x2048xf32> to vector<8x2048xbf16>
    %c0_47 = arith.constant 0 : index
    %c0_48 = arith.constant 0 : index
    %99 = vector.load %arg25[%c0_47, %c0_48] : memref<2048x128xbf16, #tpu.memory_space<vmem>>, vector<2048x128xbf16>
    %cst_49 = arith.constant dense<0.000000e+00> : vector<8x128xf32>
    %100 = tpu.matmul %98, %99, %cst_49 {dimension_numbers = #tpu.dot_dimension_numbers<[1], [0], [0], [1], [0, 0, 1, 1], [], []>} : vector<8x2048xbf16>, vector<2048x128xbf16>, vector<8x128xf32> -> vector<8x128xf32>
    %c0_50 = arith.constant 0 : index
    %c0_51 = arith.constant 0 : index
    %101 = vector.load %arg16[%c0_50, %c0_51] : memref<1x128xf32, #tpu.memory_space<vmem>>, vector<1x128xf32>
    %102 = vector.broadcast %101 : vector<1x128xf32> to vector<8x128xf32>
    %103 = arith.addf %100, %102 : vector<8x128xf32>
    %104 = arith.addf %85, %103 : vector<8x128xf32>
    %c0_52 = arith.constant 0 : index
    %c0_53 = arith.constant 0 : index
    %105 = vector.load %arg17[%c0_52, %c0_53] : memref<1x128xf32, #tpu.memory_space<vmem>>, vector<1x128xf32>
    %c0_54 = arith.constant 0 : index
    %c0_55 = arith.constant 0 : index
    %106 = vector.load %arg18[%c0_54, %c0_55] : memref<1x128xf32, #tpu.memory_space<vmem>>, vector<1x128xf32>
    %cst_56 = arith.constant dense<0.000000e+00> : vector<8xf32>
    %107 = vector.multi_reduction <add>, %104, %cst_56 [1] : vector<8x128xf32> to vector<8xf32>
    %108 = vector.shape_cast %107 : vector<8xf32> to vector<8x1xf32>
    %cst_57 = arith.constant 1.280000e+02 : f32
    %109 = vector.broadcast %cst_57 : f32 to vector<8x1xf32>
    %110 = arith.divf %108, %109 : vector<8x1xf32>
    %111 = vector.broadcast %110 : vector<8x1xf32> to vector<8x128xf32>
    %112 = arith.subf %104, %111 : vector<8x128xf32>
    %113 = arith.mulf %112, %112 : vector<8x128xf32>
    %cst_58 = arith.constant dense<0.000000e+00> : vector<8xf32>
    %114 = vector.multi_reduction <add>, %113, %cst_58 [1] : vector<8x128xf32> to vector<8xf32>
    %115 = vector.shape_cast %114 : vector<8xf32> to vector<8x1xf32>
    %cst_59 = arith.constant 1.280000e+02 : f32
    %116 = vector.broadcast %cst_59 : f32 to vector<8x1xf32>
    %117 = arith.divf %115, %116 : vector<8x1xf32>
    %118 = vector.broadcast %110 : vector<8x1xf32> to vector<8x128xf32>
    %119 = arith.subf %104, %118 : vector<8x128xf32>
    %cst_60 = arith.constant 9.99999974E-6 : f32
    %120 = vector.broadcast %cst_60 : f32 to vector<8x1xf32>
    %121 = arith.addf %117, %120 : vector<8x1xf32>
    %122 = math.rsqrt %121 : vector<8x1xf32>
    %123 = vector.broadcast %122 : vector<8x1xf32> to vector<8x128xf32>
    %124 = arith.mulf %119, %123 : vector<8x128xf32>
    %125 = vector.broadcast %105 : vector<1x128xf32> to vector<8x128xf32>
    %126 = arith.mulf %124, %125 : vector<8x128xf32>
    %127 = vector.broadcast %106 : vector<1x128xf32> to vector<8x128xf32>
    %128 = arith.addf %126, %127 : vector<8x128xf32>
    %129 = arith.truncf %128 : vector<8x128xf32> to vector<8x128xbf16>
    %c0_61 = arith.constant 0 : index
    %c0_62 = arith.constant 0 : index
    %130 = vector.load %arg19[%c0_61, %c0_62] : memref<128x64xbf16, #tpu.memory_space<vmem>>, vector<128x64xbf16>
    %cst_63 = arith.constant dense<0.000000e+00> : vector<8x64xf32>
    %131 = tpu.matmul %129, %130, %cst_63 {dimension_numbers = #tpu.dot_dimension_numbers<[1], [0], [0], [1], [0, 0, 1, 1], [], []>} : vector<8x128xbf16>, vector<128x64xbf16>, vector<8x64xf32> -> vector<8x64xf32>
    %c0_64 = arith.constant 0 : index
    %c0_65 = arith.constant 0 : index
    %132 = vector.load %arg20[%c0_64, %c0_65] : memref<1x64xf32, #tpu.memory_space<vmem>>, vector<1x64xf32>
    %133 = vector.broadcast %132 : vector<1x64xf32> to vector<8x64xf32>
    %134 = arith.addf %131, %133 : vector<8x64xf32>
    %cst_66 = arith.constant 0.000000e+00 : f32
    %135 = vector.broadcast %cst_66 : f32 to vector<8x64xf32>
    %136 = arith.maximumf %134, %135 : vector<8x64xf32>
    %137 = arith.truncf %136 : vector<8x64xf32> to vector<8x64xbf16>
    %c0_67 = arith.constant 0 : index
    %c0_68 = arith.constant 0 : index
    %138 = vector.load %arg21[%c0_67, %c0_68] : memref<64x128xbf16, #tpu.memory_space<vmem>>, vector<64x128xbf16>
    %cst_69 = arith.constant dense<0.000000e+00> : vector<8x128xf32>
    %139 = tpu.matmul %137, %138, %cst_69 {dimension_numbers = #tpu.dot_dimension_numbers<[1], [0], [0], [1], [0, 0, 1, 1], [], []>} : vector<8x64xbf16>, vector<64x128xbf16>, vector<8x128xf32> -> vector<8x128xf32>
    %c0_70 = arith.constant 0 : index
    %c0_71 = arith.constant 0 : index
    %140 = vector.load %arg22[%c0_70, %c0_71] : memref<1x128xf32, #tpu.memory_space<vmem>>, vector<1x128xf32>
    %141 = vector.broadcast %140 : vector<1x128xf32> to vector<8x128xf32>
    %142 = arith.addf %139, %141 : vector<8x128xf32>
    %c0_72 = arith.constant 0 : index
    %c0_73 = arith.constant 0 : index
    %143 = vector.load %arg23[%c0_72, %c0_73] : memref<8x128xf32, #tpu.memory_space<vmem>>, vector<8x128xf32>
    tpu.vector_store %arg23[%c0_72, %c0_73], %142 {strides = array<i32>} : memref<8x128xf32, #tpu.memory_space<vmem>>, vector<8x128xf32>,
    return
  }
}

</mosaic_0001>

<llo_original>
// kernel: model_forward.1
$region0: #{model_forward.1}
  #allocation0 [shape = 'u32[]', space=smem, size = 0x4, offset = 0x4, fixed_abs, tag = 'smem constant byte address 0x4 - core index']
  #allocation1 [shape = 'u32[144,128]{1,0:T(1,128)}', space=vmem, size = 0x12000, scoped, tag = 'internal scratch']
  #allocation2 [shape = 'bf16[128,2048]{1,0:T(8,128)(2,1)}', space=vmem, size = 0x80000, scoped, tag = 'scratch operand']
  #allocation3 [shape = 'bf16[2048,128]{1,0:T(8,128)(2,1)}', space=vmem, size = 0x80000, scoped, tag = 'scratch operand']
  #allocation4 [shape = 's32[2]{0}', space=sflag, size = 0x8, scoped, tag = 'scratch operand']
  #allocation30 [shape = 's32[]', space=sflag, size = 0x4, offset = 0, fixed_abs, tag = 'sflag constant byte address 0x0 - dummy sync flag']
  #allocation31 [shape = 's32[]', space=sflag, size = 0x4, offset = 0, fixed_abs, tag = 'sflag constant byte address 0x0 - dummy sync flag']
  #allocation32 [shape = 's32[]', space=sflag, size = 0x4, offset = 0, fixed_abs, tag = 'sflag constant byte address 0x0 - dummy sync flag']
  #allocation33 [shape = 'u32[]', space=smem, size = 0x4, offset = 0x44, fixed_abs, tag = 'smem constant byte address 0x44 - assertion arg 0']
  #allocation34 [shape = 'u32[]', space=smem, size = 0x4, offset = 0x48, fixed_abs, tag = 'smem constant byte address 0x48 - assertion arg 1']
  %s0 = inlined_call_operand.vmem [shape: bf16[8,128], index: 0, kind: input, shape index: {}]
  %s1 = inlined_call_operand.vmem [shape: bf16[8,2048], index: 1, kind: input, shape index: {}]
  %s2 = inlined_call_operand.vmem [shape: bf16[2048,128], index: 2, kind: input, shape index: {}]
  %s3 = inlined_call_operand.hbm [shape: f32[1,128], index: 3, kind: input, shape index: {}]
  %s4 = inlined_call_operand.hbm [shape: bf16[128,128], index: 4, kind: input, shape index: {}]
  %s5 = inlined_call_operand.hbm [shape: bf16[128,128], index: 5, kind: input, shape index: {}]
  %s6 = inlined_call_operand.hbm [shape: f32[1,128], index: 6, kind: input, shape index: {}]
  %s7 = inlined_call_operand.hbm [shape: bf16[128,384], index: 7, kind: input, shape index: {}]
  %s8 = inlined_call_operand.hbm [shape: f32[1,384], index: 8, kind: input, shape index: {}]
  %s9 = inlined_call_operand.hbm [shape: bf16[128,128], index: 9, kind: input, shape index: {}]
  %s10 = inlined_call_operand.hbm [shape: f32[1,128], index: 10, kind: input, shape index: {}]
  %s11 = inlined_call_operand.hbm [shape: f32[1,128], index: 11, kind: input, shape index: {}]
  %s12 = inlined_call_operand.hbm [shape: f32[1,128], index: 12, kind: input, shape index: {}]
  %s13 = inlined_call_operand.vmem [shape: bf16[128,2048], index: 13, kind: input, shape index: {}]
  %s14 = inlined_call_operand.vmem [shape: f32[1,2048], index: 14, kind: input, shape index: {}]
  %s15 = inlined_call_operand.hbm [shape: bf16[2048,128], index: 15, kind: input, shape index: {}]
  %s16 = inlined_call_operand.hbm [shape: f32[1,128], index: 16, kind: input, shape index: {}]
  %s17 = inlined_call_operand.hbm [shape: f32[1,128], index: 17, kind: input, shape index: {}]
  %s18 = inlined_call_operand.hbm [shape: f32[1,128], index: 18, kind: input, shape index: {}]
  %s19 = inlined_call_operand.vmem [shape: bf16[128,64], index: 19, kind: input, shape index: {}]
  %s20 = inlined_call_operand.hbm [shape: f32[1,64], index: 20, kind: input, shape index: {}]
  %s21 = inlined_call_operand.hbm [shape: bf16[64,128], index: 21, kind: input, shape index: {}]
  %s22 = inlined_call_operand.hbm [shape: f32[1,128], index: 22, kind: input, shape index: {}]
  %s23 = inlined_call_operand.vmem [shape: f32[8,128], index: 23, kind: output, shape index: {}]
  %s24 = sld [smem:[#allocation0]]
  $region196: #{model_forward.1} parent=0
    _
  %s26 = ssub.s32 1, %s24
  %s27 = scalar_select 0, %s26, %s24
  $region1: #{model_forward.1} parent=0
    #allocation5 [shape = 'u8[512]{0}', space=vmem, size = 0x400, scoped, tag = 'input window, operand 3, single buffered']
    #allocation6 [shape = 's32[1]{0}', space=sflag, size = 0x4, scoped, tag = 'scoped memory for model_forward.1']
    #allocation7 [shape = 'u8[32768]{0}', space=vmem, size = 0x8000, scoped, tag = 'input window, operand 4, single buffered']
    #allocation8 [shape = 's32[1]{0}', space=sflag, size = 0x4, scoped, tag = 'scoped memory for model_forward.1']
    #allocation9 [shape = 'u8[32768]{0}', space=vmem, size = 0x8000, scoped, tag = 'input window, operand 5, single buffered']
    #allocation10 [shape = 'u8[512]{0}', space=vmem, size = 0x400, scoped, tag = 'input window, operand 6, single buffered']
    #allocation11 [shape = 's32[1]{0}', space=sflag, size = 0x4, scoped, tag = 'scoped memory for model_forward.1']
    #allocation12 [shape = 'u8[98304]{0}', space=vmem, size = 0x18000, scoped, tag = 'input window, operand 7, single buffered']
    #allocation13 [shape = 'u8[1536]{0}', space=vmem, size = 0x800, scoped, tag = 'input window, operand 8, single buffered']
    #allocation14 [shape = 's32[1]{0}', space=sflag, size = 0x4, scoped, tag = 'scoped memory for model_forward.1']
    #allocation15 [shape = 'u8[32768]{0}', space=vmem, size = 0x8000, scoped, tag = 'input window, operand 9, single buffered']
    #allocation16 [shape = 'u8[512]{0}', space=vmem, size = 0x400, scoped, tag = 'input window, operand 10, single buffered']
    #allocation17 [shape = 's32[1]{0}', space=sflag, size = 0x4, scoped, tag = 'scoped memory for model_forward.1']
    #allocation18 [shape = 'u8[512]{0}', space=vmem, size = 0x400, scoped, tag = 'input window, operand 11, single buffered']
    #allocation19 [shape = 'u8[512]{0}', space=vmem, size = 0x400, scoped, tag = 'input window, operand 12, single buffered']
    #allocation20 [shape = 's32[1]{0}', space=sflag, size = 0x4, scoped, tag = 'scoped memory for model_forward.1']
    #allocation21 [shape = 'u8[512]{0}', space=vmem, size = 0x400, scoped, tag = 'input window, operand 16, single buffered']
    #allocation22 [shape = 'u8[512]{0}', space=vmem, size = 0x400, scoped, tag = 'input window, operand 17, single buffered']
    #allocation23 [shape = 's32[1]{0}', space=sflag, size = 0x4, scoped, tag = 'scoped memory for model_forward.1']
    #allocation24 [shape = 'u8[512]{0}', space=vmem, size = 0x400, scoped, tag = 'input window, operand 18, single buffered']
    #allocation25 [shape = 'u8[512]{0}', space=vmem, size = 0x400, scoped, tag = 'input window, operand 20, single buffered']
    #allocation26 [shape = 's32[1]{0}', space=sflag, size = 0x4, scoped, tag = 'scoped memory for model_forward.1']
    #allocation27 [shape = 'u8[16384]{0}', space=vmem, size = 0x4000, scoped, tag = 'input window, operand 21, single buffered']
    #allocation28 [shape = 'u8[512]{0}', space=vmem, size = 0x400, scoped, tag = 'input window, operand 22, single buffered']
    #allocation29 [shape = 's32[1]{0}', space=sflag, size = 0x4, scoped, tag = 'scoped memory for model_forward.1']
    %28 = vsyncpa [#allocation6], 0
    %29 = vsyncpa [#allocation8], 0
    %30 = vsyncpa [#allocation11], 0
    %31 = vsyncpa [#allocation14], 0
    %32 = vsyncpa [#allocation17], 0
    %33 = vsyncpa [#allocation20], 0
    %34 = vsyncpa [#allocation23], 0
    %35 = vsyncpa [#allocation26], 0
    %36 = vsyncpa [#allocation29], 0
    // Predicated region
    $region2: #{model_forward.1} parent=1 // pred_check
      _
    $region3: #{model_forward.1} parent=1 // pred_check_branch
      %38 = sbr.rel (0) target = $region5
    $region4: #{model_forward.1} parent=1 // pred_region
      _
    $region5: #{model_forward.1} parent=1 // pred_fallthru
      _
    // Predicated region
    $region6: #{model_forward.1} parent=1 // pred_check
      _
    $region7: #{model_forward.1} parent=1 // pred_check_branch
      %40 = sbr.rel (0) target = $region9
    $region8: #{model_forward.1} parent=1 // pred_region
      _
    $region9: #{model_forward.1} parent=1 // pred_fallthru
      _
    // Predicated region
    $region10: #{model_forward.1} parent=1 // pred_check
      _
    $region11: #{model_forward.1} parent=1 // pred_check_branch
      %42 = sbr.rel (0) target = $region13
    $region12: #{model_forward.1} parent=1 // pred_region
      _
    $region13: #{model_forward.1} parent=1 // pred_fallthru
      _
    // Predicated region
    $region14: #{model_forward.1} parent=1 // pred_check
      _
    $region15: #{model_forward.1} parent=1 // pred_check_branch
      %44 = sbr.rel (0) target = $region17
    $region16: #{model_forward.1} parent=1 // pred_region
      %s46 = ssub.s32 16, 16
      %47 = vsyncadd [#allocation6], %s46
      %s49 = sshll.u32 [#allocation5], 4
      %s50 = int_to_ptr.vmem [resolvable:$true] %s49
      %52 = dma.hbm_to_vmem [thread:$0]  %s3, 16, %s50, [#allocation6]
    $region17: #{model_forward.1} parent=1 // pred_fallthru
      _
    // Predicated region
    $region18: #{model_forward.1} parent=1 // pred_check
      _
    $region19: #{model_forward.1} parent=1 // pred_check_branch
      %54 = sbr.rel (0) target = $region21
    $region20: #{model_forward.1} parent=1 // pred_region
      %s56 = ssub.s32 1024, 1024
      %57 = vsyncadd [#allocation8], %s56
      %s58 = sshll.u32 [#allocation7], 4
      %s59 = int_to_ptr.vmem [resolvable:$true] %s58
      %64 = dma.hbm_to_vmem [thread:$0]  %s4, 1024, %s59, [#allocation8], 64, 64, 4
    $region21: #{model_forward.1} parent=1 // pred_fallthru
      _
    // Predicated region
    $region22: #{model_forward.1} parent=1 // pred_check
      _
    $region23: #{model_forward.1} parent=1 // pred_check_branch
      %66 = sbr.rel (0) target = $region25
    $region24: #{model_forward.1} parent=1 // pred_region
      %s68 = ssub.s32 1024, 1024
      %69 = vsyncadd [#allocation8], %s68
      %s70 = sshll.u32 [#allocation9], 4
      %s71 = int_to_ptr.vmem [resolvable:$true] %s70
      %76 = dma.hbm_to_vmem [thread:$0]  %s5, 1024, %s71, [#allocation8], 64, 64, 4
    $region25: #{model_forward.1} parent=1 // pred_fallthru
      _
    // Predicated region
    $region26: #{model_forward.1} parent=1 // pred_check
      _
    $region27: #{model_forward.1} parent=1 // pred_check_branch
      %78 = sbr.rel (0) target = $region29
    $region28: #{model_forward.1} parent=1 // pred_region
      %s80 = ssub.s32 16, 16
      %81 = vsyncadd [#allocation11], %s80
      %s83 = sshll.u32 [#allocation10], 4
      %s84 = int_to_ptr.vmem [resolvable:$true] %s83
      %86 = dma.hbm_to_vmem [thread:$0]  %s6, 16, %s84, [#allocation11]
    $region29: #{model_forward.1} parent=1 // pred_fallthru
      _
    // Predicated region
    $region30: #{model_forward.1} parent=1 // pred_check
      _
    $region31: #{model_forward.1} parent=1 // pred_check_branch
      %88 = sbr.rel (0) target = $region33
    $region32: #{model_forward.1} parent=1 // pred_region
      %s90 = ssub.s32 3072, 3072
      %91 = vsyncadd [#allocation11], %s90
      %s92 = sshll.u32 [#allocation12], 4
      %s93 = int_to_ptr.vmem [resolvable:$true] %s92
      %98 = dma.hbm_to_vmem [thread:$0]  %s7, 3072, %s93, [#allocation11], 192, 192, 12
    $region33: #{model_forward.1} parent=1 // pred_fallthru
      _
    // Predicated region
    $region34: #{model_forward.1} parent=1 // pred_check
      _
    $region35: #{model_forward.1} parent=1 // pred_check_branch
      %100 = sbr.rel (0) target = $region37
    $region36: #{model_forward.1} parent=1 // pred_region
      %s102 = ssub.s32 48, 48
      %103 = vsyncadd [#allocation14], %s102
      %s105 = sshll.u32 [#allocation13], 4
      %s106 = int_to_ptr.vmem [resolvable:$true] %s105
      %108 = dma.hbm_to_vmem [thread:$0]  %s8, 48, %s106, [#allocation14]
    $region37: #{model_forward.1} parent=1 // pred_fallthru
      _
    // Predicated region
    $region38: #{model_forward.1} parent=1 // pred_check
      _
    $region39: #{model_forward.1} parent=1 // pred_check_branch
      %110 = sbr.rel (0) target = $region41
    $region40: #{model_forward.1} parent=1 // pred_region
      %s112 = ssub.s32 1024, 1024
      %113 = vsyncadd [#allocation14], %s112
      %s114 = sshll.u32 [#allocation15], 4
      %s115 = int_to_ptr.vmem [resolvable:$true] %s114
      %120 = dma.hbm_to_vmem [thread:$0]  %s9, 1024, %s115, [#allocation14], 64, 64, 4
    $region41: #{model_forward.1} parent=1 // pred_fallthru
      _
    // Predicated region
    $region42: #{model_forward.1} parent=1 // pred_check
      _
    $region43: #{model_forward.1} parent=1 // pred_check_branch
      %122 = sbr.rel (0) target = $region45
    $region44: #{model_forward.1} parent=1 // pred_region
      %s124 = ssub.s32 16, 16
      %125 = vsyncadd [#allocation17], %s124
      %s127 = sshll.u32 [#allocation16], 4
      %s128 = int_to_ptr.vmem [resolvable:$true] %s127
      %130 = dma.hbm_to_vmem [thread:$0]  %s10, 16, %s128, [#allocation17]
    $region45: #{model_forward.1} parent=1 // pred_fallthru
      _
    // Predicated region
    $region46: #{model_forward.1} parent=1 // pred_check
      _
    $region47: #{model_forward.1} parent=1 // pred_check_branch
      %132 = sbr.rel (0) target = $region49
    $region48: #{model_forward.1} parent=1 // pred_region
      %s134 = ssub.s32 16, 16
      %135 = vsyncadd [#allocation17], %s134
      %s137 = sshll.u32 [#allocation18], 4
      %s138 = int_to_ptr.vmem [resolvable:$true] %s137
      %140 = dma.hbm_to_vmem [thread:$0]  %s11, 16, %s138, [#allocation17]
    $region49: #{model_forward.1} parent=1 // pred_fallthru
      _
    // Predicated region
    $region50: #{model_forward.1} parent=1 // pred_check
      _
    $region51: #{model_forward.1} parent=1 // pred_check_branch
      %142 = sbr.rel (0) target = $region53
    $region52: #{model_forward.1} parent=1 // pred_region
      %s144 = ssub.s32 16, 16
      %145 = vsyncadd [#allocation20], %s144
      %s147 = sshll.u32 [#allocation19], 4
      %s148 = int_to_ptr.vmem [resolvable:$true] %s147
      %150 = dma.hbm_to_vmem [thread:$0]  %s12, 16, %s148, [#allocation20]
    $region53: #{model_forward.1} parent=1 // pred_fallthru
      _
    // Predicated region
    $region54: #{model_forward.1} parent=1 // pred_check
      _
    $region55: #{model_forward.1} parent=1 // pred_check_branch
      %152 = sbr.rel (0) target = $region57
    $region56: #{model_forward.1} parent=1 // pred_region
      _
    $region57: #{model_forward.1} parent=1 // pred_fallthru
      _
    // Predicated region
    $region58: #{model_forward.1} parent=1 // pred_check
      _
    $region59: #{model_forward.1} parent=1 // pred_check_branch
      %154 = sbr.rel (0) target = $region61
    $region60: #{model_forward.1} parent=1 // pred_region
      %s156 = ssub.s32 16, 16
      %157 = vsyncadd [#allocation20], %s156
      %s159 = sshll.u32 [#allocation21], 4
      %s160 = int_to_ptr.vmem [resolvable:$true] %s159
      %162 = dma.hbm_to_vmem [thread:$0]  %s16, 16, %s160, [#allocation20]
    $region61: #{model_forward.1} parent=1 // pred_fallthru
      _
    // Predicated region
    $region62: #{model_forward.1} parent=1 // pred_check
      _
    $region63: #{model_forward.1} parent=1 // pred_check_branch
      %164 = sbr.rel (0) target = $region65
    $region64: #{model_forward.1} parent=1 // pred_region
      %s166 = ssub.s32 16, 16
      %167 = vsyncadd [#allocation23], %s166
      %s169 = sshll.u32 [#allocation22], 4
      %s170 = int_to_ptr.vmem [resolvable:$true] %s169
      %172 = dma.hbm_to_vmem [thread:$0]  %s17, 16, %s170, [#allocation23]
    $region65: #{model_forward.1} parent=1 // pred_fallthru
      _
    // Predicated region
    $region66: #{model_forward.1} parent=1 // pred_check
      _
    $region67: #{model_forward.1} parent=1 // pred_check_branch
      %174 = sbr.rel (0) target = $region69
    $region68: #{model_forward.1} parent=1 // pred_region
      %s176 = ssub.s32 16, 16
      %177 = vsyncadd [#allocation23], %s176
      %s179 = sshll.u32 [#allocation24], 4
      %s180 = int_to_ptr.vmem [resolvable:$true] %s179
      %182 = dma.hbm_to_vmem [thread:$0]  %s18, 16, %s180, [#allocation23]
    $region69: #{model_forward.1} parent=1 // pred_fallthru
      _
    // Predicated region
    $region70: #{model_forward.1} parent=1 // pred_check
      _
    $region71: #{model_forward.1} parent=1 // pred_check_branch
      %184 = sbr.rel (0) target = $region73
    $region72: #{model_forward.1} parent=1 // pred_region
      _
    $region73: #{model_forward.1} parent=1 // pred_fallthru
      _
    // Predicated region
    $region74: #{model_forward.1} parent=1 // pred_check
      _
    $region75: #{model_forward.1} parent=1 // pred_check_branch
      %186 = sbr.rel (0) target = $region77
    $region76: #{model_forward.1} parent=1 // pred_region
      %s188 = ssub.s32 16, 16
      %189 = vsyncadd [#allocation26], %s188
      %s191 = sshll.u32 [#allocation25], 4
      %s192 = int_to_ptr.vmem [resolvable:$true] %s191
      %194 = dma.hbm_to_vmem [thread:$0]  %s20, 16, %s192, [#allocation26]
    $region77: #{model_forward.1} parent=1 // pred_fallthru
      _
    // Predicated region
    $region78: #{model_forward.1} parent=1 // pred_check
      _
    $region79: #{model_forward.1} parent=1 // pred_check_branch
      %196 = sbr.rel (0) target = $region81
    $region80: #{model_forward.1} parent=1 // pred_region
      %s198 = ssub.s32 512, 512
      %199 = vsyncadd [#allocation26], %s198
      %s200 = sshll.u32 [#allocation27], 4
      %s201 = int_to_ptr.vmem [resolvable:$true] %s200
      %206 = dma.hbm_to_vmem [thread:$0]  %s21, 512, %s201, [#allocation26], 64, 64, 4
    $region81: #{model_forward.1} parent=1 // pred_fallthru
      _
    // Predicated region
    $region82: #{model_forward.1} parent=1 // pred_check
      _
    $region83: #{model_forward.1} parent=1 // pred_check_branch
      %208 = sbr.rel (0) target = $region85
    $region84: #{model_forward.1} parent=1 // pred_region
      %s210 = ssub.s32 16, 16
      %211 = vsyncadd [#allocation29], %s210
      %s213 = sshll.u32 [#allocation28], 4
      %s214 = int_to_ptr.vmem [resolvable:$true] %s213
      %216 = dma.hbm_to_vmem [thread:$0]  %s22, 16, %s214, [#allocation29]
    $region85: #{model_forward.1} parent=1 // pred_fallthru
      _
    // Predicated region
    $region86: #{model_forward.1} parent=1 // pred_check
      _
    $region87: #{model_forward.1} parent=1 // pred_check_branch
      %218 = sbr.rel (0) target = $region89
    $region88: #{model_forward.1} parent=1 // pred_region
      %219 = dma.done [#allocation6], 16
    $region89: #{model_forward.1} parent=1 // pred_fallthru
      _
    // Predicated region
    $region90: #{model_forward.1} parent=1 // pred_check
      _
    $region91: #{model_forward.1} parent=1 // pred_check_branch
      %221 = sbr.rel (0) target = $region93
    $region92: #{model_forward.1} parent=1 // pred_region
      %222 = dma.done [#allocation8], 1024
    $region93: #{model_forward.1} parent=1 // pred_fallthru
      _
    // Predicated region
    $region94: #{model_forward.1} parent=1 // pred_check
      _
    $region95: #{model_forward.1} parent=1 // pred_check_branch
      %224 = sbr.rel (0) target = $region97
    $region96: #{model_forward.1} parent=1 // pred_region
      %225 = dma.done [#allocation8], 1024
    $region97: #{model_forward.1} parent=1 // pred_fallthru
      _
    // Predicated region
    $region98: #{model_forward.1} parent=1 // pred_check
      _
    $region99: #{model_forward.1} parent=1 // pred_check_branch
      %227 = sbr.rel (0) target = $region101
    $region100: #{model_forward.1} parent=1 // pred_region
      %228 = dma.done [#allocation11], 16
    $region101: #{model_forward.1} parent=1 // pred_fallthru
      _
    // Predicated region
    $region102: #{model_forward.1} parent=1 // pred_check
      _
    $region103: #{model_forward.1} parent=1 // pred_check_branch
      %230 = sbr.rel (0) target = $region105
    $region104: #{model_forward.1} parent=1 // pred_region
      %231 = dma.done [#allocation11], 3072
    $region105: #{model_forward.1} parent=1 // pred_fallthru
      _
    // Predicated region
    $region106: #{model_forward.1} parent=1 // pred_check
      _
    $region107: #{model_forward.1} parent=1 // pred_check_branch
      %233 = sbr.rel (0) target = $region109
    $region108: #{model_forward.1} parent=1 // pred_region
      %234 = dma.done [#allocation14], 48
    $region109: #{model_forward.1} parent=1 // pred_fallthru
      _
    // Predicated region
    $region110: #{model_forward.1} parent=1 // pred_check
      _
    $region111: #{model_forward.1} parent=1 // pred_check_branch
      %236 = sbr.rel (0) target = $region113
    $region112: #{model_forward.1} parent=1 // pred_region
      %237 = dma.done [#allocation14], 1024
    $region113: #{model_forward.1} parent=1 // pred_fallthru
      _
    // Predicated region
    $region114: #{model_forward.1} parent=1 // pred_check
      _
    $region115: #{model_forward.1} parent=1 // pred_check_branch
      %239 = sbr.rel (0) target = $region117
    $region116: #{model_forward.1} parent=1 // pred_region
      %240 = dma.done [#allocation17], 16
    $region117: #{model_forward.1} parent=1 // pred_fallthru
      _
    // Predicated region
    $region118: #{model_forward.1} parent=1 // pred_check
      _
    $region119: #{model_forward.1} parent=1 // pred_check_branch
      %242 = sbr.rel (0) target = $region121
    $region120: #{model_forward.1} parent=1 // pred_region
      %243 = dma.done [#allocation17], 16
    $region121: #{model_forward.1} parent=1 // pred_fallthru
      _
    // Predicated region
    $region122: #{model_forward.1} parent=1 // pred_check
      _
    $region123: #{model_forward.1} parent=1 // pred_check_branch
      %245 = sbr.rel (0) target = $region125
    $region124: #{model_forward.1} parent=1 // pred_region
      %246 = dma.done [#allocation20], 16
    $region125: #{model_forward.1} parent=1 // pred_fallthru
      _
    // Predicated region
    $region126: #{model_forward.1} parent=1 // pred_check
      _
    $region127: #{model_forward.1} parent=1 // pred_check_branch
      %248 = sbr.rel (0) target = $region129
    $region128: #{model_forward.1} parent=1 // pred_region
      %249 = dma.done [#allocation20], 16
    $region129: #{model_forward.1} parent=1 // pred_fallthru
      _
    // Predicated region
    $region130: #{model_forward.1} parent=1 // pred_check
      _
    $region131: #{model_forward.1} parent=1 // pred_check_branch
      %251 = sbr.rel (0) target = $region133
    $region132: #{model_forward.1} parent=1 // pred_region
      %252 = dma.done [#allocation23], 16
    $region133: #{model_forward.1} parent=1 // pred_fallthru
      _
    // Predicated region
    $region134: #{model_forward.1} parent=1 // pred_check
      _
    $region135: #{model_forward.1} parent=1 // pred_check_branch
      %254 = sbr.rel (0) target = $region137
    $region136: #{model_forward.1} parent=1 // pred_region
      %255 = dma.done [#allocation23], 16
    $region137: #{model_forward.1} parent=1 // pred_fallthru
      _
    // Predicated region
    $region138: #{model_forward.1} parent=1 // pred_check
      _
    $region139: #{model_forward.1} parent=1 // pred_check_branch
      %257 = sbr.rel (0) target = $region141
    $region140: #{model_forward.1} parent=1 // pred_region
      %258 = dma.done [#allocation26], 16
    $region141: #{model_forward.1} parent=1 // pred_fallthru
      _
    // Predicated region
    $region142: #{model_forward.1} parent=1 // pred_check
      _
    $region143: #{model_forward.1} parent=1 // pred_check_branch
      %260 = sbr.rel (0) target = $region145
    $region144: #{model_forward.1} parent=1 // pred_region
      %261 = dma.done [#allocation26], 512
    $region145: #{model_forward.1} parent=1 // pred_fallthru
      _
    // Predicated region
    $region146: #{model_forward.1} parent=1 // pred_check
      _
    $region147: #{model_forward.1} parent=1 // pred_check_branch
      %263 = sbr.rel (0) target = $region149
    $region148: #{model_forward.1} parent=1 // pred_region
      %264 = dma.done [#allocation29], 16
    $region149: #{model_forward.1} parent=1 // pred_fallthru
      _
    %p267 = scmp.lt.u32.totalorder 1024, 8
    %p268 = pneg %p267
    // Predicated region
    $region150: #{model_forward.1} parent=1 // pred_check
      _
    $region151: #{model_forward.1} parent=1 // pred_check_branch
      %270 = sbr.rel (%p267) target = $region153
    $region152: #{model_forward.1} parent=1 // pred_region
      %s286 = sand.u32 1024, 7
      %p287 = scmp.eq.s32.totalorder %s286, 0
      // Predicated region
      $region165: #{model_forward.1} parent=152 // pred_check
        %p288 = pneg %p287
      $region166: #{model_forward.1} parent=152 // pred_check_branch
        %290 = sbr.rel (%p288) target = $region168
      $region167: #{model_forward.1} parent=152 // pred_region
        loop: start=0, step=1, limit=1
        $region169: #{model_forward.1} parent=167 // loop_pre_header
          _
        $region170: #{model_forward.1} parent=167 // loop_header
          %s292 = sphi 0, %s296
          %p293 = scmp.ge.s32.totalorder %s292, 1
          %s297 = sphi %s13, %s13
          %s298 = sphi [#allocation2], [#allocation2]
        $region171: #{model_forward.1} parent=167 // loop_header_branch
          %295 = sbr.rel (%p293) target = $region175
        $region172: #{model_forward.1} parent=167 // loop_body
          %v299 = vld [vmem:[%s297] sm:$0xff]
          %300 = vst [vmem:[%s298] sm:$0xff] %v299
          %v301 = vld [vmem:[%s297 + $0x8] sm:$0xff]
          %302 = vst [vmem:[%s298 + $0x8] sm:$0xff] %v301
          %v303 = vld [vmem:[%s297 + $0x10] sm:$0xff]
          %304 = vst [vmem:[%s298 + $0x10] sm:$0xff] %v303
          %v305 = vld [vmem:[%s297 + $0x18] sm:$0xff]
          %306 = vst [vmem:[%s298 + $0x18] sm:$0xff] %v305
          %v307 = vld [vmem:[%s297 + $0x20] sm:$0xff]
          %308 = vst [vmem:[%s298 + $0x20] sm:$0xff] %v307
          %v309 = vld [vmem:[%s297 + $0x28] sm:$0xff]
          %310 = vst [vmem:[%s298 + $0x28] sm:$0xff] %v309
          %v311 = vld [vmem:[%s297 + $0x30] sm:$0xff]
          %312 = vst [vmem:[%s298 + $0x30] sm:$0xff] %v311
          %v313 = vld [vmem:[%s297 + $0x38] sm:$0xff]
          %314 = vst [vmem:[%s298 + $0x38] sm:$0xff] %v313
          %v315 = vld [vmem:[%s297 + $0x40] sm:$0xff]
          %316 = vst [vmem:[%s298 + $0x40] sm:$0xff] %v315
          %v317 = vld [vmem:[%s297 + $0x48] sm:$0xff]
          %318 = vst [vmem:[%s298 + $0x48] sm:$0xff] %v317
          %v319 = vld [vmem:[%s297 + $0x50] sm:$0xff]
          %320 = vst [vmem:[%s298 + $0x50] sm:$0xff] %v319
          %v321 = vld [vmem:[%s297 + $0x58] sm:$0xff]
          %322 = vst [vmem:[%s298 + $0x58] sm:$0xff] %v321
          %v323 = vld [vmem:[%s297 + $0x60] sm:$0xff]
          %324 = vst [vmem:[%s298 + $0x60] sm:$0xff] %v323
          %v325 = vld [vmem:[%s297 + $0x68] sm:$0xff]
          %326 = vst [vmem:[%s298 + $0x68] sm:$0xff] %v325
          %v327 = vld [vmem:[%s297 + $0x70] sm:$0xff]
          %328 = vst [vmem:[%s298 + $0x70] sm:$0xff] %v327
          %v329 = vld [vmem:[%s297 + $0x78] sm:$0xff]
          %330 = vst [vmem:[%s298 + $0x78] sm:$0xff] %v329
          %v331 = vld [vmem:[%s297 + $0x80] sm:$0xff]
          %332 = vst [vmem:[%s298 + $0x80] sm:$0xff] %v331
          %v333 = vld [vmem:[%s297 + $0x88] sm:$0xff]
          %334 = vst [vmem:[%s298 + $0x88] sm:$0xff] %v333
          %v335 = vld [vmem:[%s297 + $0x90] sm:$0xff]
          %336 = vst [vmem:[%s298 + $0x90] sm:$0xff] %v335
          %v337 = vld [vmem:[%s297 + $0x98] sm:$0xff]
          %338 = vst [vmem:[%s298 + $0x98] sm:$0xff] %v337
          %v339 = vld [vmem:[%s297 + $0xa0] sm:$0xff]
          %340 = vst [vmem:[%s298 + $0xa0] sm:$0xff] %v339
          %v341 = vld [vmem:[%s297 + $0xa8] sm:$0xff]
          %342 = vst [vmem:[%s298 + $0xa8] sm:$0xff] %v341
          %v343 = vld [vmem:[%s297 + $0xb0] sm:$0xff]
          %344 = vst [vmem:[%s298 + $0xb0] sm:$0xff] %v343
          %v345 = vld [vmem:[%s297 + $0xb8] sm:$0xff]
          %346 = vst [vmem:[%s298 + $0xb8] sm:$0xff] %v345
          %v347 = vld [vmem:[%s297 + $0xc0] sm:$0xff]
          %348 = vst [vmem:[%s298 + $0xc0] sm:$0xff] %v347
          %v349 = vld [vmem:[%s297 + $0xc8] sm:$0xff]
          %350 = vst [vmem:[%s298 + $0xc8] sm:$0xff] %v349
          %v351 = vld [vmem:[%s297 + $0xd0] sm:$0xff]
          %352 = vst [vmem:[%s298 + $0xd0] sm:$0xff] %v351
          %v353 = vld [vmem:[%s297 + $0xd8] sm:$0xff]
          %354 = vst [vmem:[%s298 + $0xd8] sm:$0xff] %v353
          %v355 = vld [vmem:[%s297 + $0xe0] sm:$0xff]
          %356 = vst [vmem:[%s298 + $0xe0] sm:$0xff] %v355
          %v357 = vld [vmem:[%s297 + $0xe8] sm:$0xff]
          %358 = vst [vmem:[%s298 + $0xe8] sm:$0xff] %v357
          %v359 = vld [vmem:[%s297 + $0xf0] sm:$0xff]
          %360 = vst [vmem:[%s298 + $0xf0] sm:$0xff] %v359
          %v361 = vld [vmem:[%s297 + $0xf8] sm:$0xff]
          %362 = vst [vmem:[%s298 + $0xf8] sm:$0xff] %v361
          %v363 = vld [vmem:[%s297 + $0x100] sm:$0xff]
          %364 = vst [vmem:[%s298 + $0x100] sm:$0xff] %v363
          %v365 = vld [vmem:[%s297 + $0x108] sm:$0xff]
          %366 = vst [vmem:[%s298 + $0x108] sm:$0xff] %v365
          %v367 = vld [vmem:[%s297 + $0x110] sm:$0xff]
          %368 = vst [vmem:[%s298 + $0x110] sm:$0xff] %v367
          %v369 = vld [vmem:[%s297 + $0x118] sm:$0xff]
          %370 = vst [vmem:[%s298 + $0x118] sm:$0xff] %v369
          %v371 = vld [vmem:[%s297 + $0x120] sm:$0xff]
          %372 = vst [vmem:[%s298 + $0x120] sm:$0xff] %v371
          %v373 = vld [vmem:[%s297 + $0x128] sm:$0xff]
          %374 = vst [vmem:[%s298 + $0x128] sm:$0xff] %v373
          %v375 = vld [vmem:[%s297 + $0x130] sm:$0xff]
          %376 = vst [vmem:[%s298 + $0x130] sm:$0xff] %v375
          %v377 = vld [vmem:[%s297 + $0x138] sm:$0xff]
          %378 = vst [vmem:[%s298 + $0x138] sm:$0xff] %v377
          %v379 = vld [vmem:[%s297 + $0x140] sm:$0xff]
          %380 = vst [vmem:[%s298 + $0x140] sm:$0xff] %v379
          %v381 = vld [vmem:[%s297 + $0x148] sm:$0xff]
          %382 = vst [vmem:[%s298 + $0x148] sm:$0xff] %v381
          %v383 = vld [vmem:[%s297 + $0x150] sm:$0xff]
          %384 = vst [vmem:[%s298 + $0x150] sm:$0xff] %v383
          %v385 = vld [vmem:[%s297 + $0x158] sm:$0xff]
          %386 = vst [vmem:[%s298 + $0x158] sm:$0xff] %v385
          %v387 = vld [vmem:[%s297 + $0x160] sm:$0xff]
          %388 = vst [vmem:[%s298 + $0x160] sm:$0xff] %v387
          %v389 = vld [vmem:[%s297 + $0x168] sm:$0xff]
          %390 = vst [vmem:[%s298 + $0x168] sm:$0xff] %v389
          %v391 = vld [vmem:[%s297 + $0x170] sm:$0xff]
          %392 = vst [vmem:[%s298 + $0x170] sm:$0xff] %v391
          %v393 = vld [vmem:[%s297 + $0x178] sm:$0xff]
          %394 = vst [vmem:[%s298 + $0x178] sm:$0xff] %v393
          %v395 = vld [vmem:[%s297 + $0x180] sm:$0xff]
          %396 = vst [vmem:[%s298 + $0x180] sm:$0xff] %v395
          %v397 = vld [vmem:[%s297 + $0x188] sm:$0xff]
          %398 = vst [vmem:[%s298 + $0x188] sm:$0xff] %v397
          %v399 = vld [vmem:[%s297 + $0x190] sm:$0xff]
          %400 = vst [vmem:[%s298 + $0x190] sm:$0xff] %v399
          %v401 = vld [vmem:[%s297 + $0x198] sm:$0xff]
          %402 = vst [vmem:[%s298 + $0x198] sm:$0xff] %v401
          %v403 = vld [vmem:[%s297 + $0x1a0] sm:$0xff]
          %404 = vst [vmem:[%s298 + $0x1a0] sm:$0xff] %v403
          %v405 = vld [vmem:[%s297 + $0x1a8] sm:$0xff]
          %406 = vst [vmem:[%s298 + $0x1a8] sm:$0xff] %v405
          %v407 = vld [vmem:[%s297 + $0x1b0] sm:$0xff]
          %408 = vst [vmem:[%s298 + $0x1b0] sm:$0xff] %v407
          %v409 = vld [vmem:[%s297 + $0x1b8] sm:$0xff]
          %410 = vst [vmem:[%s298 + $0x1b8] sm:$0xff] %v409
          %v411 = vld [vmem:[%s297 + $0x1c0] sm:$0xff]
          %412 = vst [vmem:[%s298 + $0x1c0] sm:$0xff] %v411
          %v413 = vld [vmem:[%s297 + $0x1c8] sm:$0xff]
          %414 = vst [vmem:[%s298 + $0x1c8] sm:$0xff] %v413
          %v415 = vld [vmem:[%s297 + $0x1d0] sm:$0xff]
          %416 = vst [vmem:[%s298 + $0x1d0] sm:$0xff] %v415
          %v417 = vld [vmem:[%s297 + $0x1d8] sm:$0xff]
          %418 = vst [vmem:[%s298 + $0x1d8] sm:$0xff] %v417
          %v419 = vld [vmem:[%s297 + $0x1e0] sm:$0xff]
          %420 = vst [vmem:[%s298 + $0x1e0] sm:$0xff] %v419
          %v421 = vld [vmem:[%s297 + $0x1e8] sm:$0xff]
          %422 = vst [vmem:[%s298 + $0x1e8] sm:$0xff] %v421
          %v423 = vld [vmem:[%s297 + $0x1f0] sm:$0xff]
          %424 = vst [vmem:[%s298 + $0x1f0] sm:$0xff] %v423
          %v425 = vld [vmem:[%s297 + $0x1f8] sm:$0xff]
          %426 = vst [vmem:[%s298 + $0x1f8] sm:$0xff] %v425
          %v427 = vld [vmem:[%s297 + $0x200] sm:$0xff]
          %428 = vst [vmem:[%s298 + $0x200] sm:$0xff] %v427
          %v429 = vld [vmem:[%s297 + $0x208] sm:$0xff]
          %430 = vst [vmem:[%s298 + $0x208] sm:$0xff] %v429
          %v431 = vld [vmem:[%s297 + $0x210] sm:$0xff]
          %432 = vst [vmem:[%s298 + $0x210] sm:$0xff] %v431
          %v433 = vld [vmem:[%s297 + $0x218] sm:$0xff]
          %434 = vst [vmem:[%s298 + $0x218] sm:$0xff] %v433
          %v435 = vld [vmem:[%s297 + $0x220] sm:$0xff]
          %436 = vst [vmem:[%s298 + $0x220] sm:$0xff] %v435
          %v437 = vld [vmem:[%s297 + $0x228] sm:$0xff]
          %438 = vst [vmem:[%s298 + $0x228] sm:$0xff] %v437
          %v439 = vld [vmem:[%s297 + $0x230] sm:$0xff]
          %440 = vst [vmem:[%s298 + $0x230] sm:$0xff] %v439
          %v441 = vld [vmem:[%s297 + $0x238] sm:$0xff]
          %442 = vst [vmem:[%s298 + $0x238] sm:$0xff] %v441
          %v443 = vld [vmem:[%s297 + $0x240] sm:$0xff]
          %444 = vst [vmem:[%s298 + $0x240] sm:$0xff] %v443
          %v445 = vld [vmem:[%s297 + $0x248] sm:$0xff]
          %446 = vst [vmem:[%s298 + $0x248] sm:$0xff] %v445
          %v447 = vld [vmem:[%s297 + $0x250] sm:$0xff]
          %448 = vst [vmem:[%s298 + $0x250] sm:$0xff] %v447
          %v449 = vld [vmem:[%s297 + $0x258] sm:$0xff]
          %450 = vst [vmem:[%s298 + $0x258] sm:$0xff] %v449
          %v451 = vld [vmem:[%s297 + $0x260] sm:$0xff]
          %452 = vst [vmem:[%s298 + $0x260] sm:$0xff] %v451
          %v453 = vld [vmem:[%s297 + $0x268] sm:$0xff]
          %454 = vst [vmem:[%s298 + $0x268] sm:$0xff] %v453
          %v455 = vld [vmem:[%s297 + $0x270] sm:$0xff]
          %456 = vst [vmem:[%s298 + $0x270] sm:$0xff] %v455
          %v457 = vld [vmem:[%s297 + $0x278] sm:$0xff]
          %458 = vst [vmem:[%s298 + $0x278] sm:$0xff] %v457
          %v459 = vld [vmem:[%s297 + $0x280] sm:$0xff]
          %460 = vst [vmem:[%s298 + $0x280] sm:$0xff] %v459
          %v461 = vld [vmem:[%s297 + $0x288] sm:$0xff]
          %462 = vst [vmem:[%s298 + $0x288] sm:$0xff] %v461
          %v463 = vld [vmem:[%s297 + $0x290] sm:$0xff]
          %464 = vst [vmem:[%s298 + $0x290] sm:$0xff] %v463
          %v465 = vld [vmem:[%s297 + $0x298] sm:$0xff]
          %466 = vst [vmem:[%s298 + $0x298] sm:$0xff] %v465
          %v467 = vld [vmem:[%s297 + $0x2a0] sm:$0xff]
          %468 = vst [vmem:[%s298 + $0x2a0] sm:$0xff] %v467
          %v469 = vld [vmem:[%s297 + $0x2a8] sm:$0xff]
          %470 = vst [vmem:[%s298 + $0x2a8] sm:$0xff] %v469
          %v471 = vld [vmem:[%s297 + $0x2b0] sm:$0xff]
          %472 = vst [vmem:[%s298 + $0x2b0] sm:$0xff] %v471
          %v473 = vld [vmem:[%s297 + $0x2b8] sm:$0xff]
          %474 = vst [vmem:[%s298 + $0x2b8] sm:$0xff] %v473
          %v475 = vld [vmem:[%s297 + $0x2c0] sm:$0xff]
          %476 = vst [vmem:[%s298 + $0x2c0] sm:$0xff] %v475
          %v477 = vld [vmem:[%s297 + $0x2c8] sm:$0xff]
          %478 = vst [vmem:[%s298 + $0x2c8] sm:$0xff] %v477
          %v479 = vld [vmem:[%s297 + $0x2d0] sm:$0xff]
          %480 = vst [vmem:[%s298 + $0x2d0] sm:$0xff] %v479
          %v481 = vld [vmem:[%s297 + $0x2d8] sm:$0xff]
          %482 = vst [vmem:[%s298 + $0x2d8] sm:$0xff] %v481
          %v483 = vld [vmem:[%s297 + $0x2e0] sm:$0xff]
          %484 = vst [vmem:[%s298 + $0x2e0] sm:$0xff] %v483
          %v485 = vld [vmem:[%s297 + $0x2e8] sm:$0xff]
          %486 = vst [vmem:[%s298 + $0x2e8] sm:$0xff] %v485
          %v487 = vld [vmem:[%s297 + $0x2f0] sm:$0xff]
          %488 = vst [vmem:[%s298 + $0x2f0] sm:$0xff] %v487
          %v489 = vld [vmem:[%s297 + $0x2f8] sm:$0xff]
          %490 = vst [vmem:[%s298 + $0x2f8] sm:$0xff] %v489
          %v491 = vld [vmem:[%s297 + $0x300] sm:$0xff]
          %492 = vst [vmem:[%s298 + $0x300] sm:$0xff] %v491
          %v493 = vld [vmem:[%s297 + $0x308] sm:$0xff]
          %494 = vst [vmem:[%s298 + $0x308] sm:$0xff] %v493
          %v495 = vld [vmem:[%s297 + $0x310] sm:$0xff]
          %496 = vst [vmem:[%s298 + $0x310] sm:$0xff] %v495
          %v497 = vld [vmem:[%s297 + $0x318] sm:$0xff]
          %498 = vst [vmem:[%s298 + $0x318] sm:$0xff] %v497
          %v499 = vld [vmem:[%s297 + $0x320] sm:$0xff]
          %500 = vst [vmem:[%s298 + $0x320] sm:$0xff] %v499
          %v501 = vld [vmem:[%s297 + $0x328] sm:$0xff]
          %502 = vst [vmem:[%s298 + $0x328] sm:$0xff] %v501
          %v503 = vld [vmem:[%s297 + $0x330] sm:$0xff]
          %504 = vst [vmem:[%s298 + $0x330] sm:$0xff] %v503
          %v505 = vld [vmem:[%s297 + $0x338] sm:$0xff]
          %506 = vst [vmem:[%s298 + $0x338] sm:$0xff] %v505
          %v507 = vld [vmem:[%s297 + $0x340] sm:$0xff]
          %508 = vst [vmem:[%s298 + $0x340] sm:$0xff] %v507
          %v509 = vld [vmem:[%s297 + $0x348] sm:$0xff]
          %510 = vst [vmem:[%s298 + $0x348] sm:$0xff] %v509
          %v511 = vld [vmem:[%s297 + $0x350] sm:$0xff]
          %512 = vst [vmem:[%s298 + $0x350] sm:$0xff] %v511
          %v513 = vld [vmem:[%s297 + $0x358] sm:$0xff]
          %514 = vst [vmem:[%s298 + $0x358] sm:$0xff] %v513
          %v515 = vld [vmem:[%s297 + $0x360] sm:$0xff]
          %516 = vst [vmem:[%s298 + $0x360] sm:$0xff] %v515
          %v517 = vld [vmem:[%s297 + $0x368] sm:$0xff]
          %518 = vst [vmem:[%s298 + $0x368] sm:$0xff] %v517
          %v519 = vld [vmem:[%s297 + $0x370] sm:$0xff]
          %520 = vst [vmem:[%s298 + $0x370] sm:$0xff] %v519
          %v521 = vld [vmem:[%s297 + $0x378] sm:$0xff]
          %522 = vst [vmem:[%s298 + $0x378] sm:$0xff] %v521
          %v523 = vld [vmem:[%s297 + $0x380] sm:$0xff]
          %524 = vst [vmem:[%s298 + $0x380] sm:$0xff] %v523
          %v525 = vld [vmem:[%s297 + $0x388] sm:$0xff]
          %526 = vst [vmem:[%s298 + $0x388] sm:$0xff] %v525
          %v527 = vld [vmem:[%s297 + $0x390] sm:$0xff]
          %528 = vst [vmem:[%s298 + $0x390] sm:$0xff] %v527
          %v529 = vld [vmem:[%s297 + $0x398] sm:$0xff]
          %530 = vst [vmem:[%s298 + $0x398] sm:$0xff] %v529
          %v531 = vld [vmem:[%s297 + $0x3a0] sm:$0xff]
          %532 = vst [vmem:[%s298 + $0x3a0] sm:$0xff] %v531
          %v533 = vld [vmem:[%s297 + $0x3a8] sm:$0xff]
          %534 = vst [vmem:[%s298 + $0x3a8] sm:$0xff] %v533
          %v535 = vld [vmem:[%s297 + $0x3b0] sm:$0xff]
          %536 = vst [vmem:[%s298 + $0x3b0] sm:$0xff] %v535
          %v537 = vld [vmem:[%s297 + $0x3b8] sm:$0xff]
          %538 = vst [vmem:[%s298 + $0x3b8] sm:$0xff] %v537
          %v539 = vld [vmem:[%s297 + $0x3c0] sm:$0xff]
          %540 = vst [vmem:[%s298 + $0x3c0] sm:$0xff] %v539
          %v541 = vld [vmem:[%s297 + $0x3c8] sm:$0xff]
          %542 = vst [vmem:[%s298 + $0x3c8] sm:$0xff] %v541
          %v543 = vld [vmem:[%s297 + $0x3d0] sm:$0xff]
          %544 = vst [vmem:[%s298 + $0x3d0] sm:$0xff] %v543
          %v545 = vld [vmem:[%s297 + $0x3d8] sm:$0xff]
          %546 = vst [vmem:[%s298 + $0x3d8] sm:$0xff] %v545
          %v547 = vld [vmem:[%s297 + $0x3e0] sm:$0xff]
          %548 = vst [vmem:[%s298 + $0x3e0] sm:$0xff] %v547
          %v549 = vld [vmem:[%s297 + $0x3e8] sm:$0xff]
          %550 = vst [vmem:[%s298 + $0x3e8] sm:$0xff] %v549
          %v551 = vld [vmem:[%s297 + $0x3f0] sm:$0xff]
          %552 = vst [vmem:[%s298 + $0x3f0] sm:$0xff] %v551
          %v553 = vld [vmem:[%s297 + $0x3f8] sm:$0xff]
          %554 = vst [vmem:[%s298 + $0x3f8] sm:$0xff] %v553
        $region173: #{model_forward.1} parent=167 // loop_footer
          %s296 = sadd.s32 1, %s292
        $region174: #{model_forward.1} parent=167 // loop_footer_branch
          %291 = sbr.rel target = $region170
        $region175: #{model_forward.1} parent=167 // loop_exit
          _
      $region168: #{model_forward.1} parent=152 // pred_fallthru
        _
      %p555 = pneg %p287
      // Predicated region
      $region176: #{model_forward.1} parent=152 // pred_check
        _
      $region177: #{model_forward.1} parent=152 // pred_check_branch
        %557 = sbr.rel (%p287) target = $region179
      $region178: #{model_forward.1} parent=152 // pred_region
        %s558 = sand.u32 1024, 7
      $region179: #{model_forward.1} parent=152 // pred_fallthru
        _
    $region153: #{model_forward.1} parent=1 // pred_fallthru
      _
    // Predicated region
    $region154: #{model_forward.1} parent=1 // pred_check
      %p271 = pneg %p267
    $region155: #{model_forward.1} parent=1 // pred_check_branch
      %273 = sbr.rel (%p271) target = $region157
    $region156: #{model_forward.1} parent=1 // pred_region
      %s274 = sshll.u32 1, 1024
      %s275 = ssub.s32 %s274, 1
      loop: start=0, step=1, limit=1
      $region158: #{model_forward.1} parent=156 // loop_pre_header
        _
      $region159: #{model_forward.1} parent=156 // loop_header
        %s277 = sphi 0, %s281
        %p278 = scmp.ge.s32.totalorder %s277, 1
        %s282 = sphi %s13, %s13
        %s283 = sphi [#allocation2], [#allocation2]
      $region160: #{model_forward.1} parent=156 // loop_header_branch
        %280 = sbr.rel (%p278) target = $region164
      $region161: #{model_forward.1} parent=156 // loop_body
        %v284 = vld [vmem:[%s282] sm:%s275]
        %285 = vst [vmem:[%s283] sm:%s275] %v284
      $region162: #{model_forward.1} parent=156 // loop_footer
        %s281 = sadd.s32 1, %s277
      $region163: #{model_forward.1} parent=156 // loop_footer_branch
        %276 = sbr.rel target = $region159
      $region164: #{model_forward.1} parent=156 // loop_exit
        _
    $region157: #{model_forward.1} parent=1 // pred_fallthru
      _
    // Predicated region
    $region180: #{model_forward.1} parent=1 // pred_check
      _
    $region181: #{model_forward.1} parent=1 // pred_check_branch
      %561 = sbr.rel (0) target = $region183
    $region182: #{model_forward.1} parent=1 // pred_region
      %562 = vsyncadd [#allocation4], 16384
    $region183: #{model_forward.1} parent=1 // pred_fallthru
      _
    %s563 = scalar_lea.sflag [#allocation4], 1
    // Predicated region
    $region184: #{model_forward.1} parent=1 // pred_check
      _
    $region185: #{model_forward.1} parent=1 // pred_check_branch
      %565 = sbr.rel target = $region187
    $region186: #{model_forward.1} parent=1 // pred_region
      %566 = sst [smem:[#allocation33]] [#allocation32]
      %567 = sst [smem:[#allocation34]] [#allocation31]
    $region187: #{model_forward.1} parent=1 // pred_fallthru
      _
    %569 = shalt.err (0)
    %s571 = sshll.u32 [#allocation3], 4
    %s572 = int_to_ptr.vmem [resolvable:$true] %s571
    %574 = dma.hbm_to_vmem [thread:$0]  %s15, 16384, %s572, %s563
    %v575 = vld [vmem:[%s1] sm:$0xff]
    %v576 = vld [vmem:[%s1 + $0x8] sm:$0xff]
    %v577 = vld [vmem:[%s1 + $0x10] sm:$0xff]
    %v578 = vld [vmem:[%s1 + $0x18] sm:$0xff]
    %v579 = vld [vmem:[%s1 + $0x20] sm:$0xff]
    %v580 = vld [vmem:[%s1 + $0x28] sm:$0xff]
    %v581 = vld [vmem:[%s1 + $0x30] sm:$0xff]
    %v582 = vld [vmem:[%s1 + $0x38] sm:$0xff]
    %v583 = vld [vmem:[%s2] sm:$0xf]
    %v584 = vld [vmem:[%s2 + $0x4] sm:$0xf]
    %v585 = vld [vmem:[%s2 + $0x8] sm:$0xf]
    %v586 = vld [vmem:[%s2 + $0xc] sm:$0xf]
    %v587 = vld [vmem:[%s2 + $0x10] sm:$0xf]
    %v588 = vld [vmem:[%s2 + $0x14] sm:$0xf]
    %v589 = vld [vmem:[%s2 + $0x18] sm:$0xf]
    %v590 = vld [vmem:[%s2 + $0x1c] sm:$0xf]
    %v591 = vld [vmem:[%s2 + $0x20] sm:$0xf]
    %v592 = vld [vmem:[%s2 + $0x24] sm:$0xf]
    %v593 = vld [vmem:[%s2 + $0x28] sm:$0xf]
    %v594 = vld [vmem:[%s2 + $0x2c] sm:$0xf]
    %v595 = vld [vmem:[%s2 + $0x30] sm:$0xf]
    %v596 = vld [vmem:[%s2 + $0x34] sm:$0xf]
    %v597 = vld [vmem:[%s2 + $0x38] sm:$0xf]
    %v598 = vld [vmem:[%s2 + $0x3c] sm:$0xf]
    %v599 = vld [vmem:[%s2 + $0x40] sm:$0xf]
    %v600 = vld [vmem:[%s2 + $0x44] sm:$0xf]
    %v601 = vld [vmem:[%s2 + $0x48] sm:$0xf]
    %v602 = vld [vmem:[%s2 + $0x4c] sm:$0xf]
    %v603 = vld [vmem:[%s2 + $0x50] sm:$0xf]
    %v604 = vld [vmem:[%s2 + $0x54] sm:$0xf]
    %v605 = vld [vmem:[%s2 + $0x58] sm:$0xf]
    %v606 = vld [vmem:[%s2 + $0x5c] sm:$0xf]
    %v607 = vld [vmem:[%s2 + $0x60] sm:$0xf]
    %v608 = vld [vmem:[%s2 + $0x64] sm:$0xf]
    %v609 = vld [vmem:[%s2 + $0x68] sm:$0xf]
    %v610 = vld [vmem:[%s2 + $0x6c] sm:$0xf]
    %v611 = vld [vmem:[%s2 + $0x70] sm:$0xf]
    %v612 = vld [vmem:[%s2 + $0x74] sm:$0xf]
    %v613 = vld [vmem:[%s2 + $0x78] sm:$0xf]
    %v614 = vld [vmem:[%s2 + $0x7c] sm:$0xf]
    %v615 = vld [vmem:[%s2 + $0x80] sm:$0xf]
    %v616 = vld [vmem:[%s2 + $0x84] sm:$0xf]
    %v617 = vld [vmem:[%s2 + $0x88] sm:$0xf]
    %v618 = vld [vmem:[%s2 + $0x8c] sm:$0xf]
    %v619 = vld [vmem:[%s2 + $0x90] sm:$0xf]
    %v620 = vld [vmem:[%s2 + $0x94] sm:$0xf]
    %v621 = vld [vmem:[%s2 + $0x98] sm:$0xf]
    %v622 = vld [vmem:[%s2 + $0x9c] sm:$0xf]
    %v623 = vld [vmem:[%s2 + $0xa0] sm:$0xf]
    %v624 = vld [vmem:[%s2 + $0xa4] sm:$0xf]
    %v625 = vld [vmem:[%s2 + $0xa8] sm:$0xf]
    %v626 = vld [vmem:[%s2 + $0xac] sm:$0xf]
    %v627 = vld [vmem:[%s2 + $0xb0] sm:$0xf]
    %v628 = vld [vmem:[%s2 + $0xb4] sm:$0xf]
    %v629 = vld [vmem:[%s2 + $0xb8] sm:$0xf]
    %v630 = vld [vmem:[%s2 + $0xbc] sm:$0xf]
    %v631 = vld [vmem:[%s2 + $0xc0] sm:$0xf]
    %v632 = vld [vmem:[%s2 + $0xc4] sm:$0xf]
    %v633 = vld [vmem:[%s2 + $0xc8] sm:$0xf]
    %v634 = vld [vmem:[%s2 + $0xcc] sm:$0xf]
    %v635 = vld [vmem:[%s2 + $0xd0] sm:$0xf]
    %v636 = vld [vmem:[%s2 + $0xd4] sm:$0xf]
    %v637 = vld [vmem:[%s2 + $0xd8] sm:$0xf]
    %v638 = vld [vmem:[%s2 + $0xdc] sm:$0xf]
    %v639 = vld [vmem:[%s2 + $0xe0] sm:$0xf]
    %v640 = vld [vmem:[%s2 + $0xe4] sm:$0xf]
    %v641 = vld [vmem:[%s2 + $0xe8] sm:$0xf]
    %v642 = vld [vmem:[%s2 + $0xec] sm:$0xf]
    %v643 = vld [vmem:[%s2 + $0xf0] sm:$0xf]
    %v644 = vld [vmem:[%s2 + $0xf4] sm:$0xf]
    %v645 = vld [vmem:[%s2 + $0xf8] sm:$0xf]
    %v646 = vld [vmem:[%s2 + $0xfc] sm:$0xf]
    %v647 = vld [vmem:[%s2 + $0x100] sm:$0xf]
    %v648 = vld [vmem:[%s2 + $0x104] sm:$0xf]
    %v649 = vld [vmem:[%s2 + $0x108] sm:$0xf]
    %v650 = vld [vmem:[%s2 + $0x10c] sm:$0xf]
    %v651 = vld [vmem:[%s2 + $0x110] sm:$0xf]
    %v652 = vld [vmem:[%s2 + $0x114] sm:$0xf]
    %v653 = vld [vmem:[%s2 + $0x118] sm:$0xf]
    %v654 = vld [vmem:[%s2 + $0x11c] sm:$0xf]
    %v655 = vld [vmem:[%s2 + $0x120] sm:$0xf]
    %v656 = vld [vmem:[%s2 + $0x124] sm:$0xf]
    %v657 = vld [vmem:[%s2 + $0x128] sm:$0xf]
    %v658 = vld [vmem:[%s2 + $0x12c] sm:$0xf]
    %v659 = vld [vmem:[%s2 + $0x130] sm:$0xf]
    %v660 = vld [vmem:[%s2 + $0x134] sm:$0xf]
    %v661 = vld [vmem:[%s2 + $0x138] sm:$0xf]
    %v662 = vld [vmem:[%s2 + $0x13c] sm:$0xf]
    %v663 = vld [vmem:[%s2 + $0x140] sm:$0xf]
    %v664 = vld [vmem:[%s2 + $0x144] sm:$0xf]
    %v665 = vld [vmem:[%s2 + $0x148] sm:$0xf]
    %v666 = vld [vmem:[%s2 + $0x14c] sm:$0xf]
    %v667 = vld [vmem:[%s2 + $0x150] sm:$0xf]
    %v668 = vld [vmem:[%s2 + $0x154] sm:$0xf]
    %v669 = vld [vmem:[%s2 + $0x158] sm:$0xf]
    %v670 = vld [vmem:[%s2 + $0x15c] sm:$0xf]
    %v671 = vld [vmem:[%s2 + $0x160] sm:$0xf]
    %v672 = vld [vmem:[%s2 + $0x164] sm:$0xf]
    %v673 = vld [vmem:[%s2 + $0x168] sm:$0xf]
    %v674 = vld [vmem:[%s2 + $0x16c] sm:$0xf]
    %v675 = vld [vmem:[%s2 + $0x170] sm:$0xf]
    %v676 = vld [vmem:[%s2 + $0x174] sm:$0xf]
    %v677 = vld [vmem:[%s2 + $0x178] sm:$0xf]
    %v678 = vld [vmem:[%s2 + $0x17c] sm:$0xf]
    %v679 = vld [vmem:[%s2 + $0x180] sm:$0xf]
    %v680 = vld [vmem:[%s2 + $0x184] sm:$0xf]
    %v681 = vld [vmem:[%s2 + $0x188] sm:$0xf]
    %v682 = vld [vmem:[%s2 + $0x18c] sm:$0xf]
    %v683 = vld [vmem:[%s2 + $0x190] sm:$0xf]
    %v684 = vld [vmem:[%s2 + $0x194] sm:$0xf]
    %v685 = vld [vmem:[%s2 + $0x198] sm:$0xf]
    %v686 = vld [vmem:[%s2 + $0x19c] sm:$0xf]
    %v687 = vld [vmem:[%s2 + $0x1a0] sm:$0xf]
    %v688 = vld [vmem:[%s2 + $0x1a4] sm:$0xf]
    %v689 = vld [vmem:[%s2 + $0x1a8] sm:$0xf]
    %v690 = vld [vmem:[%s2 + $0x1ac] sm:$0xf]
    %v691 = vld [vmem:[%s2 + $0x1b0] sm:$0xf]
    %v692 = vld [vmem:[%s2 + $0x1b4] sm:$0xf]
    %v693 = vld [vmem:[%s2 + $0x1b8] sm:$0xf]
    %v694 = vld [vmem:[%s2 + $0x1bc] sm:$0xf]
    %v695 = vld [vmem:[%s2 + $0x1c0] sm:$0xf]
    %v696 = vld [vmem:[%s2 + $0x1c4] sm:$0xf]
    %v697 = vld [vmem:[%s2 + $0x1c8] sm:$0xf]
    %v698 = vld [vmem:[%s2 + $0x1cc] sm:$0xf]
    %v699 = vld [vmem:[%s2 + $0x1d0] sm:$0xf]
    %v700 = vld [vmem:[%s2 + $0x1d4] sm:$0xf]
    %v701 = vld [vmem:[%s2 + $0x1d8] sm:$0xf]
    %v702 = vld [vmem:[%s2 + $0x1dc] sm:$0xf]
    %v703 = vld [vmem:[%s2 + $0x1e0] sm:$0xf]
    %v704 = vld [vmem:[%s2 + $0x1e4] sm:$0xf]
    %v705 = vld [vmem:[%s2 + $0x1e8] sm:$0xf]
    %v706 = vld [vmem:[%s2 + $0x1ec] sm:$0xf]
    %v707 = vld [vmem:[%s2 + $0x1f0] sm:$0xf]
    %v708 = vld [vmem:[%s2 + $0x1f4] sm:$0xf]
    %v709 = vld [vmem:[%s2 + $0x1f8] sm:$0xf]
    %v710 = vld [vmem:[%s2 + $0x1fc] sm:$0xf]
    %v711 = vld [vmem:[%s2 + $0x200] sm:$0xf]
    %v712 = vld [vmem:[%s2 + $0x204] sm:$0xf]
    %v713 = vld [vmem:[%s2 + $0x208] sm:$0xf]
    %v714 = vld [vmem:[%s2 + $0x20c] sm:$0xf]
    %v715 = vld [vmem:[%s2 + $0x210] sm:$0xf]
    %v716 = vld [vmem:[%s2 + $0x214] sm:$0xf]
    %v717 = vld [vmem:[%s2 + $0x218] sm:$0xf]
    %v718 = vld [vmem:[%s2 + $0x21c] sm:$0xf]
    %v719 = vld [vmem:[%s2 + $0x220] sm:$0xf]
    %v720 = vld [vmem:[%s2 + $0x224] sm:$0xf]
    %v721 = vld [vmem:[%s2 + $0x228] sm:$0xf]
    %v722 = vld [vmem:[%s2 + $0x22c] sm:$0xf]
    %v723 = vld [vmem:[%s2 + $0x230] sm:$0xf]
    %v724 = vld [vmem:[%s2 + $0x234] sm:$0xf]
    %v725 = vld [vmem:[%s2 + $0x238] sm:$0xf]
    %v726 = vld [vmem:[%s2 + $0x23c] sm:$0xf]
    %v727 = vld [vmem:[%s2 + $0x240] sm:$0xf]
    %v728 = vld [vmem:[%s2 + $0x244] sm:$0xf]
    %v729 = vld [vmem:[%s2 + $0x248] sm:$0xf]
    %v730 = vld [vmem:[%s2 + $0x24c] sm:$0xf]
    %v731 = vld [vmem:[%s2 + $0x250] sm:$0xf]
    %v732 = vld [vmem:[%s2 + $0x254] sm:$0xf]
    %v733 = vld [vmem:[%s2 + $0x258] sm:$0xf]
    %v734 = vld [vmem:[%s2 + $0x25c] sm:$0xf]
    %v735 = vld [vmem:[%s2 + $0x260] sm:$0xf]
    %v736 = vld [vmem:[%s2 + $0x264] sm:$0xf]
    %v737 = vld [vmem:[%s2 + $0x268] sm:$0xf]
    %v738 = vld [vmem:[%s2 + $0x26c] sm:$0xf]
    %v739 = vld [vmem:[%s2 + $0x270] sm:$0xf]
    %v740 = vld [vmem:[%s2 + $0x274] sm:$0xf]
    %v741 = vld [vmem:[%s2 + $0x278] sm:$0xf]
    %v742 = vld [vmem:[%s2 + $0x27c] sm:$0xf]
    %v743 = vld [vmem:[%s2 + $0x280] sm:$0xf]
    %v744 = vld [vmem:[%s2 + $0x284] sm:$0xf]
    %v745 = vld [vmem:[%s2 + $0x288] sm:$0xf]
    %v746 = vld [vmem:[%s2 + $0x28c] sm:$0xf]
    %v747 = vld [vmem:[%s2 + $0x290] sm:$0xf]
    %v748 = vld [vmem:[%s2 + $0x294] sm:$0xf]
    %v749 = vld [vmem:[%s2 + $0x298] sm:$0xf]
    %v750 = vld [vmem:[%s2 + $0x29c] sm:$0xf]
    %v751 = vld [vmem:[%s2 + $0x2a0] sm:$0xf]
    %v752 = vld [vmem:[%s2 + $0x2a4] sm:$0xf]
    %v753 = vld [vmem:[%s2 + $0x2a8] sm:$0xf]
    %v754 = vld [vmem:[%s2 + $0x2ac] sm:$0xf]
    %v755 = vld [vmem:[%s2 + $0x2b0] sm:$0xf]
    %v756 = vld [vmem:[%s2 + $0x2b4] sm:$0xf]
    %v757 = vld [vmem:[%s2 + $0x2b8] sm:$0xf]
    %v758 = vld [vmem:[%s2 + $0x2bc] sm:$0xf]
    %v759 = vld [vmem:[%s2 + $0x2c0] sm:$0xf]
    %v760 = vld [vmem:[%s2 + $0x2c4] sm:$0xf]
    %v761 = vld [vmem:[%s2 + $0x2c8] sm:$0xf]
    %v762 = vld [vmem:[%s2 + $0x2cc] sm:$0xf]
    %v763 = vld [vmem:[%s2 + $0x2d0] sm:$0xf]
    %v764 = vld [vmem:[%s2 + $0x2d4] sm:$0xf]
    %v765 = vld [vmem:[%s2 + $0x2d8] sm:$0xf]
    %v766 = vld [vmem:[%s2 + $0x2dc] sm:$0xf]
    %v767 = vld [vmem:[%s2 + $0x2e0] sm:$0xf]
    %v768 = vld [vmem:[%s2 + $0x2e4] sm:$0xf]
    %v769 = vld [vmem:[%s2 + $0x2e8] sm:$0xf]
    %v770 = vld [vmem:[%s2 + $0x2ec] sm:$0xf]
    %v771 = vld [vmem:[%s2 + $0x2f0] sm:$0xf]
    %v772 = vld [vmem:[%s2 + $0x2f4] sm:$0xf]
    %v773 = vld [vmem:[%s2 + $0x2f8] sm:$0xf]
    %v774 = vld [vmem:[%s2 + $0x2fc] sm:$0xf]
    %v775 = vld [vmem:[%s2 + $0x300] sm:$0xf]
    %v776 = vld [vmem:[%s2 + $0x304] sm:$0xf]
    %v777 = vld [vmem:[%s2 + $0x308] sm:$0xf]
    %v778 = vld [vmem:[%s2 + $0x30c] sm:$0xf]
    %v779 = vld [vmem:[%s2 + $0x310] sm:$0xf]
    %v780 = vld [vmem:[%s2 + $0x314] sm:$0xf]
    %v781 = vld [vmem:[%s2 + $0x318] sm:$0xf]
    %v782 = vld [vmem:[%s2 + $0x31c] sm:$0xf]
    %v783 = vld [vmem:[%s2 + $0x320] sm:$0xf]
    %v784 = vld [vmem:[%s2 + $0x324] sm:$0xf]
    %v785 = vld [vmem:[%s2 + $0x328] sm:$0xf]
    %v786 = vld [vmem:[%s2 + $0x32c] sm:$0xf]
    %v787 = vld [vmem:[%s2 + $0x330] sm:$0xf]
    %v788 = vld [vmem:[%s2 + $0x334] sm:$0xf]
    %v789 = vld [vmem:[%s2 + $0x338] sm:$0xf]
    %v790 = vld [vmem:[%s2 + $0x33c] sm:$0xf]
    %v791 = vld [vmem:[%s2 + $0x340] sm:$0xf]
    %v792 = vld [vmem:[%s2 + $0x344] sm:$0xf]
    %v793 = vld [vmem:[%s2 + $0x348] sm:$0xf]
    %v794 = vld [vmem:[%s2 + $0x34c] sm:$0xf]
    %v795 = vld [vmem:[%s2 + $0x350] sm:$0xf]
    %v796 = vld [vmem:[%s2 + $0x354] sm:$0xf]
    %v797 = vld [vmem:[%s2 + $0x358] sm:$0xf]
    %v798 = vld [vmem:[%s2 + $0x35c] sm:$0xf]
    %v799 = vld [vmem:[%s2 + $0x360] sm:$0xf]
    %v800 = vld [vmem:[%s2 + $0x364] sm:$0xf]
    %v801 = vld [vmem:[%s2 + $0x368] sm:$0xf]
    %v802 = vld [vmem:[%s2 + $0x36c] sm:$0xf]
    %v803 = vld [vmem:[%s2 + $0x370] sm:$0xf]
    %v804 = vld [vmem:[%s2 + $0x374] sm:$0xf]
    %v805 = vld [vmem:[%s2 + $0x378] sm:$0xf]
    %v806 = vld [vmem:[%s2 + $0x37c] sm:$0xf]
    %v807 = vld [vmem:[%s2 + $0x380] sm:$0xf]
    %v808 = vld [vmem:[%s2 + $0x384] sm:$0xf]
    %v809 = vld [vmem:[%s2 + $0x388] sm:$0xf]
    %v810 = vld [vmem:[%s2 + $0x38c] sm:$0xf]
    %v811 = vld [vmem:[%s2 + $0x390] sm:$0xf]
    %v812 = vld [vmem:[%s2 + $0x394] sm:$0xf]
    %v813 = vld [vmem:[%s2 + $0x398] sm:$0xf]
    %v814 = vld [vmem:[%s2 + $0x39c] sm:$0xf]
    %v815 = vld [vmem:[%s2 + $0x3a0] sm:$0xf]
    %v816 = vld [vmem:[%s2 + $0x3a4] sm:$0xf]
    %v817 = vld [vmem:[%s2 + $0x3a8] sm:$0xf]
    %v818 = vld [vmem:[%s2 + $0x3ac] sm:$0xf]
    %v819 = vld [vmem:[%s2 + $0x3b0] sm:$0xf]
    %v820 = vld [vmem:[%s2 + $0x3b4] sm:$0xf]
    %v821 = vld [vmem:[%s2 + $0x3b8] sm:$0xf]
    %v822 = vld [vmem:[%s2 + $0x3bc] sm:$0xf]
    %v823 = vld [vmem:[%s2 + $0x3c0] sm:$0xf]
    %v824 = vld [vmem:[%s2 + $0x3c4] sm:$0xf]
    %v825 = vld [vmem:[%s2 + $0x3c8] sm:$0xf]
    %v826 = vld [vmem:[%s2 + $0x3cc] sm:$0xf]
    %v827 = vld [vmem:[%s2 + $0x3d0] sm:$0xf]
    %v828 = vld [vmem:[%s2 + $0x3d4] sm:$0xf]
    %v829 = vld [vmem:[%s2 + $0x3d8] sm:$0xf]
    %v830 = vld [vmem:[%s2 + $0x3dc] sm:$0xf]
    %v831 = vld [vmem:[%s2 + $0x3e0] sm:$0xf]
    %v832 = vld [vmem:[%s2 + $0x3e4] sm:$0xf]
    %v833 = vld [vmem:[%s2 + $0x3e8] sm:$0xf]
    %v834 = vld [vmem:[%s2 + $0x3ec] sm:$0xf]
    %v835 = vld [vmem:[%s2 + $0x3f0] sm:$0xf]
    %v836 = vld [vmem:[%s2 + $0x3f4] sm:$0xf]
    %v837 = vld [vmem:[%s2 + $0x3f8] sm:$0xf]
    %v838 = vld [vmem:[%s2 + $0x3fc] sm:$0xf]
    %v839 = vld [vmem:[#allocation5] sm:$0x1]
    %v841 = vlaneseq
    %v842 = vshrl.u32 %v841, 7
    %v843 = vsub.s32 0, %v842
    %v844 = vrot.slane %v839, %v843
    %v854 = vunpack.c.l.b16 %v575
    %v855 = vunpack.c.h.b16 %v575
    %v856 = vunpack.c.l.b16 %v576
    %v857 = vunpack.c.h.b16 %v576
    %v858 = vunpack.c.l.b16 %v577
    %v859 = vunpack.c.h.b16 %v577
    %v860 = vunpack.c.l.b16 %v578
    %v861 = vunpack.c.h.b16 %v578
    %v862 = vunpack.c.l.b16 %v579
    %v863 = vunpack.c.h.b16 %v579
    %v864 = vunpack.c.l.b16 %v580
    %v865 = vunpack.c.h.b16 %v580
    %v866 = vunpack.c.l.b16 %v581
    %v867 = vunpack.c.h.b16 %v581
    %v868 = vunpack.c.l.b16 %v582
    %v869 = vunpack.c.h.b16 %v582
    %v870 = vpack.c.b16 %v854, %v854
    %v871 = vpack.c.b16 %v855, %v855
    %v872 = vpack.c.b16 %v856, %v856
    %v873 = vpack.c.b16 %v857, %v857
    %v874 = vpack.c.b16 %v858, %v858
    %v875 = vpack.c.b16 %v859, %v859
    %v876 = vpack.c.b16 %v860, %v860
    %v877 = vpack.c.b16 %v861, %v861
    %v878 = vpack.c.b16 %v862, %v862
    %v879 = vpack.c.b16 %v863, %v863
    %v880 = vpack.c.b16 %v864, %v864
    %v881 = vpack.c.b16 %v865, %v865
    %v882 = vpack.c.b16 %v866, %v866
    %v883 = vpack.c.b16 %v867, %v867
    %v884 = vpack.c.b16 %v868, %v868
    %v885 = vpack.c.b16 %v869, %v869
    %v1158 = vunpack.c.l.b16 %v583
    %v1159 = vunpack.c.l.b16 %v584
    %v1160 = vunpack.c.l.b16 %v585
    %v1161 = vunpack.c.l.b16 %v586
    %v1162 = vunpack.c.l.b16 %v587
    %v1163 = vunpack.c.l.b16 %v588
    %v1164 = vunpack.c.l.b16 %v589
    %v1165 = vunpack.c.l.b16 %v590
    %v1166 = vunpack.c.l.b16 %v591
    %v1167 = vunpack.c.l.b16 %v592
    %v1168 = vunpack.c.l.b16 %v593
    %v1169 = vunpack.c.l.b16 %v594
    %v1170 = vunpack.c.l.b16 %v595
    %v1171 = vunpack.c.l.b16 %v596
    %v1172 = vunpack.c.l.b16 %v597
    %v1173 = vunpack.c.l.b16 %v598
    %v1174 = vunpack.c.l.b16 %v599
    %v1175 = vunpack.c.l.b16 %v600
    %v1176 = vunpack.c.l.b16 %v601
    %v1177 = vunpack.c.l.b16 %v602
    %v1178 = vunpack.c.l.b16 %v603
    %v1179 = vunpack.c.l.b16 %v604
    %v1180 = vunpack.c.l.b16 %v605
    %v1181 = vunpack.c.l.b16 %v606
    %v1182 = vunpack.c.l.b16 %v607
    %v1183 = vunpack.c.l.b16 %v608
    %v1184 = vunpack.c.l.b16 %v609
    %v1185 = vunpack.c.l.b16 %v610
    %v1186 = vunpack.c.l.b16 %v611
    %v1187 = vunpack.c.l.b16 %v612
    %v1188 = vunpack.c.l.b16 %v613
    %v1189 = vunpack.c.l.b16 %v614
    %v1190 = vunpack.c.l.b16 %v615
    %v1191 = vunpack.c.l.b16 %v616
    %v1192 = vunpack.c.l.b16 %v617
    %v1193 = vunpack.c.l.b16 %v618
    %v1194 = vunpack.c.l.b16 %v619
    %v1195 = vunpack.c.l.b16 %v620
    %v1196 = vunpack.c.l.b16 %v621
    %v1197 = vunpack.c.l.b16 %v622
    %v1198 = vunpack.c.l.b16 %v623
    %v1199 = vunpack.c.l.b16 %v624
    %v1200 = vunpack.c.l.b16 %v625
    %v1201 = vunpack.c.l.b16 %v626
    %v1202 = vunpack.c.l.b16 %v627
    %v1203 = vunpack.c.l.b16 %v628
    %v1204 = vunpack.c.l.b16 %v629
    %v1205 = vunpack.c.l.b16 %v630
    %v1206 = vunpack.c.l.b16 %v631
    %v1207 = vunpack.c.l.b16 %v632
    %v1208 = vunpack.c.l.b16 %v633
    %v1209 = vunpack.c.l.b16 %v634
    %v1210 = vunpack.c.l.b16 %v635
    %v1211 = vunpack.c.l.b16 %v636
    %v1212 = vunpack.c.l.b16 %v637
    %v1213 = vunpack.c.l.b16 %v638
    %v1214 = vunpack.c.l.b16 %v639
    %v1215 = vunpack.c.l.b16 %v640
    %v1216 = vunpack.c.l.b16 %v641
    %v1217 = vunpack.c.l.b16 %v642
    %v1218 = vunpack.c.l.b16 %v643
    %v1219 = vunpack.c.l.b16 %v644
    %v1220 = vunpack.c.l.b16 %v645
    %v1221 = vunpack.c.l.b16 %v646
    %v1222 = vunpack.c.l.b16 %v647
    %v1223 = vunpack.c.l.b16 %v648
    %v1224 = vunpack.c.l.b16 %v649
    %v1225 = vunpack.c.l.b16 %v650
    %v1226 = vunpack.c.l.b16 %v651
    %v1227 = vunpack.c.l.b16 %v652
    %v1228 = vunpack.c.l.b16 %v653
    %v1229 = vunpack.c.l.b16 %v654
    %v1230 = vunpack.c.l.b16 %v655
    %v1231 = vunpack.c.l.b16 %v656
    %v1232 = vunpack.c.l.b16 %v657
    %v1233 = vunpack.c.l.b16 %v658
    %v1234 = vunpack.c.l.b16 %v659
    %v1235 = vunpack.c.l.b16 %v660
    %v1236 = vunpack.c.l.b16 %v661
    %v1237 = vunpack.c.l.b16 %v662
    %v1238 = vunpack.c.l.b16 %v663
    %v1239 = vunpack.c.l.b16 %v664
    %v1240 = vunpack.c.l.b16 %v665
    %v1241 = vunpack.c.l.b16 %v666
    %v1242 = vunpack.c.l.b16 %v667
    %v1243 = vunpack.c.l.b16 %v668
    %v1244 = vunpack.c.l.b16 %v669
    %v1245 = vunpack.c.l.b16 %v670
    %v1246 = vunpack.c.l.b16 %v671
    %v1247 = vunpack.c.l.b16 %v672
    %v1248 = vunpack.c.l.b16 %v673
    %v1249 = vunpack.c.l.b16 %v674
    %v1250 = vunpack.c.l.b16 %v675
    %v1251 = vunpack.c.l.b16 %v676
    %v1252 = vunpack.c.l.b16 %v677
    %v1253 = vunpack.c.l.b16 %v678
    %v1254 = vunpack.c.l.b16 %v679
    %v1255 = vunpack.c.l.b16 %v680
    %v1256 = vunpack.c.l.b16 %v681
    %v1257 = vunpack.c.l.b16 %v682
    %v1258 = vunpack.c.l.b16 %v683
    %v1259 = vunpack.c.l.b16 %v684
    %v1260 = vunpack.c.l.b16 %v685
    %v1261 = vunpack.c.l.b16 %v686
    %v1262 = vunpack.c.l.b16 %v687
    %v1263 = vunpack.c.l.b16 %v688
    %v1264 = vunpack.c.l.b16 %v689
    %v1265 = vunpack.c.l.b16 %v690
    %v1266 = vunpack.c.l.b16 %v691
    %v1267 = vunpack.c.l.b16 %v692
    %v1268 = vunpack.c.l.b16 %v693
    %v1269 = vunpack.c.l.b16 %v694
    %v1270 = vunpack.c.l.b16 %v695
    %v1271 = vunpack.c.l.b16 %v696
    %v1272 = vunpack.c.l.b16 %v697
    %v1273 = vunpack.c.l.b16 %v698
    %v1274 = vunpack.c.l.b16 %v699
    %v1275 = vunpack.c.l.b16 %v700
    %v1276 = vunpack.c.l.b16 %v701
    %v1277 = vunpack.c.l.b16 %v702
    %v1278 = vunpack.c.l.b16 %v703
    %v1279 = vunpack.c.l.b16 %v704
    %v1280 = vunpack.c.l.b16 %v705
    %v1281 = vunpack.c.l.b16 %v706
    %v1282 = vunpack.c.l.b16 %v707
    %v1283 = vunpack.c.l.b16 %v708
    %v1284 = vunpack.c.l.b16 %v709
    %v1285 = vunpack.c.l.b16 %v710
    %v1286 = vunpack.c.l.b16 %v711
    %v1287 = vunpack.c.l.b16 %v712
    %v1288 = vunpack.c.l.b16 %v713
    %v1289 = vunpack.c.l.b16 %v714
    %v1290 = vunpack.c.l.b16 %v715
    %v1291 = vunpack.c.l.b16 %v716
    %v1292 = vunpack.c.l.b16 %v717
    %v1293 = vunpack.c.l.b16 %v718
    %v1294 = vunpack.c.l.b16 %v719
    %v1295 = vunpack.c.l.b16 %v720
    %v1296 = vunpack.c.l.b16 %v721
    %v1297 = vunpack.c.l.b16 %v722
    %v1298 = vunpack.c.l.b16 %v723
    %v1299 = vunpack.c.l.b16 %v724
    %v1300 = vunpack.c.l.b16 %v725
    %v1301 = vunpack.c.l.b16 %v726
    %v1302 = vunpack.c.l.b16 %v727
    %v1303 = vunpack.c.l.b16 %v728
    %v1304 = vunpack.c.l.b16 %v729
    %v1305 = vunpack.c.l.b16 %v730
    %v1306 = vunpack.c.l.b16 %v731
    %v1307 = vunpack.c.l.b16 %v732
    %v1308 = vunpack.c.l.b16 %v733
    %v1309 = vunpack.c.l.b16 %v734
    %v1310 = vunpack.c.l.b16 %v735
    %v1311 = vunpack.c.l.b16 %v736
    %v1312 = vunpack.c.l.b16 %v737
    %v1313 = vunpack.c.l.b16 %v738
    %v1314 = vunpack.c.l.b16 %v739
    %v1315 = vunpack.c.l.b16 %v740
    %v1316 = vunpack.c.l.b16 %v741
    %v1317 = vunpack.c.l.b16 %v742
    %v1318 = vunpack.c.l.b16 %v743
    %v1319 = vunpack.c.l.b16 %v744
    %v1320 = vunpack.c.l.b16 %v745
    %v1321 = vunpack.c.l.b16 %v746
    %v1322 = vunpack.c.l.b16 %v747
    %v1323 = vunpack.c.l.b16 %v748
    %v1324 = vunpack.c.l.b16 %v749
    %v1325 = vunpack.c.l.b16 %v750
    %v1326 = vunpack.c.l.b16 %v751
    %v1327 = vunpack.c.l.b16 %v752
    %v1328 = vunpack.c.l.b16 %v753
    %v1329 = vunpack.c.l.b16 %v754
    %v1330 = vunpack.c.l.b16 %v755
    %v1331 = vunpack.c.l.b16 %v756
    %v1332 = vunpack.c.l.b16 %v757
    %v1333 = vunpack.c.l.b16 %v758
    %v1334 = vunpack.c.l.b16 %v759
    %v1335 = vunpack.c.l.b16 %v760
    %v1336 = vunpack.c.l.b16 %v761
    %v1337 = vunpack.c.l.b16 %v762
    %v1338 = vunpack.c.l.b16 %v763
    %v1339 = vunpack.c.l.b16 %v764
    %v1340 = vunpack.c.l.b16 %v765
    %v1341 = vunpack.c.l.b16 %v766
    %v1342 = vunpack.c.l.b16 %v767
    %v1343 = vunpack.c.l.b16 %v768
    %v1344 = vunpack.c.l.b16 %v769
    %v1345 = vunpack.c.l.b16 %v770
    %v1346 = vunpack.c.l.b16 %v771
    %v1347 = vunpack.c.l.b16 %v772
    %v1348 = vunpack.c.l.b16 %v773
    %v1349 = vunpack.c.l.b16 %v774
    %v1350 = vunpack.c.l.b16 %v775
    %v1351 = vunpack.c.l.b16 %v776
    %v1352 = vunpack.c.l.b16 %v777
    %v1353 = vunpack.c.l.b16 %v778
    %v1354 = vunpack.c.l.b16 %v779
    %v1355 = vunpack.c.l.b16 %v780
    %v1356 = vunpack.c.l.b16 %v781
    %v1357 = vunpack.c.l.b16 %v782
    %v1358 = vunpack.c.l.b16 %v783
    %v1359 = vunpack.c.l.b16 %v784
    %v1360 = vunpack.c.l.b16 %v785
    %v1361 = vunpack.c.l.b16 %v786
    %v1362 = vunpack.c.l.b16 %v787
    %v1363 = vunpack.c.l.b16 %v788
    %v1364 = vunpack.c.l.b16 %v789
    %v1365 = vunpack.c.l.b16 %v790
    %v1366 = vunpack.c.l.b16 %v791
    %v1367 = vunpack.c.l.b16 %v792
    %v1368 = vunpack.c.l.b16 %v793
    %v1369 = vunpack.c.l.b16 %v794
    %v1370 = vunpack.c.l.b16 %v795
    %v1371 = vunpack.c.l.b16 %v796
    %v1372 = vunpack.c.l.b16 %v797
    %v1373 = vunpack.c.l.b16 %v798
    %v1374 = vunpack.c.l.b16 %v799
    %v1375 = vunpack.c.l.b16 %v800
    %v1376 = vunpack.c.l.b16 %v801
    %v1377 = vunpack.c.l.b16 %v802
    %v1378 = vunpack.c.l.b16 %v803
    %v1379 = vunpack.c.l.b16 %v804
    %v1380 = vunpack.c.l.b16 %v805
    %v1381 = vunpack.c.l.b16 %v806
    %v1382 = vunpack.c.l.b16 %v807
    %v1383 = vunpack.c.l.b16 %v808
    %v1384 = vunpack.c.l.b16 %v809
    %v1385 = vunpack.c.l.b16 %v810
    %v1386 = vunpack.c.l.b16 %v811
    %v1387 = vunpack.c.l.b16 %v812
    %v1388 = vunpack.c.l.b16 %v813
    %v1389 = vunpack.c.l.b16 %v814
    %v1390 = vunpack.c.l.b16 %v815
    %v1391 = vunpack.c.l.b16 %v816
    %v1392 = vunpack.c.l.b16 %v817
    %v1393 = vunpack.c.l.b16 %v818
    %v1394 = vunpack.c.l.b16 %v819
    %v1395 = vunpack.c.l.b16 %v820
    %v1396 = vunpack.c.l.b16 %v821
    %v1397 = vunpack.c.l.b16 %v822
    %v1398 = vunpack.c.l.b16 %v823
    %v1399 = vunpack.c.l.b16 %v824
    %v1400 = vunpack.c.l.b16 %v825
    %v1401 = vunpack.c.l.b16 %v826
    %v1402 = vunpack.c.l.b16 %v827
    %v1403 = vunpack.c.l.b16 %v828
    %v1404 = vunpack.c.l.b16 %v829
    %v1405 = vunpack.c.l.b16 %v830
    %v1406 = vunpack.c.l.b16 %v831
    %v1407 = vunpack.c.l.b16 %v832
    %v1408 = vunpack.c.l.b16 %v833
    %v1409 = vunpack.c.l.b16 %v834
    %v1410 = vunpack.c.l.b16 %v835
    %v1411 = vunpack.c.l.b16 %v836
    %v1412 = vunpack.c.l.b16 %v837
    %v1413 = vunpack.c.l.b16 %v838
    %v1414 = vpack.c.b16 %v1159, %v1158
    %v1415 = vpack.c.b16 %v1161, %v1160
    %v1416 = vpack.c.b16 %v1163, %v1162
    %v1417 = vpack.c.b16 %v1165, %v1164
    %v1418 = vpack.c.b16 %v1167, %v1166
    %v1419 = vpack.c.b16 %v1169, %v1168
    %v1420 = vpack.c.b16 %v1171, %v1170
    %v1421 = vpack.c.b16 %v1173, %v1172
    %v1422 = vpack.c.b16 %v1175, %v1174
    %v1423 = vpack.c.b16 %v1177, %v1176
    %v1424 = vpack.c.b16 %v1179, %v1178
    %v1425 = vpack.c.b16 %v1181, %v1180
    %v1426 = vpack.c.b16 %v1183, %v1182
    %v1427 = vpack.c.b16 %v1185, %v1184
    %v1428 = vpack.c.b16 %v1187, %v1186
    %v1429 = vpack.c.b16 %v1189, %v1188
    %v1430 = vpack.c.b16 %v1191, %v1190
    %v1431 = vpack.c.b16 %v1193, %v1192
    %v1432 = vpack.c.b16 %v1195, %v1194
    %v1433 = vpack.c.b16 %v1197, %v1196
    %v1434 = vpack.c.b16 %v1199, %v1198
    %v1435 = vpack.c.b16 %v1201, %v1200
    %v1436 = vpack.c.b16 %v1203, %v1202
    %v1437 = vpack.c.b16 %v1205, %v1204
    %v1438 = vpack.c.b16 %v1207, %v1206
    %v1439 = vpack.c.b16 %v1209, %v1208
    %v1440 = vpack.c.b16 %v1211, %v1210
    %v1441 = vpack.c.b16 %v1213, %v1212
    %v1442 = vpack.c.b16 %v1215, %v1214
    %v1443 = vpack.c.b16 %v1217, %v1216
    %v1444 = vpack.c.b16 %v1219, %v1218
    %v1445 = vpack.c.b16 %v1221, %v1220
    %v1446 = vpack.c.b16 %v1223, %v1222
    %v1447 = vpack.c.b16 %v1225, %v1224
    %v1448 = vpack.c.b16 %v1227, %v1226
    %v1449 = vpack.c.b16 %v1229, %v1228
    %v1450 = vpack.c.b16 %v1231, %v1230
    %v1451 = vpack.c.b16 %v1233, %v1232
    %v1452 = vpack.c.b16 %v1235, %v1234
    %v1453 = vpack.c.b16 %v1237, %v1236
    %v1454 = vpack.c.b16 %v1239, %v1238
    %v1455 = vpack.c.b16 %v1241, %v1240
    %v1456 = vpack.c.b16 %v1243, %v1242
    %v1457 = vpack.c.b16 %v1245, %v1244
    %v1458 = vpack.c.b16 %v1247, %v1246
    %v1459 = vpack.c.b16 %v1249, %v1248
    %v1460 = vpack.c.b16 %v1251, %v1250
    %v1461 = vpack.c.b16 %v1253, %v1252
    %v1462 = vpack.c.b16 %v1255, %v1254
    %v1463 = vpack.c.b16 %v1257, %v1256
    %v1464 = vpack.c.b16 %v1259, %v1258
    %v1465 = vpack.c.b16 %v1261, %v1260
    %v1466 = vpack.c.b16 %v1263, %v1262
    %v1467 = vpack.c.b16 %v1265, %v1264
    %v1468 = vpack.c.b16 %v1267, %v1266
    %v1469 = vpack.c.b16 %v1269, %v1268
    %v1470 = vpack.c.b16 %v1271, %v1270
    %v1471 = vpack.c.b16 %v1273, %v1272
    %v1472 = vpack.c.b16 %v1275, %v1274
    %v1473 = vpack.c.b16 %v1277, %v1276
    %v1474 = vpack.c.b16 %v1279, %v1278
    %v1475 = vpack.c.b16 %v1281, %v1280
    %v1476 = vpack.c.b16 %v1283, %v1282
    %v1477 = vpack.c.b16 %v1285, %v1284
    %v1478 = vpack.c.b16 %v1287, %v1286
    %v1479 = vpack.c.b16 %v1289, %v1288
    %v1480 = vpack.c.b16 %v1291, %v1290
    %v1481 = vpack.c.b16 %v1293, %v1292
    %v1482 = vpack.c.b16 %v1295, %v1294
    %v1483 = vpack.c.b16 %v1297, %v1296
    %v1484 = vpack.c.b16 %v1299, %v1298
    %v1485 = vpack.c.b16 %v1301, %v1300
    %v1486 = vpack.c.b16 %v1303, %v1302
    %v1487 = vpack.c.b16 %v1305, %v1304
    %v1488 = vpack.c.b16 %v1307, %v1306
    %v1489 = vpack.c.b16 %v1309, %v1308
    %v1490 = vpack.c.b16 %v1311, %v1310
    %v1491 = vpack.c.b16 %v1313, %v1312
    %v1492 = vpack.c.b16 %v1315, %v1314
    %v1493 = vpack.c.b16 %v1317, %v1316
    %v1494 = vpack.c.b16 %v1319, %v1318
    %v1495 = vpack.c.b16 %v1321, %v1320
    %v1496 = vpack.c.b16 %v1323, %v1322
    %v1497 = vpack.c.b16 %v1325, %v1324
    %v1498 = vpack.c.b16 %v1327, %v1326
    %v1499 = vpack.c.b16 %v1329, %v1328
    %v1500 = vpack.c.b16 %v1331, %v1330
    %v1501 = vpack.c.b16 %v1333, %v1332
    %v1502 = vpack.c.b16 %v1335, %v1334
    %v1503 = vpack.c.b16 %v1337, %v1336
    %v1504 = vpack.c.b16 %v1339, %v1338
    %v1505 = vpack.c.b16 %v1341, %v1340
    %v1506 = vpack.c.b16 %v1343, %v1342
    %v1507 = vpack.c.b16 %v1345, %v1344
    %v1508 = vpack.c.b16 %v1347, %v1346
    %v1509 = vpack.c.b16 %v1349, %v1348
    %v1510 = vpack.c.b16 %v1351, %v1350
    %v1511 = vpack.c.b16 %v1353, %v1352
    %v1512 = vpack.c.b16 %v1355, %v1354
    %v1513 = vpack.c.b16 %v1357, %v1356
    %v1514 = vpack.c.b16 %v1359, %v1358
    %v1515 = vpack.c.b16 %v1361, %v1360
    %v1516 = vpack.c.b16 %v1363, %v1362
    %v1517 = vpack.c.b16 %v1365, %v1364
    %v1518 = vpack.c.b16 %v1367, %v1366
    %v1519 = vpack.c.b16 %v1369, %v1368
    %v1520 = vpack.c.b16 %v1371, %v1370
    %v1521 = vpack.c.b16 %v1373, %v1372
    %v1522 = vpack.c.b16 %v1375, %v1374
    %v1523 = vpack.c.b16 %v1377, %v1376
    %v1524 = vpack.c.b16 %v1379, %v1378
    %v1525 = vpack.c.b16 %v1381, %v1380
    %v1526 = vpack.c.b16 %v1383, %v1382
    %v1527 = vpack.c.b16 %v1385, %v1384
    %v1528 = vpack.c.b16 %v1387, %v1386
    %v1529 = vpack.c.b16 %v1389, %v1388
    %v1530 = vpack.c.b16 %v1391, %v1390
    %v1531 = vpack.c.b16 %v1393, %v1392
    %v1532 = vpack.c.b16 %v1395, %v1394
    %v1533 = vpack.c.b16 %v1397, %v1396
    %v1534 = vpack.c.b16 %v1399, %v1398
    %v1535 = vpack.c.b16 %v1401, %v1400
    %v1536 = vpack.c.b16 %v1403, %v1402
    %v1537 = vpack.c.b16 %v1405, %v1404
    %v1538 = vpack.c.b16 %v1407, %v1406
    %v1539 = vpack.c.b16 %v1409, %v1408
    %v1540 = vpack.c.b16 %v1411, %v1410
    %v1541 = vpack.c.b16 %v1413, %v1412
    %1670 = vmatprep.subr.bf16.mxu0 0
    %1671 = vmatpush1.bf16.msra.mxu0 %v1421
    %1672 = vmatprep.subr.bf16.mxu0 0
    %1673 = vmatpush1.bf16.msra.mxu0 %v1420
    %1674 = vmatprep.subr.bf16.mxu0 0
    %1675 = vmatpush1.bf16.msra.mxu0 %v1419
    %1676 = vmatprep.subr.bf16.mxu0 0
    %1677 = vmatpush1.bf16.msra.mxu0 %v1418
    %1678 = vmatprep.subr.bf16.mxu0 0
    %1679 = vmatpush1.bf16.msra.mxu0 %v1417
    %1680 = vmatprep.subr.bf16.mxu0 0
    %1681 = vmatpush1.bf16.msra.mxu0 %v1416
    %1682 = vmatprep.subr.bf16.mxu0 0
    %1683 = vmatpush1.bf16.msra.mxu0 %v1415
    %1684 = vmatprep.subr.bf16.mxu0 0
    %1685 = vmatpush1.bf16.msra.mxu0 %v1414
    %1686 = vmatprep.subr.bf16.mxu0 0
    %1687 = vmatpush2.bf16.msra.mxu0 %v1429
    %1688 = vmatprep.subr.bf16.mxu0 0
    %1689 = vmatpush2.bf16.msra.mxu0 %v1428
    %1690 = vmatprep.subr.bf16.mxu0 0
    %1691 = vmatpush2.bf16.msra.mxu0 %v1427
    %1692 = vmatprep.subr.bf16.mxu0 0
    %1693 = vmatpush2.bf16.msra.mxu0 %v1426
    %1694 = vmatprep.subr.bf16.mxu0 0
    %1695 = vmatpush2.bf16.msra.mxu0 %v1425
    %1696 = vmatprep.subr.bf16.mxu0 0
    %1697 = vmatpush2.bf16.msra.mxu0 %v1424
    %1698 = vmatprep.subr.bf16.mxu0 0
    %1699 = vmatpush2.bf16.msra.mxu0 %v1423
    %1700 = vmatprep.subr.bf16.mxu0 0
    %1701 = vmatpush2.bf16.msra.mxu0 %v1422
    %1702 = vmatprep.mubr.bf16.mxu0 %v871
    %1703 = vmatmul.mubr.bf16.gmra.mxu0 %v870
    %v1704 = vpop.f32.mrf.mxu0
    %v1705 = vadd.f32 %v844, %v1704
    %v1706 = vpop.f32.mrf.mxu0
    %v1707 = vpop.f32.mrf.mxu0
    %v1708 = vpop.f32.mrf.mxu0
    %1709 = vdwg.mxu0
    %1710 = vmatprep.subr.bf16.mxu0 0
    %1711 = vmatpush1.bf16.msra.mxu0 %v1437
    %1712 = vmatprep.subr.bf16.mxu0 0
    %1713 = vmatpush1.bf16.msra.mxu0 %v1436
    %1714 = vmatprep.subr.bf16.mxu0 0
    %1715 = vmatpush1.bf16.msra.mxu0 %v1435
    %1716 = vmatprep.subr.bf16.mxu0 0
    %1717 = vmatpush1.bf16.msra.mxu0 %v1434
    %1718 = vmatprep.subr.bf16.mxu0 0
    %1719 = vmatpush1.bf16.msra.mxu0 %v1433
    %1720 = vmatprep.subr.bf16.mxu0 0
    %1721 = vmatpush1.bf16.msra.mxu0 %v1432
    %1722 = vmatprep.subr.bf16.mxu0 0
    %1723 = vmatpush1.bf16.msra.mxu0 %v1431
    %1724 = vmatprep.subr.bf16.mxu0 0
    %1725 = vmatpush1.bf16.msra.mxu0 %v1430
    %1726 = vmatprep.subr.bf16.mxu0 0
    %1727 = vmatpush2.bf16.msra.mxu0 %v1445
    %1728 = vmatprep.subr.bf16.mxu0 0
    %1729 = vmatpush2.bf16.msra.mxu0 %v1444
    %1730 = vmatprep.subr.bf16.mxu0 0
    %1731 = vmatpush2.bf16.msra.mxu0 %v1443
    %1732 = vmatprep.subr.bf16.mxu0 0
    %1733 = vmatpush2.bf16.msra.mxu0 %v1442
    %1734 = vmatprep.subr.bf16.mxu0 0
    %1735 = vmatpush2.bf16.msra.mxu0 %v1441
    %1736 = vmatprep.subr.bf16.mxu0 0
    %1737 = vmatpush2.bf16.msra.mxu0 %v1440
    %1738 = vmatprep.subr.bf16.mxu0 0
    %1739 = vmatpush2.bf16.msra.mxu0 %v1439
    %1740 = vmatprep.subr.bf16.mxu0 0
    %1741 = vmatpush2.bf16.msra.mxu0 %v1438
    %1742 = vmatprep.mubr.bf16.mxu0 %v873
    %1743 = vmatmul.mubr.bf16.gmra.mxu0 %v872
    %v1744 = vpop.f32.mrf.mxu0
    %v1745 = vadd.f32 %v1705, %v1744
    %v1746 = vpop.f32.mrf.mxu0
    %v1747 = vpop.f32.mrf.mxu0
    %v1748 = vpop.f32.mrf.mxu0
    %1749 = vdwg.mxu0
    %1750 = vmatprep.subr.bf16.mxu0 0
    %1751 = vmatpush1.bf16.msra.mxu0 %v1453
    %1752 = vmatprep.subr.bf16.mxu0 0
    %1753 = vmatpush1.bf16.msra.mxu0 %v1452
    %1754 = vmatprep.subr.bf16.mxu0 0
    %1755 = vmatpush1.bf16.msra.mxu0 %v1451
    %1756 = vmatprep.subr.bf16.mxu0 0
    %1757 = vmatpush1.bf16.msra.mxu0 %v1450
    %1758 = vmatprep.subr.bf16.mxu0 0
    %1759 = vmatpush1.bf16.msra.mxu0 %v1449
    %1760 = vmatprep.subr.bf16.mxu0 0
    %1761 = vmatpush1.bf16.msra.mxu0 %v1448
    %1762 = vmatprep.subr.bf16.mxu0 0
    %1763 = vmatpush1.bf16.msra.mxu0 %v1447
    %1764 = vmatprep.subr.bf16.mxu0 0
    %1765 = vmatpush1.bf16.msra.mxu0 %v1446
    %1766 = vmatprep.subr.bf16.mxu0 0
    %1767 = vmatpush2.bf16.msra.mxu0 %v1461
    %1768 = vmatprep.subr.bf16.mxu0 0
    %1769 = vmatpush2.bf16.msra.mxu0 %v1460
    %1770 = vmatprep.subr.bf16.mxu0 0
    %1771 = vmatpush2.bf16.msra.mxu0 %v1459
    %1772 = vmatprep.subr.bf16.mxu0 0
    %1773 = vmatpush2.bf16.msra.mxu0 %v1458
    %1774 = vmatprep.subr.bf16.mxu0 0
    %1775 = vmatpush2.bf16.msra.mxu0 %v1457
    %1776 = vmatprep.subr.bf16.mxu0 0
    %1777 = vmatpush2.bf16.msra.mxu0 %v1456
    %1778 = vmatprep.subr.bf16.mxu0 0
    %1779 = vmatpush2.bf16.msra.mxu0 %v1455
    %1780 = vmatprep.subr.bf16.mxu0 0
    %1781 = vmatpush2.bf16.msra.mxu0 %v1454
    %1782 = vmatprep.mubr.bf16.mxu0 %v875
    %1783 = vmatmul.mubr.bf16.gmra.mxu0 %v874
    %v1784 = vpop.f32.mrf.mxu0
    %v1785 = vadd.f32 %v1745, %v1784
    %v1786 = vpop.f32.mrf.mxu0
    %v1787 = vpop.f32.mrf.mxu0
    %v1788 = vpop.f32.mrf.mxu0
    %1789 = vdwg.mxu0
    %1790 = vmatprep.subr.bf16.mxu0 0
    %1791 = vmatpush1.bf16.msra.mxu0 %v1469
    %1792 = vmatprep.subr.bf16.mxu0 0
    %1793 = vmatpush1.bf16.msra.mxu0 %v1468
    %1794 = vmatprep.subr.bf16.mxu0 0
    %1795 = vmatpush1.bf16.msra.mxu0 %v1467
    %1796 = vmatprep.subr.bf16.mxu0 0
    %1797 = vmatpush1.bf16.msra.mxu0 %v1466
    %1798 = vmatprep.subr.bf16.mxu0 0
    %1799 = vmatpush1.bf16.msra.mxu0 %v1465
    %1800 = vmatprep.subr.bf16.mxu0 0
    %1801 = vmatpush1.bf16.msra.mxu0 %v1464
    %1802 = vmatprep.subr.bf16.mxu0 0
    %1803 = vmatpush1.bf16.msra.mxu0 %v1463
    %1804 = vmatprep.subr.bf16.mxu0 0
    %1805 = vmatpush1.bf16.msra.mxu0 %v1462
    %1806 = vmatprep.subr.bf16.mxu0 0
    %1807 = vmatpush2.bf16.msra.mxu0 %v1477
    %1808 = vmatprep.subr.bf16.mxu0 0
    %1809 = vmatpush2.bf16.msra.mxu0 %v1476
    %1810 = vmatprep.subr.bf16.mxu0 0
    %1811 = vmatpush2.bf16.msra.mxu0 %v1475
    %1812 = vmatprep.subr.bf16.mxu0 0
    %1813 = vmatpush2.bf16.msra.mxu0 %v1474
    %1814 = vmatprep.subr.bf16.mxu0 0
    %1815 = vmatpush2.bf16.msra.mxu0 %v1473
    %1816 = vmatprep.subr.bf16.mxu0 0
    %1817 = vmatpush2.bf16.msra.mxu0 %v1472
    %1818 = vmatprep.subr.bf16.mxu0 0
    %1819 = vmatpush2.bf16.msra.mxu0 %v1471
    %1820 = vmatprep.subr.bf16.mxu0 0
    %1821 = vmatpush2.bf16.msra.mxu0 %v1470
    %1822 = vmatprep.mubr.bf16.mxu0 %v877
    %1823 = vmatmul.mubr.bf16.gmra.mxu0 %v876
    %v1824 = vpop.f32.mrf.mxu0
    %v1825 = vadd.f32 %v1785, %v1824
    %v1826 = vpop.f32.mrf.mxu0
    %v1827 = vpop.f32.mrf.mxu0
    %v1828 = vpop.f32.mrf.mxu0
    %1829 = vdwg.mxu0
    %1830 = vmatprep.subr.bf16.mxu0 0
    %1831 = vmatpush1.bf16.msra.mxu0 %v1485
    %1832 = vmatprep.subr.bf16.mxu0 0
    %1833 = vmatpush1.bf16.msra.mxu0 %v1484
    %1834 = vmatprep.subr.bf16.mxu0 0
    %1835 = vmatpush1.bf16.msra.mxu0 %v1483
    %1836 = vmatprep.subr.bf16.mxu0 0
    %1837 = vmatpush1.bf16.msra.mxu0 %v1482
    %1838 = vmatprep.subr.bf16.mxu0 0
    %1839 = vmatpush1.bf16.msra.mxu0 %v1481
    %1840 = vmatprep.subr.bf16.mxu0 0
    %1841 = vmatpush1.bf16.msra.mxu0 %v1480
    %1842 = vmatprep.subr.bf16.mxu0 0
    %1843 = vmatpush1.bf16.msra.mxu0 %v1479
    %1844 = vmatprep.subr.bf16.mxu0 0
    %1845 = vmatpush1.bf16.msra.mxu0 %v1478
    %1846 = vmatprep.subr.bf16.mxu0 0
    %1847 = vmatpush2.bf16.msra.mxu0 %v1493
    %1848 = vmatprep.subr.bf16.mxu0 0
    %1849 = vmatpush2.bf16.msra.mxu0 %v1492
    %1850 = vmatprep.subr.bf16.mxu0 0
    %1851 = vmatpush2.bf16.msra.mxu0 %v1491
    %1852 = vmatprep.subr.bf16.mxu0 0
    %1853 = vmatpush2.bf16.msra.mxu0 %v1490
    %1854 = vmatprep.subr.bf16.mxu0 0
    %1855 = vmatpush2.bf16.msra.mxu0 %v1489
    %1856 = vmatprep.subr.bf16.mxu0 0
    %1857 = vmatpush2.bf16.msra.mxu0 %v1488
    %1858 = vmatprep.subr.bf16.mxu0 0
    %1859 = vmatpush2.bf16.msra.mxu0 %v1487
    %1860 = vmatprep.subr.bf16.mxu0 0
    %1861 = vmatpush2.bf16.msra.mxu0 %v1486
    %1862 = vmatprep.mubr.bf16.mxu0 %v879
    %1863 = vmatmul.mubr.bf16.gmra.mxu0 %v878
    %v1864 = vpop.f32.mrf.mxu0
    %v1865 = vadd.f32 %v1825, %v1864
    %v1866 = vpop.f32.mrf.mxu0
    %v1867 = vpop.f32.mrf.mxu0
    %v1868 = vpop.f32.mrf.mxu0
    %1869 = vdwg.mxu0
    %1870 = vmatprep.subr.bf16.mxu0 0
    %1871 = vmatpush1.bf16.msra.mxu0 %v1501
    %1872 = vmatprep.subr.bf16.mxu0 0
    %1873 = vmatpush1.bf16.msra.mxu0 %v1500
    %1874 = vmatprep.subr.bf16.mxu0 0
    %1875 = vmatpush1.bf16.msra.mxu0 %v1499
    %1876 = vmatprep.subr.bf16.mxu0 0
    %1877 = vmatpush1.bf16.msra.mxu0 %v1498
    %1878 = vmatprep.subr.bf16.mxu0 0
    %1879 = vmatpush1.bf16.msra.mxu0 %v1497
    %1880 = vmatprep.subr.bf16.mxu0 0
    %1881 = vmatpush1.bf16.msra.mxu0 %v1496
    %1882 = vmatprep.subr.bf16.mxu0 0
    %1883 = vmatpush1.bf16.msra.mxu0 %v1495
    %1884 = vmatprep.subr.bf16.mxu0 0
    %1885 = vmatpush1.bf16.msra.mxu0 %v1494
    %1886 = vmatprep.subr.bf16.mxu0 0
    %1887 = vmatpush2.bf16.msra.mxu0 %v1509
    %1888 = vmatprep.subr.bf16.mxu0 0
    %1889 = vmatpush2.bf16.msra.mxu0 %v1508
    %1890 = vmatprep.subr.bf16.mxu0 0
    %1891 = vmatpush2.bf16.msra.mxu0 %v1507
    %1892 = vmatprep.subr.bf16.mxu0 0
    %1893 = vmatpush2.bf16.msra.mxu0 %v1506
    %1894 = vmatprep.subr.bf16.mxu0 0
    %1895 = vmatpush2.bf16.msra.mxu0 %v1505
    %1896 = vmatprep.subr.bf16.mxu0 0
    %1897 = vmatpush2.bf16.msra.mxu0 %v1504
    %1898 = vmatprep.subr.bf16.mxu0 0
    %1899 = vmatpush2.bf16.msra.mxu0 %v1503
    %1900 = vmatprep.subr.bf16.mxu0 0
    %1901 = vmatpush2.bf16.msra.mxu0 %v1502
    %1902 = vmatprep.mubr.bf16.mxu0 %v881
    %1903 = vmatmul.mubr.bf16.gmra.mxu0 %v880
    %v1904 = vpop.f32.mrf.mxu0
    %v1905 = vadd.f32 %v1865, %v1904
    %v1906 = vpop.f32.mrf.mxu0
    %v1907 = vpop.f32.mrf.mxu0
    %v1908 = vpop.f32.mrf.mxu0
    %1909 = vdwg.mxu0
    %1910 = vmatprep.subr.bf16.mxu0 0
    %1911 = vmatpush1.bf16.msra.mxu0 %v1517
    %1912 = vmatprep.subr.bf16.mxu0 0
    %1913 = vmatpush1.bf16.msra.mxu0 %v1516
    %1914 = vmatprep.subr.bf16.mxu0 0
    %1915 = vmatpush1.bf16.msra.mxu0 %v1515
    %1916 = vmatprep.subr.bf16.mxu0 0
    %1917 = vmatpush1.bf16.msra.mxu0 %v1514
    %1918 = vmatprep.subr.bf16.mxu0 0
    %1919 = vmatpush1.bf16.msra.mxu0 %v1513
    %1920 = vmatprep.subr.bf16.mxu0 0
    %1921 = vmatpush1.bf16.msra.mxu0 %v1512
    %1922 = vmatprep.subr.bf16.mxu0 0
    %1923 = vmatpush1.bf16.msra.mxu0 %v1511
    %1924 = vmatprep.subr.bf16.mxu0 0
    %1925 = vmatpush1.bf16.msra.mxu0 %v1510
    %1926 = vmatprep.subr.bf16.mxu0 0
    %1927 = vmatpush2.bf16.msra.mxu0 %v1525
    %1928 = vmatprep.subr.bf16.mxu0 0
    %1929 = vmatpush2.bf16.msra.mxu0 %v1524
    %1930 = vmatprep.subr.bf16.mxu0 0
    %1931 = vmatpush2.bf16.msra.mxu0 %v1523
    %1932 = vmatprep.subr.bf16.mxu0 0
    %1933 = vmatpush2.bf16.msra.mxu0 %v1522
    %1934 = vmatprep.subr.bf16.mxu0 0
    %1935 = vmatpush2.bf16.msra.mxu0 %v1521
    %1936 = vmatprep.subr.bf16.mxu0 0
    %1937 = vmatpush2.bf16.msra.mxu0 %v1520
    %1938 = vmatprep.subr.bf16.mxu0 0
    %1939 = vmatpush2.bf16.msra.mxu0 %v1519
    %1940 = vmatprep.subr.bf16.mxu0 0
    %1941 = vmatpush2.bf16.msra.mxu0 %v1518
    %1942 = vmatprep.mubr.bf16.mxu0 %v883
    %1943 = vmatmul.mubr.bf16.gmra.mxu0 %v882
    %v1944 = vpop.f32.mrf.mxu0
    %v1945 = vadd.f32 %v1905, %v1944
    %v1946 = vpop.f32.mrf.mxu0
    %v1947 = vpop.f32.mrf.mxu0
    %v1948 = vpop.f32.mrf.mxu0
    %1949 = vdwg.mxu0
    %1950 = vmatprep.subr.bf16.mxu0 0
    %1951 = vmatpush1.bf16.msra.mxu0 %v1533
    %1952 = vmatprep.subr.bf16.mxu0 0
    %1953 = vmatpush1.bf16.msra.mxu0 %v1532
    %1954 = vmatprep.subr.bf16.mxu0 0
    %1955 = vmatpush1.bf16.msra.mxu0 %v1531
    %1956 = vmatprep.subr.bf16.mxu0 0
    %1957 = vmatpush1.bf16.msra.mxu0 %v1530
    %1958 = vmatprep.subr.bf16.mxu0 0
    %1959 = vmatpush1.bf16.msra.mxu0 %v1529
    %1960 = vmatprep.subr.bf16.mxu0 0
    %1961 = vmatpush1.bf16.msra.mxu0 %v1528
    %1962 = vmatprep.subr.bf16.mxu0 0
    %1963 = vmatpush1.bf16.msra.mxu0 %v1527
    %1964 = vmatprep.subr.bf16.mxu0 0
    %1965 = vmatpush1.bf16.msra.mxu0 %v1526
    %1966 = vmatprep.subr.bf16.mxu0 0
    %1967 = vmatpush2.bf16.msra.mxu0 %v1541
    %1968 = vmatprep.subr.bf16.mxu0 0
    %1969 = vmatpush2.bf16.msra.mxu0 %v1540
    %1970 = vmatprep.subr.bf16.mxu0 0
    %1971 = vmatpush2.bf16.msra.mxu0 %v1539
    %1972 = vmatprep.subr.bf16.mxu0 0
    %1973 = vmatpush2.bf16.msra.mxu0 %v1538
    %1974 = vmatprep.subr.bf16.mxu0 0
    %1975 = vmatpush2.bf16.msra.mxu0 %v1537
    %1976 = vmatprep.subr.bf16.mxu0 0
    %1977 = vmatpush2.bf16.msra.mxu0 %v1536
    %1978 = vmatprep.subr.bf16.mxu0 0
    %1979 = vmatpush2.bf16.msra.mxu0 %v1535
    %1980 = vmatprep.subr.bf16.mxu0 0
    %1981 = vmatpush2.bf16.msra.mxu0 %v1534
    %1982 = vmatprep.mubr.bf16.mxu0 %v885
    %1983 = vmatmul.mubr.bf16.gmra.mxu0 %v884
    %v1984 = vpop.f32.mrf.mxu0
    %v1985 = vadd.f32 %v1945, %v1984
    %v1986 = vpop.f32.mrf.mxu0
    %v1987 = vpop.f32.mrf.mxu0
    %v1988 = vpop.f32.mrf.mxu0
    %1989 = vdwg.mxu0
    %v1990 = vld [vmem:[%s0] sm:$0xf]
    %v1991 = vld [vmem:[#allocation7] sm:$0xf]
    %v1992 = vld [vmem:[#allocation7 + $0x4] sm:$0xf]
    %v1993 = vld [vmem:[#allocation7 + $0x8] sm:$0xf]
    %v1994 = vld [vmem:[#allocation7 + $0xc] sm:$0xf]
    %v1995 = vld [vmem:[#allocation7 + $0x10] sm:$0xf]
    %v1996 = vld [vmem:[#allocation7 + $0x14] sm:$0xf]
    %v1997 = vld [vmem:[#allocation7 + $0x18] sm:$0xf]
    %v1998 = vld [vmem:[#allocation7 + $0x1c] sm:$0xf]
    %v1999 = vld [vmem:[#allocation7 + $0x20] sm:$0xf]
    %v2000 = vld [vmem:[#allocation7 + $0x24] sm:$0xf]
    %v2001 = vld [vmem:[#allocation7 + $0x28] sm:$0xf]
    %v2002 = vld [vmem:[#allocation7 + $0x2c] sm:$0xf]
    %v2003 = vld [vmem:[#allocation7 + $0x30] sm:$0xf]
    %v2004 = vld [vmem:[#allocation7 + $0x34] sm:$0xf]
    %v2005 = vld [vmem:[#allocation7 + $0x38] sm:$0xf]
    %v2006 = vld [vmem:[#allocation7 + $0x3c] sm:$0xf]
    %v2007 = vpack.c.bf16 %v1985, %v1985
    %v2008 = vld [vmem:[#allocation9] sm:$0xf]
    %v2009 = vld [vmem:[#allocation9 + $0x4] sm:$0xf]
    %v2010 = vld [vmem:[#allocation9 + $0x8] sm:$0xf]
    %v2011 = vld [vmem:[#allocation9 + $0xc] sm:$0xf]
    %v2012 = vld [vmem:[#allocation9 + $0x10] sm:$0xf]
    %v2013 = vld [vmem:[#allocation9 + $0x14] sm:$0xf]
    %v2014 = vld [vmem:[#allocation9 + $0x18] sm:$0xf]
    %v2015 = vld [vmem:[#allocation9 + $0x1c] sm:$0xf]
    %v2016 = vld [vmem:[#allocation9 + $0x20] sm:$0xf]
    %v2017 = vld [vmem:[#allocation9 + $0x24] sm:$0xf]
    %v2018 = vld [vmem:[#allocation9 + $0x28] sm:$0xf]
    %v2019 = vld [vmem:[#allocation9 + $0x2c] sm:$0xf]
    %v2020 = vld [vmem:[#allocation9 + $0x30] sm:$0xf]
    %v2021 = vld [vmem:[#allocation9 + $0x34] sm:$0xf]
    %v2022 = vld [vmem:[#allocation9 + $0x38] sm:$0xf]
    %v2023 = vld [vmem:[#allocation9 + $0x3c] sm:$0xf]
    %v2040 = vunpack.c.l.b16 %v2008
    %v2041 = vunpack.c.l.b16 %v2009
    %v2042 = vunpack.c.l.b16 %v2010
    %v2043 = vunpack.c.l.b16 %v2011
    %v2044 = vunpack.c.l.b16 %v2012
    %v2045 = vunpack.c.l.b16 %v2013
    %v2046 = vunpack.c.l.b16 %v2014
    %v2047 = vunpack.c.l.b16 %v2015
    %v2048 = vunpack.c.l.b16 %v2016
    %v2049 = vunpack.c.l.b16 %v2017
    %v2050 = vunpack.c.l.b16 %v2018
    %v2051 = vunpack.c.l.b16 %v2019
    %v2052 = vunpack.c.l.b16 %v2020
    %v2053 = vunpack.c.l.b16 %v2021
    %v2054 = vunpack.c.l.b16 %v2022
    %v2055 = vunpack.c.l.b16 %v2023
    %v2056 = vpack.c.b16 %v2041, %v2040
    %v2057 = vpack.c.b16 %v2043, %v2042
    %v2058 = vpack.c.b16 %v2045, %v2044
    %v2059 = vpack.c.b16 %v2047, %v2046
    %v2060 = vpack.c.b16 %v2049, %v2048
    %v2061 = vpack.c.b16 %v2051, %v2050
    %v2062 = vpack.c.b16 %v2053, %v2052
    %v2063 = vpack.c.b16 %v2055, %v2054
    %2072 = vmatprep.subr.bf16.mxu0 0
    %2073 = vmatpush1.bf16.msra.mxu0 %v2063
    %2074 = vmatprep.subr.bf16.mxu0 0
    %2075 = vmatpush1.bf16.msra.mxu0 %v2062
    %2076 = vmatprep.subr.bf16.mxu0 0
    %2077 = vmatpush1.bf16.msra.mxu0 %v2061
    %2078 = vmatprep.subr.bf16.mxu0 0
    %2079 = vmatpush1.bf16.msra.mxu0 %v2060
    %2080 = vmatprep.subr.bf16.mxu0 0
    %2081 = vmatpush1.bf16.msra.mxu0 %v2059
    %2082 = vmatprep.subr.bf16.mxu0 0
    %2083 = vmatpush1.bf16.msra.mxu0 %v2058
    %2084 = vmatprep.subr.bf16.mxu0 0
    %2085 = vmatpush1.bf16.msra.mxu0 %v2057
    %2086 = vmatprep.subr.bf16.mxu0 0
    %2087 = vmatpush1.bf16.msra.mxu0 %v2056
    %2088 = vmatprep.subr.bf16.mxu0 0
    %2089 = vmatpush2.bf16.msra.mxu0 0
    %2090 = vmatprep.subr.bf16.mxu0 0
    %2091 = vmatpush2.bf16.msra.mxu0 0
    %2092 = vmatprep.subr.bf16.mxu0 0
    %2093 = vmatpush2.bf16.msra.mxu0 0
    %2094 = vmatprep.subr.bf16.mxu0 0
    %2095 = vmatpush2.bf16.msra.mxu0 0
    %2096 = vmatprep.subr.bf16.mxu0 0
    %2097 = vmatpush2.bf16.msra.mxu0 0
    %2098 = vmatprep.subr.bf16.mxu0 0
    %2099 = vmatpush2.bf16.msra.mxu0 0
    %2100 = vmatprep.subr.bf16.mxu0 0
    %2101 = vmatpush2.bf16.msra.mxu0 0
    %2102 = vmatprep.subr.bf16.mxu0 0
    %2103 = vmatpush2.bf16.msra.mxu0 0
    %2104 = vmatprep.mubr.bf16.mxu0 0
    %2105 = vmatmul.mubr.bf16.gmra.mxu0 %v2007
    %v2106 = vpop.f32.mrf.mxu0
    %v2107 = vadd.f32 0.0, %v2106
    %v2108 = vpop.f32.mrf.mxu0
    %v2109 = vpop.f32.mrf.mxu0
    %v2110 = vpop.f32.mrf.mxu0
    %2111 = vdwg.mxu0
    %v2128 = vunpack.c.l.b16 %v1991
    %v2129 = vunpack.c.l.b16 %v1992
    %v2130 = vunpack.c.l.b16 %v1993
    %v2131 = vunpack.c.l.b16 %v1994
    %v2132 = vunpack.c.l.b16 %v1995
    %v2133 = vunpack.c.l.b16 %v1996
    %v2134 = vunpack.c.l.b16 %v1997
    %v2135 = vunpack.c.l.b16 %v1998
    %v2136 = vunpack.c.l.b16 %v1999
    %v2137 = vunpack.c.l.b16 %v2000
    %v2138 = vunpack.c.l.b16 %v2001
    %v2139 = vunpack.c.l.b16 %v2002
    %v2140 = vunpack.c.l.b16 %v2003
    %v2141 = vunpack.c.l.b16 %v2004
    %v2142 = vunpack.c.l.b16 %v2005
    %v2143 = vunpack.c.l.b16 %v2006
    %v2144 = vpack.c.b16 %v2129, %v2128
    %v2145 = vpack.c.b16 %v2131, %v2130
    %v2146 = vpack.c.b16 %v2133, %v2132
    %v2147 = vpack.c.b16 %v2135, %v2134
    %v2148 = vpack.c.b16 %v2137, %v2136
    %v2149 = vpack.c.b16 %v2139, %v2138
    %v2150 = vpack.c.b16 %v2141, %v2140
    %v2151 = vpack.c.b16 %v2143, %v2142
    %2160 = vmatprep.subr.bf16.mxu0 0
    %2161 = vmatpush1.bf16.msra.mxu0 %v2151
    %2162 = vmatprep.subr.bf16.mxu0 0
    %2163 = vmatpush1.bf16.msra.mxu0 %v2150
    %2164 = vmatprep.subr.bf16.mxu0 0
    %2165 = vmatpush1.bf16.msra.mxu0 %v2149
    %2166 = vmatprep.subr.bf16.mxu0 0
    %2167 = vmatpush1.bf16.msra.mxu0 %v2148
    %2168 = vmatprep.subr.bf16.mxu0 0
    %2169 = vmatpush1.bf16.msra.mxu0 %v2147
    %2170 = vmatprep.subr.bf16.mxu0 0
    %2171 = vmatpush1.bf16.msra.mxu0 %v2146
    %2172 = vmatprep.subr.bf16.mxu0 0
    %2173 = vmatpush1.bf16.msra.mxu0 %v2145
    %2174 = vmatprep.subr.bf16.mxu0 0
    %2175 = vmatpush1.bf16.msra.mxu0 %v2144
    %2176 = vmatprep.subr.bf16.mxu0 0
    %2177 = vmatpush2.bf16.msra.mxu0 0
    %2178 = vmatprep.subr.bf16.mxu0 0
    %2179 = vmatpush2.bf16.msra.mxu0 0
    %2180 = vmatprep.subr.bf16.mxu0 0
    %2181 = vmatpush2.bf16.msra.mxu0 0
    %2182 = vmatprep.subr.bf16.mxu0 0
    %2183 = vmatpush2.bf16.msra.mxu0 0
    %2184 = vmatprep.subr.bf16.mxu0 0
    %2185 = vmatpush2.bf16.msra.mxu0 0
    %2186 = vmatprep.subr.bf16.mxu0 0
    %2187 = vmatpush2.bf16.msra.mxu0 0
    %2188 = vmatprep.subr.bf16.mxu0 0
    %2189 = vmatpush2.bf16.msra.mxu0 0
    %2190 = vmatprep.subr.bf16.mxu0 0
    %2191 = vmatpush2.bf16.msra.mxu0 0
    %2192 = vmatprep.mubr.bf16.mxu0 0
    %2193 = vmatmul.mubr.bf16.gmra.mxu0 %v1990
    %v2194 = vpop.f32.mrf.mxu0
    %v2195 = vadd.f32 %v2107, %v2194
    %v2196 = vpop.f32.mrf.mxu0
    %v2197 = vpop.f32.mrf.mxu0
    %v2198 = vpop.f32.mrf.mxu0
    %2199 = vdwg.mxu0
    %v2200 = vld [vmem:[#allocation10] sm:$0x1]
    %v2202 = vlaneseq
    %v2203 = vshrl.u32 %v2202, 7
    %v2204 = vsub.s32 0, %v2203
    %v2205 = vrot.slane %v2200, %v2204
    %v2207 = vadd.f32 %v2195, %v2205
    %v2208 = vmax.f32 %v2207, 0.0
    %v2209 = vpack.c.bf16 %v2208, %v2208
    %v2210 = vld [vmem:[#allocation12] sm:$0xff]
    %v2211 = vld [vmem:[#allocation12 + $0x8] sm:$0xf]
    %v2212 = vld [vmem:[#allocation12 + $0xc] sm:$0xff]
    %v2213 = vld [vmem:[#allocation12 + $0x14] sm:$0xf]
    %v2214 = vld [vmem:[#allocation12 + $0x18] sm:$0xff]
    %v2215 = vld [vmem:[#allocation12 + $0x20] sm:$0xf]
    %v2216 = vld [vmem:[#allocation12 + $0x24] sm:$0xff]
    %v2217 = vld [vmem:[#allocation12 + $0x2c] sm:$0xf]
    %v2218 = vld [vmem:[#allocation12 + $0x30] sm:$0xff]
    %v2219 = vld [vmem:[#allocation12 + $0x38] sm:$0xf]
    %v2220 = vld [vmem:[#allocation12 + $0x3c] sm:$0xff]
    %v2221 = vld [vmem:[#allocation12 + $0x44] sm:$0xf]
    %v2222 = vld [vmem:[#allocation12 + $0x48] sm:$0xff]
    %v2223 = vld [vmem:[#allocation12 + $0x50] sm:$0xf]
    %v2224 = vld [vmem:[#allocation12 + $0x54] sm:$0xff]
    %v2225 = vld [vmem:[#allocation12 + $0x5c] sm:$0xf]
    %v2226 = vld [vmem:[#allocation12 + $0x60] sm:$0xff]
    %v2227 = vld [vmem:[#allocation12 + $0x68] sm:$0xf]
    %v2228 = vld [vmem:[#allocation12 + $0x6c] sm:$0xff]
    %v2229 = vld [vmem:[#allocation12 + $0x74] sm:$0xf]
    %v2230 = vld [vmem:[#allocation12 + $0x78] sm:$0xff]
    %v2231 = vld [vmem:[#allocation12 + $0x80] sm:$0xf]
    %v2232 = vld [vmem:[#allocation12 + $0x84] sm:$0xff]
    %v2233 = vld [vmem:[#allocation12 + $0x8c] sm:$0xf]
    %v2234 = vld [vmem:[#allocation12 + $0x90] sm:$0xff]
    %v2235 = vld [vmem:[#allocation12 + $0x98] sm:$0xf]
    %v2236 = vld [vmem:[#allocation12 + $0x9c] sm:$0xff]
    %v2237 = vld [vmem:[#allocation12 + $0xa4] sm:$0xf]
    %v2238 = vld [vmem:[#allocation12 + $0xa8] sm:$0xff]
    %v2239 = vld [vmem:[#allocation12 + $0xb0] sm:$0xf]
    %v2240 = vld [vmem:[#allocation12 + $0xb4] sm:$0xff]
    %v2241 = vld [vmem:[#allocation12 + $0xbc] sm:$0xf]
    %v2242 = vld [vmem:[#allocation13] sm:$0x7]
    %v2244 = vlaneseq
    %v2245 = vshrl.u32 %v2244, 7
    %v2246 = vsub.s32 0, %v2245
    %v2247 = vrot.slane %v2242, %v2246
    %v2248 = vlaneseq
    %v2249 = vshrl.u32 %v2248, 7
    %v2250 = vsub.s32 1, %v2249
    %v2251 = vrot.slane %v2242, %v2250
    %v2252 = vlaneseq
    %v2253 = vshrl.u32 %v2252, 7
    %v2254 = vsub.s32 2, %v2253
    %v2255 = vrot.slane %v2242, %v2254
    %v2291 = vunpack.c.l.b16 %v2210
    %v2292 = vunpack.c.h.b16 %v2210
    %v2293 = vunpack.c.l.b16 %v2211
    %v2294 = vunpack.c.l.b16 %v2212
    %v2295 = vunpack.c.h.b16 %v2212
    %v2296 = vunpack.c.l.b16 %v2213
    %v2297 = vunpack.c.l.b16 %v2214
    %v2298 = vunpack.c.h.b16 %v2214
    %v2299 = vunpack.c.l.b16 %v2215
    %v2300 = vunpack.c.l.b16 %v2216
    %v2301 = vunpack.c.h.b16 %v2216
    %v2302 = vunpack.c.l.b16 %v2217
    %v2303 = vunpack.c.l.b16 %v2218
    %v2304 = vunpack.c.h.b16 %v2218
    %v2305 = vunpack.c.l.b16 %v2219
    %v2306 = vunpack.c.l.b16 %v2220
    %v2307 = vunpack.c.h.b16 %v2220
    %v2308 = vunpack.c.l.b16 %v2221
    %v2309 = vunpack.c.l.b16 %v2222
    %v2310 = vunpack.c.h.b16 %v2222
    %v2311 = vunpack.c.l.b16 %v2223
    %v2312 = vunpack.c.l.b16 %v2224
    %v2313 = vunpack.c.h.b16 %v2224
    %v2314 = vunpack.c.l.b16 %v2225
    %v2315 = vunpack.c.l.b16 %v2226
    %v2316 = vunpack.c.h.b16 %v2226
    %v2317 = vunpack.c.l.b16 %v2227
    %v2318 = vunpack.c.l.b16 %v2228
    %v2319 = vunpack.c.h.b16 %v2228
    %v2320 = vunpack.c.l.b16 %v2229
    %v2321 = vunpack.c.l.b16 %v2230
    %v2322 = vunpack.c.h.b16 %v2230
    %v2323 = vunpack.c.l.b16 %v2231
    %v2324 = vunpack.c.l.b16 %v2232
    %v2325 = vunpack.c.h.b16 %v2232
    %v2326 = vunpack.c.l.b16 %v2233
    %v2327 = vunpack.c.l.b16 %v2234
    %v2328 = vunpack.c.h.b16 %v2234
    %v2329 = vunpack.c.l.b16 %v2235
    %v2330 = vunpack.c.l.b16 %v2236
    %v2331 = vunpack.c.h.b16 %v2236
    %v2332 = vunpack.c.l.b16 %v2237
    %v2333 = vunpack.c.l.b16 %v2238
    %v2334 = vunpack.c.h.b16 %v2238
    %v2335 = vunpack.c.l.b16 %v2239
    %v2336 = vunpack.c.l.b16 %v2240
    %v2337 = vunpack.c.h.b16 %v2240
    %v2338 = vunpack.c.l.b16 %v2241
    %v2339 = vpack.c.b16 %v2294, %v2291
    %v2340 = vpack.c.b16 %v2295, %v2292
    %v2341 = vpack.c.b16 %v2296, %v2293
    %v2342 = vpack.c.b16 %v2300, %v2297
    %v2343 = vpack.c.b16 %v2301, %v2298
    %v2344 = vpack.c.b16 %v2302, %v2299
    %v2345 = vpack.c.b16 %v2306, %v2303
    %v2346 = vpack.c.b16 %v2307, %v2304
    %v2347 = vpack.c.b16 %v2308, %v2305
    %v2348 = vpack.c.b16 %v2312, %v2309
    %v2349 = vpack.c.b16 %v2313, %v2310
    %v2350 = vpack.c.b16 %v2314, %v2311
    %v2351 = vpack.c.b16 %v2318, %v2315
    %v2352 = vpack.c.b16 %v2319, %v2316
    %v2353 = vpack.c.b16 %v2320, %v2317
    %v2354 = vpack.c.b16 %v2324, %v2321
    %v2355 = vpack.c.b16 %v2325, %v2322
    %v2356 = vpack.c.b16 %v2326, %v2323
    %v2357 = vpack.c.b16 %v2330, %v2327
    %v2358 = vpack.c.b16 %v2331, %v2328
    %v2359 = vpack.c.b16 %v2332, %v2329
    %v2360 = vpack.c.b16 %v2336, %v2333
    %v2361 = vpack.c.b16 %v2337, %v2334
    %v2362 = vpack.c.b16 %v2338, %v2335
    %2387 = vmatprep.subr.bf16.mxu0 %v2361
    %2388 = vmatpush1.bf16.msra.mxu0 %v2360
    %2389 = vmatprep.subr.bf16.mxu0 %v2358
    %2390 = vmatpush1.bf16.msra.mxu0 %v2357
    %2391 = vmatprep.subr.bf16.mxu0 %v2355
    %2392 = vmatpush1.bf16.msra.mxu0 %v2354
    %2393 = vmatprep.subr.bf16.mxu0 %v2352
    %2394 = vmatpush1.bf16.msra.mxu0 %v2351
    %2395 = vmatprep.subr.bf16.mxu0 %v2349
    %2396 = vmatpush1.bf16.msra.mxu0 %v2348
    %2397 = vmatprep.subr.bf16.mxu0 %v2346
    %2398 = vmatpush1.bf16.msra.mxu0 %v2345
    %2399 = vmatprep.subr.bf16.mxu0 %v2343
    %2400 = vmatpush1.bf16.msra.mxu0 %v2342
    %2401 = vmatprep.subr.bf16.mxu0 %v2340
    %2402 = vmatpush1.bf16.msra.mxu0 %v2339
    %2403 = vmatprep.subr.bf16.mxu0 0
    %2404 = vmatpush2.bf16.msra.mxu0 0
    %2405 = vmatprep.subr.bf16.mxu0 0
    %2406 = vmatpush2.bf16.msra.mxu0 0
    %2407 = vmatprep.subr.bf16.mxu0 0
    %2408 = vmatpush2.bf16.msra.mxu0 0
    %2409 = vmatprep.subr.bf16.mxu0 0
    %2410 = vmatpush2.bf16.msra.mxu0 0
    %2411 = vmatprep.subr.bf16.mxu0 0
    %2412 = vmatpush2.bf16.msra.mxu0 0
    %2413 = vmatprep.subr.bf16.mxu0 0
    %2414 = vmatpush2.bf16.msra.mxu0 0
    %2415 = vmatprep.subr.bf16.mxu0 0
    %2416 = vmatpush2.bf16.msra.mxu0 0
    %2417 = vmatprep.subr.bf16.mxu0 0
    %2418 = vmatpush2.bf16.msra.mxu0 0
    %2419 = vmatprep.mubr.bf16.mxu0 0
    %2420 = vmatmul.mubr.bf16.gmra.mxu0 %v2209
    %v2421 = vpop.f32.mrf.mxu0
    %v2422 = vadd.f32 %v2247, %v2421
    %v2423 = vpop.f32.mrf.mxu0
    %v2424 = vadd.f32 %v2251, %v2423
    %v2425 = vpop.f32.mrf.mxu0
    %v2426 = vpop.f32.mrf.mxu0
    %2427 = vdwg.mxu0
    %2428 = vmatprep.subr.bf16.mxu0 0
    %2429 = vmatpush1.bf16.msra.mxu0 %v2362
    %2430 = vmatprep.subr.bf16.mxu0 0
    %2431 = vmatpush1.bf16.msra.mxu0 %v2359
    %2432 = vmatprep.subr.bf16.mxu0 0
    %2433 = vmatpush1.bf16.msra.mxu0 %v2356
    %2434 = vmatprep.subr.bf16.mxu0 0
    %2435 = vmatpush1.bf16.msra.mxu0 %v2353
    %2436 = vmatprep.subr.bf16.mxu0 0
    %2437 = vmatpush1.bf16.msra.mxu0 %v2350
    %2438 = vmatprep.subr.bf16.mxu0 0
    %2439 = vmatpush1.bf16.msra.mxu0 %v2347
    %2440 = vmatprep.subr.bf16.mxu0 0
    %2441 = vmatpush1.bf16.msra.mxu0 %v2344
    %2442 = vmatprep.subr.bf16.mxu0 0
    %2443 = vmatpush1.bf16.msra.mxu0 %v2341
    %2444 = vmatprep.subr.bf16.mxu0 0
    %2445 = vmatpush2.bf16.msra.mxu0 0
    %2446 = vmatprep.subr.bf16.mxu0 0
    %2447 = vmatpush2.bf16.msra.mxu0 0
    %2448 = vmatprep.subr.bf16.mxu0 0
    %2449 = vmatpush2.bf16.msra.mxu0 0
    %2450 = vmatprep.subr.bf16.mxu0 0
    %2451 = vmatpush2.bf16.msra.mxu0 0
    %2452 = vmatprep.subr.bf16.mxu0 0
    %2453 = vmatpush2.bf16.msra.mxu0 0
    %2454 = vmatprep.subr.bf16.mxu0 0
    %2455 = vmatpush2.bf16.msra.mxu0 0
    %2456 = vmatprep.subr.bf16.mxu0 0
    %2457 = vmatpush2.bf16.msra.mxu0 0
    %2458 = vmatprep.subr.bf16.mxu0 0
    %2459 = vmatpush2.bf16.msra.mxu0 0
    %2460 = vmatprep.mubr.bf16.mxu0 0
    %2461 = vmatmul.mubr.bf16.gmra.mxu0 %v2209
    %v2462 = vpop.f32.mrf.mxu0
    %v2463 = vadd.f32 %v2255, %v2462
    %v2464 = vpop.f32.mrf.mxu0
    %v2465 = vpop.f32.mrf.mxu0
    %v2466 = vpop.f32.mrf.mxu0
    %2467 = vdwg.mxu0
    %2469 = vrot.lane.b32.xlu0 %v2422, 96
    %v2470 = vpop.permute.xlu0 %2469
    %2472 = vrot.lane.b32.xlu0 %v2422, 64
    %v2473 = vpop.permute.xlu0 %2472
    %2475 = vrot.lane.b32.xlu0 %v2422, 32
    %v2476 = vpop.permute.xlu0 %2475
    %v2478 = vcombine.low %v2422, %v2473
    %v2479 = vcombine.high %v2422, %v2473
    %v2481 = vunpack.c.l.s4 1983009808
    %v2482 = vunpack.c.0.s8 %v2481
    %v2483 = vlaneseq
    %v2484 = vshrl.u32 %v2483, 7
    %v2485 = vsub.s32 %v2482, %v2484
    %v2486 = vrot.slane %v2478, %v2485
    %v2488 = vunpack.c.l.s4 1983009808
    %v2489 = vunpack.c.0.s8 %v2488
    %v2490 = vlaneseq
    %v2491 = vshrl.u32 %v2490, 7
    %v2492 = vsub.s32 %v2489, %v2491
    %v2493 = vrot.slane %v2479, %v2492
    %v2494 = vcombine.low %v2470, %v2476
    %v2495 = vcombine.high %v2470, %v2476
    %v2497 = vunpack.c.l.s4 1983009808
    %v2498 = vunpack.c.0.s8 %v2497
    %v2499 = vlaneseq
    %v2500 = vshrl.u32 %v2499, 7
    %v2501 = vsub.s32 %v2498, %v2500
    %v2502 = vrot.slane %v2494, %v2501
    %v2504 = vunpack.c.l.s4 1983009808
    %v2505 = vunpack.c.0.s8 %v2504
    %v2506 = vlaneseq
    %v2507 = vshrl.u32 %v2506, 7
    %v2508 = vsub.s32 %v2505, %v2507
    %v2509 = vrot.slane %v2495, %v2508
    %v2510 = vcombine.low %v2486, %v2502
    %v2511 = vcombine.high %v2486, %v2502
    %v2513 = vunpack.c.l.s4 1934713408
    %v2514 = vunpack.c.0.s8 %v2513
    %v2515 = vlaneseq
    %v2516 = vshrl.u32 %v2515, 7
    %v2517 = vsub.s32 %v2514, %v2516
    %v2518 = vrot.slane %v2510, %v2517
    %v2520 = vunpack.c.l.s4 1934713408
    %v2521 = vunpack.c.0.s8 %v2520
    %v2522 = vlaneseq
    %v2523 = vshrl.u32 %v2522, 7
    %v2524 = vsub.s32 %v2521, %v2523
    %v2525 = vrot.slane %v2511, %v2524
    %v2526 = vcombine.low %v2493, %v2509
    %v2527 = vcombine.high %v2493, %v2509
    %v2529 = vunpack.c.l.s4 1934713408
    %v2530 = vunpack.c.0.s8 %v2529
    %v2531 = vlaneseq
    %v2532 = vshrl.u32 %v2531, 7
    %v2533 = vsub.s32 %v2530, %v2532
    %v2534 = vrot.slane %v2526, %v2533
    %v2536 = vunpack.c.l.s4 1934713408
    %v2537 = vunpack.c.0.s8 %v2536
    %v2538 = vlaneseq
    %v2539 = vshrl.u32 %v2538, 7
    %v2540 = vsub.s32 %v2537, %v2539
    %v2541 = vrot.slane %v2527, %v2540
    %v2542 = vcombine.high %v2518, 0.0
    %v2543 = vcombine.high %v2525, 0.0
    %v2544 = vcombine.high %v2534, 0.0
    %v2545 = vcombine.high %v2541, 0.0
    %v2546 = vcombine.low %v2518, %v2525
    %v2548 = vunpack.c.l.s4 1983009808
    %v2549 = vunpack.c.0.s8 %v2548
    %v2550 = vlaneseq
    %v2551 = vshrl.u32 %v2550, 7
    %v2552 = vsub.s32 %v2549, %v2551
    %v2553 = vrot.slane %v2546, %v2552
    %v2554 = vcombine.low %v2542, %v2543
    %v2556 = vunpack.c.l.s4 1983009808
    %v2557 = vunpack.c.0.s8 %v2556
    %v2558 = vlaneseq
    %v2559 = vshrl.u32 %v2558, 7
    %v2560 = vsub.s32 %v2557, %v2559
    %v2561 = vrot.slane %v2554, %v2560
    %v2562 = vcombine.low %v2534, %v2541
    %v2564 = vunpack.c.l.s4 1983009808
    %v2565 = vunpack.c.0.s8 %v2564
    %v2566 = vlaneseq
    %v2567 = vshrl.u32 %v2566, 7
    %v2568 = vsub.s32 %v2565, %v2567
    %v2569 = vrot.slane %v2562, %v2568
    %v2570 = vcombine.low %v2544, %v2545
    %v2572 = vunpack.c.l.s4 1983009808
    %v2573 = vunpack.c.0.s8 %v2572
    %v2574 = vlaneseq
    %v2575 = vshrl.u32 %v2574, 7
    %v2576 = vsub.s32 %v2573, %v2575
    %v2577 = vrot.slane %v2570, %v2576
    %v2578 = vcombine.low %v2553, %v2561
    %v2579 = vcombine.high %v2553, %v2561
    %v2581 = vunpack.c.l.s4 1934713408
    %v2582 = vunpack.c.0.s8 %v2581
    %v2583 = vlaneseq
    %v2584 = vshrl.u32 %v2583, 7
    %v2585 = vsub.s32 %v2582, %v2584
    %v2586 = vrot.slane %v2578, %v2585
    %v2588 = vunpack.c.l.s4 1934713408
    %v2589 = vunpack.c.0.s8 %v2588
    %v2590 = vlaneseq
    %v2591 = vshrl.u32 %v2590, 7
    %v2592 = vsub.s32 %v2589, %v2591
    %v2593 = vrot.slane %v2579, %v2592
    %v2594 = vcombine.low %v2569, %v2577
    %v2595 = vcombine.high %v2569, %v2577
    %v2597 = vunpack.c.l.s4 1934713408
    %v2598 = vunpack.c.0.s8 %v2597
    %v2599 = vlaneseq
    %v2600 = vshrl.u32 %v2599, 7
    %v2601 = vsub.s32 %v2598, %v2600
    %v2602 = vrot.slane %v2594, %v2601
    %v2604 = vunpack.c.l.s4 1934713408
    %v2605 = vunpack.c.0.s8 %v2604
    %v2606 = vlaneseq
    %v2607 = vshrl.u32 %v2606, 7
    %v2608 = vsub.s32 %v2605, %v2607
    %v2609 = vrot.slane %v2595, %v2608
    %v2610 = vcombine.low %v2586, %v2602
    %v2611 = vcombine.high %v2586, %v2602
    %v2612 = vcombine.low %v2593, %v2609
    %v2613 = vcombine.high %v2593, %v2609
    %v2614 = vpack.c.bf16 %v2610, %v2610
    %v2615 = vpack.c.bf16 %v2611, %v2611
    %v2616 = vpack.c.bf16 %v2612, %v2612
    %v2617 = vpack.c.bf16 %v2613, %v2613
    %2619 = vrot.lane.b32.xlu0 %v2424, 96
    %v2620 = vpop.permute.xlu0 %2619
    %2622 = vrot.lane.b32.xlu0 %v2424, 64
    %v2623 = vpop.permute.xlu0 %2622
    %2625 = vrot.lane.b32.xlu0 %v2424, 32
    %v2626 = vpop.permute.xlu0 %2625
    %v2628 = vcombine.low %v2424, %v2623
    %v2629 = vcombine.high %v2424, %v2623
    %v2631 = vunpack.c.l.s4 1983009808
    %v2632 = vunpack.c.0.s8 %v2631
    %v2633 = vlaneseq
    %v2634 = vshrl.u32 %v2633, 7
    %v2635 = vsub.s32 %v2632, %v2634
    %v2636 = vrot.slane %v2628, %v2635
    %v2638 = vunpack.c.l.s4 1983009808
    %v2639 = vunpack.c.0.s8 %v2638
    %v2640 = vlaneseq
    %v2641 = vshrl.u32 %v2640, 7
    %v2642 = vsub.s32 %v2639, %v2641
    %v2643 = vrot.slane %v2629, %v2642
    %v2644 = vcombine.low %v2620, %v2626
    %v2645 = vcombine.high %v2620, %v2626
    %v2647 = vunpack.c.l.s4 1983009808
    %v2648 = vunpack.c.0.s8 %v2647
    %v2649 = vlaneseq
    %v2650 = vshrl.u32 %v2649, 7
    %v2651 = vsub.s32 %v2648, %v2650
    %v2652 = vrot.slane %v2644, %v2651
    %v2654 = vunpack.c.l.s4 1983009808
    %v2655 = vunpack.c.0.s8 %v2654
    %v2656 = vlaneseq
    %v2657 = vshrl.u32 %v2656, 7
    %v2658 = vsub.s32 %v2655, %v2657
    %v2659 = vrot.slane %v2645, %v2658
    %v2660 = vcombine.low %v2636, %v2652
    %v2661 = vcombine.high %v2636, %v2652
    %v2663 = vunpack.c.l.s4 1934713408
    %v2664 = vunpack.c.0.s8 %v2663
    %v2665 = vlaneseq
    %v2666 = vshrl.u32 %v2665, 7
    %v2667 = vsub.s32 %v2664, %v2666
    %v2668 = vrot.slane %v2660, %v2667
    %v2670 = vunpack.c.l.s4 1934713408
    %v2671 = vunpack.c.0.s8 %v2670
    %v2672 = vlaneseq
    %v2673 = vshrl.u32 %v2672, 7
    %v2674 = vsub.s32 %v2671, %v2673
    %v2675 = vrot.slane %v2661, %v2674
    %v2676 = vcombine.low %v2643, %v2659
    %v2677 = vcombine.high %v2643, %v2659
    %v2679 = vunpack.c.l.s4 1934713408
    %v2680 = vunpack.c.0.s8 %v2679
    %v2681 = vlaneseq
    %v2682 = vshrl.u32 %v2681, 7
    %v2683 = vsub.s32 %v2680, %v2682
    %v2684 = vrot.slane %v2676, %v2683
    %v2686 = vunpack.c.l.s4 1934713408
    %v2687 = vunpack.c.0.s8 %v2686
    %v2688 = vlaneseq
    %v2689 = vshrl.u32 %v2688, 7
    %v2690 = vsub.s32 %v2687, %v2689
    %v2691 = vrot.slane %v2677, %v2690
    %v2692 = vcombine.high %v2668, 0.0
    %v2693 = vcombine.high %v2675, 0.0
    %v2694 = vcombine.high %v2684, 0.0
    %v2695 = vcombine.high %v2691, 0.0
    %v2696 = vcombine.low %v2668, %v2675
    %v2698 = vunpack.c.l.s4 1983009808
    %v2699 = vunpack.c.0.s8 %v2698
    %v2700 = vlaneseq
    %v2701 = vshrl.u32 %v2700, 7
    %v2702 = vsub.s32 %v2699, %v2701
    %v2703 = vrot.slane %v2696, %v2702
    %v2704 = vcombine.low %v2692, %v2693
    %v2706 = vunpack.c.l.s4 1983009808
    %v2707 = vunpack.c.0.s8 %v2706
    %v2708 = vlaneseq
    %v2709 = vshrl.u32 %v2708, 7
    %v2710 = vsub.s32 %v2707, %v2709
    %v2711 = vrot.slane %v2704, %v2710
    %v2712 = vcombine.low %v2684, %v2691
    %v2714 = vunpack.c.l.s4 1983009808
    %v2715 = vunpack.c.0.s8 %v2714
    %v2716 = vlaneseq
    %v2717 = vshrl.u32 %v2716, 7
    %v2718 = vsub.s32 %v2715, %v2717
    %v2719 = vrot.slane %v2712, %v2718
    %v2720 = vcombine.low %v2694, %v2695
    %v2722 = vunpack.c.l.s4 1983009808
    %v2723 = vunpack.c.0.s8 %v2722
    %v2724 = vlaneseq
    %v2725 = vshrl.u32 %v2724, 7
    %v2726 = vsub.s32 %v2723, %v2725
    %v2727 = vrot.slane %v2720, %v2726
    %v2728 = vcombine.low %v2703, %v2711
    %v2729 = vcombine.high %v2703, %v2711
    %v2731 = vunpack.c.l.s4 1934713408
    %v2732 = vunpack.c.0.s8 %v2731
    %v2733 = vlaneseq
    %v2734 = vshrl.u32 %v2733, 7
    %v2735 = vsub.s32 %v2732, %v2734
    %v2736 = vrot.slane %v2728, %v2735
    %v2738 = vunpack.c.l.s4 1934713408
    %v2739 = vunpack.c.0.s8 %v2738
    %v2740 = vlaneseq
    %v2741 = vshrl.u32 %v2740, 7
    %v2742 = vsub.s32 %v2739, %v2741
    %v2743 = vrot.slane %v2729, %v2742
    %v2744 = vcombine.low %v2719, %v2727
    %v2745 = vcombine.high %v2719, %v2727
    %v2747 = vunpack.c.l.s4 1934713408
    %v2748 = vunpack.c.0.s8 %v2747
    %v2749 = vlaneseq
    %v2750 = vshrl.u32 %v2749, 7
    %v2751 = vsub.s32 %v2748, %v2750
    %v2752 = vrot.slane %v2744, %v2751
    %v2754 = vunpack.c.l.s4 1934713408
    %v2755 = vunpack.c.0.s8 %v2754
    %v2756 = vlaneseq
    %v2757 = vshrl.u32 %v2756, 7
    %v2758 = vsub.s32 %v2755, %v2757
    %v2759 = vrot.slane %v2745, %v2758
    %v2760 = vcombine.low %v2736, %v2752
    %v2761 = vcombine.high %v2736, %v2752
    %v2762 = vcombine.low %v2743, %v2759
    %v2763 = vcombine.high %v2743, %v2759
    %v2764 = vpack.c.bf16 %v2760, %v2760
    %v2765 = vpack.c.bf16 %v2761, %v2761
    %v2766 = vpack.c.bf16 %v2762, %v2762
    %v2767 = vpack.c.bf16 %v2763, %v2763
    %2769 = vrot.lane.b32.xlu0 %v2463, 96
    %v2770 = vpop.permute.xlu0 %2769
    %2772 = vrot.lane.b32.xlu0 %v2463, 64
    %v2773 = vpop.permute.xlu0 %2772
    %2775 = vrot.lane.b32.xlu0 %v2463, 32
    %v2776 = vpop.permute.xlu0 %2775
    %v2778 = vcombine.low %v2463, %v2773
    %v2779 = vcombine.high %v2463, %v2773
    %v2781 = vunpack.c.l.s4 1983009808
    %v2782 = vunpack.c.0.s8 %v2781
    %v2783 = vlaneseq
    %v2784 = vshrl.u32 %v2783, 7
    %v2785 = vsub.s32 %v2782, %v2784
    %v2786 = vrot.slane %v2778, %v2785
    %v2788 = vunpack.c.l.s4 1983009808
    %v2789 = vunpack.c.0.s8 %v2788
    %v2790 = vlaneseq
    %v2791 = vshrl.u32 %v2790, 7
    %v2792 = vsub.s32 %v2789, %v2791
    %v2793 = vrot.slane %v2779, %v2792
    %v2794 = vcombine.low %v2770, %v2776
    %v2795 = vcombine.high %v2770, %v2776
    %v2797 = vunpack.c.l.s4 1983009808
    %v2798 = vunpack.c.0.s8 %v2797
    %v2799 = vlaneseq
    %v2800 = vshrl.u32 %v2799, 7
    %v2801 = vsub.s32 %v2798, %v2800
    %v2802 = vrot.slane %v2794, %v2801
    %v2804 = vunpack.c.l.s4 1983009808
    %v2805 = vunpack.c.0.s8 %v2804
    %v2806 = vlaneseq
    %v2807 = vshrl.u32 %v2806, 7
    %v2808 = vsub.s32 %v2805, %v2807
    %v2809 = vrot.slane %v2795, %v2808
    %v2810 = vcombine.low %v2786, %v2802
    %v2811 = vcombine.high %v2786, %v2802
    %v2813 = vunpack.c.l.s4 1934713408
    %v2814 = vunpack.c.0.s8 %v2813
    %v2815 = vlaneseq
    %v2816 = vshrl.u32 %v2815, 7
    %v2817 = vsub.s32 %v2814, %v2816
    %v2818 = vrot.slane %v2810, %v2817
    %v2820 = vunpack.c.l.s4 1934713408
    %v2821 = vunpack.c.0.s8 %v2820
    %v2822 = vlaneseq
    %v2823 = vshrl.u32 %v2822, 7
    %v2824 = vsub.s32 %v2821, %v2823
    %v2825 = vrot.slane %v2811, %v2824
    %v2826 = vcombine.low %v2793, %v2809
    %v2827 = vcombine.high %v2793, %v2809
    %v2829 = vunpack.c.l.s4 1934713408
    %v2830 = vunpack.c.0.s8 %v2829
    %v2831 = vlaneseq
    %v2832 = vshrl.u32 %v2831, 7
    %v2833 = vsub.s32 %v2830, %v2832
    %v2834 = vrot.slane %v2826, %v2833
    %v2836 = vunpack.c.l.s4 1934713408
    %v2837 = vunpack.c.0.s8 %v2836
    %v2838 = vlaneseq
    %v2839 = vshrl.u32 %v2838, 7
    %v2840 = vsub.s32 %v2837, %v2839
    %v2841 = vrot.slane %v2827, %v2840
    %v2842 = vcombine.high %v2818, 0.0
    %v2843 = vcombine.high %v2825, 0.0
    %v2844 = vcombine.high %v2834, 0.0
    %v2845 = vcombine.high %v2841, 0.0
    %v2846 = vcombine.low %v2818, %v2825
    %v2848 = vunpack.c.l.s4 1983009808
    %v2849 = vunpack.c.0.s8 %v2848
    %v2850 = vlaneseq
    %v2851 = vshrl.u32 %v2850, 7
    %v2852 = vsub.s32 %v2849, %v2851
    %v2853 = vrot.slane %v2846, %v2852
    %v2854 = vcombine.low %v2842, %v2843
    %v2856 = vunpack.c.l.s4 1983009808
    %v2857 = vunpack.c.0.s8 %v2856
    %v2858 = vlaneseq
    %v2859 = vshrl.u32 %v2858, 7
    %v2860 = vsub.s32 %v2857, %v2859
    %v2861 = vrot.slane %v2854, %v2860
    %v2862 = vcombine.low %v2834, %v2841
    %v2864 = vunpack.c.l.s4 1983009808
    %v2865 = vunpack.c.0.s8 %v2864
    %v2866 = vlaneseq
    %v2867 = vshrl.u32 %v2866, 7
    %v2868 = vsub.s32 %v2865, %v2867
    %v2869 = vrot.slane %v2862, %v2868
    %v2870 = vcombine.low %v2844, %v2845
    %v2872 = vunpack.c.l.s4 1983009808
    %v2873 = vunpack.c.0.s8 %v2872
    %v2874 = vlaneseq
    %v2875 = vshrl.u32 %v2874, 7
    %v2876 = vsub.s32 %v2873, %v2875
    %v2877 = vrot.slane %v2870, %v2876
    %v2878 = vcombine.low %v2853, %v2861
    %v2879 = vcombine.high %v2853, %v2861
    %v2881 = vunpack.c.l.s4 1934713408
    %v2882 = vunpack.c.0.s8 %v2881
    %v2883 = vlaneseq
    %v2884 = vshrl.u32 %v2883, 7
    %v2885 = vsub.s32 %v2882, %v2884
    %v2886 = vrot.slane %v2878, %v2885
    %v2888 = vunpack.c.l.s4 1934713408
    %v2889 = vunpack.c.0.s8 %v2888
    %v2890 = vlaneseq
    %v2891 = vshrl.u32 %v2890, 7
    %v2892 = vsub.s32 %v2889, %v2891
    %v2893 = vrot.slane %v2879, %v2892
    %v2894 = vcombine.low %v2869, %v2877
    %v2895 = vcombine.high %v2869, %v2877
    %v2897 = vunpack.c.l.s4 1934713408
    %v2898 = vunpack.c.0.s8 %v2897
    %v2899 = vlaneseq
    %v2900 = vshrl.u32 %v2899, 7
    %v2901 = vsub.s32 %v2898, %v2900
    %v2902 = vrot.slane %v2894, %v2901
    %v2904 = vunpack.c.l.s4 1934713408
    %v2905 = vunpack.c.0.s8 %v2904
    %v2906 = vlaneseq
    %v2907 = vshrl.u32 %v2906, 7
    %v2908 = vsub.s32 %v2905, %v2907
    %v2909 = vrot.slane %v2895, %v2908
    %v2910 = vcombine.low %v2886, %v2902
    %v2911 = vcombine.high %v2886, %v2902
    %v2912 = vcombine.low %v2893, %v2909
    %v2913 = vcombine.high %v2893, %v2909
    %v2914 = vpack.c.bf16 %v2910, %v2910
    %v2915 = vpack.c.bf16 %v2911, %v2911
    %v2916 = vpack.c.bf16 %v2912, %v2912
    %v2917 = vpack.c.bf16 %v2913, %v2913
    %vm2918 = vcmask 261120
    %v2920 = vsel %vm2918, %v2614, 0
    %v2923 = vsel %vm2918, %v2764, 0
    %2925 = vmatprep.subr.bf16.mxu0 0
    %2926 = vmatpush1.bf16.xpose.msra.mxu0 0
    %2927 = vmatprep.subr.bf16.mxu0 0
    %2928 = vmatpush1.bf16.xpose.msra.mxu0 0
    %2929 = vmatprep.subr.bf16.mxu0 0
    %2930 = vmatpush1.bf16.xpose.msra.mxu0 0
    %2931 = vmatprep.subr.bf16.mxu0 0
    %2932 = vmatpush1.bf16.xpose.msra.mxu0 0
    %2933 = vmatprep.subr.bf16.mxu0 0
    %2934 = vmatpush1.bf16.xpose.msra.mxu0 0
    %2935 = vmatprep.subr.bf16.mxu0 0
    %2936 = vmatpush1.bf16.xpose.msra.mxu0 0
    %2937 = vmatprep.subr.bf16.mxu0 0
    %2938 = vmatpush1.bf16.xpose.msra.mxu0 0
    %2939 = vmatprep.subr.bf16.mxu0 0
    %2940 = vmatpush1.bf16.xpose.msra.mxu0 %v2923
    %2941 = vmatprep.subr.bf16.mxu0 0
    %2942 = vmatpush2.bf16.xpose.msra.mxu0 0
    %2943 = vmatprep.subr.bf16.mxu0 0
    %2944 = vmatpush2.bf16.xpose.msra.mxu0 0
    %2945 = vmatprep.subr.bf16.mxu0 0
    %2946 = vmatpush2.bf16.xpose.msra.mxu0 0
    %2947 = vmatprep.subr.bf16.mxu0 0
    %2948 = vmatpush2.bf16.xpose.msra.mxu0 0
    %2949 = vmatprep.subr.bf16.mxu0 0
    %2950 = vmatpush2.bf16.xpose.msra.mxu0 0
    %2951 = vmatprep.subr.bf16.mxu0 0
    %2952 = vmatpush2.bf16.xpose.msra.mxu0 0
    %2953 = vmatprep.subr.bf16.mxu0 0
    %2954 = vmatpush2.bf16.xpose.msra.mxu0 0
    %2955 = vmatprep.subr.bf16.mxu0 0
    %2956 = vmatpush2.bf16.xpose.msra.mxu0 0
    %2957 = vmatprep.mubr.bf16.mxu0 0
    %2958 = vmatmul.mubr.bf16.gmra.mxu0 %v2920
    %v2959 = vpop.f32.mrf.mxu0
    %v2960 = vadd.f32 0.0, %v2959
    %v2961 = vpop.f32.mrf.mxu0
    %v2962 = vpop.f32.mrf.mxu0
    %v2963 = vpop.f32.mrf.mxu0
    %2964 = vdwg.mxu0
    %v2966 = vsel %vm2918, %v2615, 0
    %v2969 = vsel %vm2918, %v2765, 0
    %2971 = vmatprep.subr.bf16.mxu0 0
    %2972 = vmatpush1.bf16.xpose.msra.mxu0 0
    %2973 = vmatprep.subr.bf16.mxu0 0
    %2974 = vmatpush1.bf16.xpose.msra.mxu0 0
    %2975 = vmatprep.subr.bf16.mxu0 0
    %2976 = vmatpush1.bf16.xpose.msra.mxu0 0
    %2977 = vmatprep.subr.bf16.mxu0 0
    %2978 = vmatpush1.bf16.xpose.msra.mxu0 0
    %2979 = vmatprep.subr.bf16.mxu0 0
    %2980 = vmatpush1.bf16.xpose.msra.mxu0 0
    %2981 = vmatprep.subr.bf16.mxu0 0
    %2982 = vmatpush1.bf16.xpose.msra.mxu0 0
    %2983 = vmatprep.subr.bf16.mxu0 0
    %2984 = vmatpush1.bf16.xpose.msra.mxu0 0
    %2985 = vmatprep.subr.bf16.mxu0 0
    %2986 = vmatpush1.bf16.xpose.msra.mxu0 %v2969
    %2987 = vmatprep.subr.bf16.mxu0 0
    %2988 = vmatpush2.bf16.xpose.msra.mxu0 0
    %2989 = vmatprep.subr.bf16.mxu0 0
    %2990 = vmatpush2.bf16.xpose.msra.mxu0 0
    %2991 = vmatprep.subr.bf16.mxu0 0
    %2992 = vmatpush2.bf16.xpose.msra.mxu0 0
    %2993 = vmatprep.subr.bf16.mxu0 0
    %2994 = vmatpush2.bf16.xpose.msra.mxu0 0
    %2995 = vmatprep.subr.bf16.mxu0 0
    %2996 = vmatpush2.bf16.xpose.msra.mxu0 0
    %2997 = vmatprep.subr.bf16.mxu0 0
    %2998 = vmatpush2.bf16.xpose.msra.mxu0 0
    %2999 = vmatprep.subr.bf16.mxu0 0
    %3000 = vmatpush2.bf16.xpose.msra.mxu0 0
    %3001 = vmatprep.subr.bf16.mxu0 0
    %3002 = vmatpush2.bf16.xpose.msra.mxu0 0
    %3003 = vmatprep.mubr.bf16.mxu0 0
    %3004 = vmatmul.mubr.bf16.gmra.mxu0 %v2966
    %v3005 = vpop.f32.mrf.mxu0
    %v3006 = vadd.f32 0.0, %v3005
    %v3007 = vpop.f32.mrf.mxu0
    %v3008 = vpop.f32.mrf.mxu0
    %v3009 = vpop.f32.mrf.mxu0
    %3010 = vdwg.mxu0
    %v3012 = vsel %vm2918, %v2616, 0
    %v3015 = vsel %vm2918, %v2766, 0
    %3017 = vmatprep.subr.bf16.mxu0 0
    %3018 = vmatpush1.bf16.xpose.msra.mxu0 0
    %3019 = vmatprep.subr.bf16.mxu0 0
    %3020 = vmatpush1.bf16.xpose.msra.mxu0 0
    %3021 = vmatprep.subr.bf16.mxu0 0
    %3022 = vmatpush1.bf16.xpose.msra.mxu0 0
    %3023 = vmatprep.subr.bf16.mxu0 0
    %3024 = vmatpush1.bf16.xpose.msra.mxu0 0
    %3025 = vmatprep.subr.bf16.mxu0 0
    %3026 = vmatpush1.bf16.xpose.msra.mxu0 0
    %3027 = vmatprep.subr.bf16.mxu0 0
    %3028 = vmatpush1.bf16.xpose.msra.mxu0 0
    %3029 = vmatprep.subr.bf16.mxu0 0
    %3030 = vmatpush1.bf16.xpose.msra.mxu0 0
    %3031 = vmatprep.subr.bf16.mxu0 0
    %3032 = vmatpush1.bf16.xpose.msra.mxu0 %v3015
    %3033 = vmatprep.subr.bf16.mxu0 0
    %3034 = vmatpush2.bf16.xpose.msra.mxu0 0
    %3035 = vmatprep.subr.bf16.mxu0 0
    %3036 = vmatpush2.bf16.xpose.msra.mxu0 0
    %3037 = vmatprep.subr.bf16.mxu0 0
    %3038 = vmatpush2.bf16.xpose.msra.mxu0 0
    %3039 = vmatprep.subr.bf16.mxu0 0
    %3040 = vmatpush2.bf16.xpose.msra.mxu0 0
    %3041 = vmatprep.subr.bf16.mxu0 0
    %3042 = vmatpush2.bf16.xpose.msra.mxu0 0
    %3043 = vmatprep.subr.bf16.mxu0 0
    %3044 = vmatpush2.bf16.xpose.msra.mxu0 0
    %3045 = vmatprep.subr.bf16.mxu0 0
    %3046 = vmatpush2.bf16.xpose.msra.mxu0 0
    %3047 = vmatprep.subr.bf16.mxu0 0
    %3048 = vmatpush2.bf16.xpose.msra.mxu0 0
    %3049 = vmatprep.mubr.bf16.mxu0 0
    %3050 = vmatmul.mubr.bf16.gmra.mxu0 %v3012
    %v3051 = vpop.f32.mrf.mxu0
    %v3052 = vadd.f32 0.0, %v3051
    %v3053 = vpop.f32.mrf.mxu0
    %v3054 = vpop.f32.mrf.mxu0
    %v3055 = vpop.f32.mrf.mxu0
    %3056 = vdwg.mxu0
    %v3058 = vsel %vm2918, %v2617, 0
    %v3061 = vsel %vm2918, %v2767, 0
    %3063 = vmatprep.subr.bf16.mxu0 0
    %3064 = vmatpush1.bf16.xpose.msra.mxu0 0
    %3065 = vmatprep.subr.bf16.mxu0 0
    %3066 = vmatpush1.bf16.xpose.msra.mxu0 0
    %3067 = vmatprep.subr.bf16.mxu0 0
    %3068 = vmatpush1.bf16.xpose.msra.mxu0 0
    %3069 = vmatprep.subr.bf16.mxu0 0
    %3070 = vmatpush1.bf16.xpose.msra.mxu0 0
    %3071 = vmatprep.subr.bf16.mxu0 0
    %3072 = vmatpush1.bf16.xpose.msra.mxu0 0
    %3073 = vmatprep.subr.bf16.mxu0 0
    %3074 = vmatpush1.bf16.xpose.msra.mxu0 0
    %3075 = vmatprep.subr.bf16.mxu0 0
    %3076 = vmatpush1.bf16.xpose.msra.mxu0 0
    %3077 = vmatprep.subr.bf16.mxu0 0
    %3078 = vmatpush1.bf16.xpose.msra.mxu0 %v3061
    %3079 = vmatprep.subr.bf16.mxu0 0
    %3080 = vmatpush2.bf16.xpose.msra.mxu0 0
    %3081 = vmatprep.subr.bf16.mxu0 0
    %3082 = vmatpush2.bf16.xpose.msra.mxu0 0
    %3083 = vmatprep.subr.bf16.mxu0 0
    %3084 = vmatpush2.bf16.xpose.msra.mxu0 0
    %3085 = vmatprep.subr.bf16.mxu0 0
    %3086 = vmatpush2.bf16.xpose.msra.mxu0 0
    %3087 = vmatprep.subr.bf16.mxu0 0
    %3088 = vmatpush2.bf16.xpose.msra.mxu0 0
    %3089 = vmatprep.subr.bf16.mxu0 0
    %3090 = vmatpush2.bf16.xpose.msra.mxu0 0
    %3091 = vmatprep.subr.bf16.mxu0 0
    %3092 = vmatpush2.bf16.xpose.msra.mxu0 0
    %3093 = vmatprep.subr.bf16.mxu0 0
    %3094 = vmatpush2.bf16.xpose.msra.mxu0 0
    %3095 = vmatprep.mubr.bf16.mxu0 0
    %3096 = vmatmul.mubr.bf16.gmra.mxu0 %v3058
    %v3097 = vpop.f32.mrf.mxu0
    %v3098 = vadd.f32 0.0, %v3097
    %v3099 = vpop.f32.mrf.mxu0
    %v3100 = vpop.f32.mrf.mxu0
    %v3101 = vpop.f32.mrf.mxu0
    %3102 = vdwg.mxu0
    %vm3103 = vcmask 64512
    %v3104 = vsel %vm3103, %v2960, -inf
    %3105 = vmax.xlane.f32.xlu0 %v3104
    %v3106 = vpop.xlane.xlu0 %3105
    %v3107 = vsel %vm3103, %v3006, -inf
    %3108 = vmax.xlane.f32.xlu0 %v3107
    %v3109 = vpop.xlane.xlu0 %3108
    %v3110 = vsel %vm3103, %v3052, -inf
    %3111 = vmax.xlane.f32.xlu0 %v3110
    %v3112 = vpop.xlane.xlu0 %3111
    %v3113 = vsel %vm3103, %v3098, -inf
    %3114 = vmax.xlane.f32.xlu0 %v3113
    %v3115 = vpop.xlane.xlu0 %3114
    %v3116 = vsub.f32 %v2960, %v3106
    %v3117 = vsub.f32 %v3006, %v3109
    %v3118 = vsub.f32 %v3052, %v3112
    %v3119 = vsub.f32 %v3098, %v3115
    %v3120 = vmul.f32 %v3116, 1.442695
    %v3121 = vpow.pop %v3120
    %v3122 = vmul.f32 %v3117, 1.442695
    %v3123 = vpow.pop %v3122
    %v3124 = vmul.f32 %v3118, 1.442695
    %v3125 = vpow.pop %v3124
    %v3126 = vmul.f32 %v3119, 1.442695
    %v3127 = vpow.pop %v3126
    %v3128 = vsel %vm3103, %v3121, 0.0
    %3129 = vadd.xlane.f32.xlu0 %v3128
    %v3130 = vpop.xlane.xlu0 %3129
    %v3131 = vsel %vm3103, %v3123, 0.0
    %3132 = vadd.xlane.f32.xlu0 %v3131
    %v3133 = vpop.xlane.xlu0 %3132
    %v3134 = vsel %vm3103, %v3125, 0.0
    %3135 = vadd.xlane.f32.xlu0 %v3134
    %v3136 = vpop.xlane.xlu0 %3135
    %v3137 = vsel %vm3103, %v3127, 0.0
    %3138 = vadd.xlane.f32.xlu0 %v3137
    %v3139 = vpop.xlane.xlu0 %3138
    %v3140 = vrcp.pop %v3130
    %v3141 = vrcp.pop %v3133
    %v3142 = vrcp.pop %v3136
    %v3143 = vrcp.pop %v3139
    %v3144 = vmul.f32 %v3121, %v3140
    %v3145 = vmul.f32 %v3123, %v3141
    %v3146 = vmul.f32 %v3125, %v3142
    %v3147 = vmul.f32 %v3127, %v3143
    %v3148 = vpack.c.bf16 %v3144, %v3144
    %v3149 = vpack.c.bf16 %v3145, %v3145
    %v3150 = vpack.c.bf16 %v3146, %v3146
    %v3151 = vpack.c.bf16 %v3147, %v3147
    %v3153 = vsel %vm3103, %v3148, 0
    %vm3155 = vcmask 1043456
    %v3157 = vsel %vm3155, %v2914, 0
    %3159 = vmatprep.subr.bf16.mxu0 0
    %3160 = vmatpush1.bf16.msra.mxu0 0
    %3161 = vmatprep.subr.bf16.mxu0 0
    %3162 = vmatpush1.bf16.msra.mxu0 0
    %3163 = vmatprep.subr.bf16.mxu0 0
    %3164 = vmatpush1.bf16.msra.mxu0 0
    %3165 = vmatprep.subr.bf16.mxu0 0
    %3166 = vmatpush1.bf16.msra.mxu0 0
    %3167 = vmatprep.subr.bf16.mxu0 0
    %3168 = vmatpush1.bf16.msra.mxu0 0
    %3169 = vmatprep.subr.bf16.mxu0 0
    %3170 = vmatpush1.bf16.msra.mxu0 0
    %3171 = vmatprep.subr.bf16.mxu0 0
    %3172 = vmatpush1.bf16.msra.mxu0 0
    %3173 = vmatprep.subr.bf16.mxu0 0
    %3174 = vmatpush1.bf16.msra.mxu0 %v3157
    %3175 = vmatprep.subr.bf16.mxu0 0
    %3176 = vmatpush2.bf16.msra.mxu0 0
    %3177 = vmatprep.subr.bf16.mxu0 0
    %3178 = vmatpush2.bf16.msra.mxu0 0
    %3179 = vmatprep.subr.bf16.mxu0 0
    %3180 = vmatpush2.bf16.msra.mxu0 0
    %3181 = vmatprep.subr.bf16.mxu0 0
    %3182 = vmatpush2.bf16.msra.mxu0 0
    %3183 = vmatprep.subr.bf16.mxu0 0
    %3184 = vmatpush2.bf16.msra.mxu0 0
    %3185 = vmatprep.subr.bf16.mxu0 0
    %3186 = vmatpush2.bf16.msra.mxu0 0
    %3187 = vmatprep.subr.bf16.mxu0 0
    %3188 = vmatpush2.bf16.msra.mxu0 0
    %3189 = vmatprep.subr.bf16.mxu0 0
    %3190 = vmatpush2.bf16.msra.mxu0 0
    %3191 = vmatprep.mubr.bf16.mxu0 0
    %3192 = vmatmul.mubr.bf16.gmra.mxu0 %v3153
    %v3193 = vpop.f32.mrf.mxu0
    %v3194 = vadd.f32 0.0, %v3193
    %v3195 = vpop.f32.mrf.mxu0
    %v3196 = vpop.f32.mrf.mxu0
    %v3197 = vpop.f32.mrf.mxu0
    %3198 = vdwg.mxu0
    %v3200 = vsel %vm3103, %v3149, 0
    %v3203 = vsel %vm3155, %v2915, 0
    %3205 = vmatprep.subr.bf16.mxu0 0
    %3206 = vmatpush1.bf16.msra.mxu0 0
    %3207 = vmatprep.subr.bf16.mxu0 0
    %3208 = vmatpush1.bf16.msra.mxu0 0
    %3209 = vmatprep.subr.bf16.mxu0 0
    %3210 = vmatpush1.bf16.msra.mxu0 0
    %3211 = vmatprep.subr.bf16.mxu0 0
    %3212 = vmatpush1.bf16.msra.mxu0 0
    %3213 = vmatprep.subr.bf16.mxu0 0
    %3214 = vmatpush1.bf16.msra.mxu0 0
    %3215 = vmatprep.subr.bf16.mxu0 0
    %3216 = vmatpush1.bf16.msra.mxu0 0
    %3217 = vmatprep.subr.bf16.mxu0 0
    %3218 = vmatpush1.bf16.msra.mxu0 0
    %3219 = vmatprep.subr.bf16.mxu0 0
    %3220 = vmatpush1.bf16.msra.mxu0 %v3203
    %3221 = vmatprep.subr.bf16.mxu0 0
    %3222 = vmatpush2.bf16.msra.mxu0 0
    %3223 = vmatprep.subr.bf16.mxu0 0
    %3224 = vmatpush2.bf16.msra.mxu0 0
    %3225 = vmatprep.subr.bf16.mxu0 0
    %3226 = vmatpush2.bf16.msra.mxu0 0
    %3227 = vmatprep.subr.bf16.mxu0 0
    %3228 = vmatpush2.bf16.msra.mxu0 0
    %3229 = vmatprep.subr.bf16.mxu0 0
    %3230 = vmatpush2.bf16.msra.mxu0 0
    %3231 = vmatprep.subr.bf16.mxu0 0
    %3232 = vmatpush2.bf16.msra.mxu0 0
    %3233 = vmatprep.subr.bf16.mxu0 0
    %3234 = vmatpush2.bf16.msra.mxu0 0
    %3235 = vmatprep.subr.bf16.mxu0 0
    %3236 = vmatpush2.bf16.msra.mxu0 0
    %3237 = vmatprep.mubr.bf16.mxu0 0
    %3238 = vmatmul.mubr.bf16.gmra.mxu0 %v3200
    %v3239 = vpop.f32.mrf.mxu0
    %v3240 = vadd.f32 0.0, %v3239
    %v3241 = vpop.f32.mrf.mxu0
    %v3242 = vpop.f32.mrf.mxu0
    %v3243 = vpop.f32.mrf.mxu0
    %3244 = vdwg.mxu0
    %v3246 = vsel %vm3103, %v3150, 0
    %v3249 = vsel %vm3155, %v2916, 0
    %3251 = vmatprep.subr.bf16.mxu0 0
    %3252 = vmatpush1.bf16.msra.mxu0 0
    %3253 = vmatprep.subr.bf16.mxu0 0
    %3254 = vmatpush1.bf16.msra.mxu0 0
    %3255 = vmatprep.subr.bf16.mxu0 0
    %3256 = vmatpush1.bf16.msra.mxu0 0
    %3257 = vmatprep.subr.bf16.mxu0 0
    %3258 = vmatpush1.bf16.msra.mxu0 0
    %3259 = vmatprep.subr.bf16.mxu0 0
    %3260 = vmatpush1.bf16.msra.mxu0 0
    %3261 = vmatprep.subr.bf16.mxu0 0
    %3262 = vmatpush1.bf16.msra.mxu0 0
    %3263 = vmatprep.subr.bf16.mxu0 0
    %3264 = vmatpush1.bf16.msra.mxu0 0
    %3265 = vmatprep.subr.bf16.mxu0 0
    %3266 = vmatpush1.bf16.msra.mxu0 %v3249
    %3267 = vmatprep.subr.bf16.mxu0 0
    %3268 = vmatpush2.bf16.msra.mxu0 0
    %3269 = vmatprep.subr.bf16.mxu0 0
    %3270 = vmatpush2.bf16.msra.mxu0 0
    %3271 = vmatprep.subr.bf16.mxu0 0
    %3272 = vmatpush2.bf16.msra.mxu0 0
    %3273 = vmatprep.subr.bf16.mxu0 0
    %3274 = vmatpush2.bf16.msra.mxu0 0
    %3275 = vmatprep.subr.bf16.mxu0 0
    %3276 = vmatpush2.bf16.msra.mxu0 0
    %3277 = vmatprep.subr.bf16.mxu0 0
    %3278 = vmatpush2.bf16.msra.mxu0 0
    %3279 = vmatprep.subr.bf16.mxu0 0
    %3280 = vmatpush2.bf16.msra.mxu0 0
    %3281 = vmatprep.subr.bf16.mxu0 0
    %3282 = vmatpush2.bf16.msra.mxu0 0
    %3283 = vmatprep.mubr.bf16.mxu0 0
    %3284 = vmatmul.mubr.bf16.gmra.mxu0 %v3246
    %v3285 = vpop.f32.mrf.mxu0
    %v3286 = vadd.f32 0.0, %v3285
    %v3287 = vpop.f32.mrf.mxu0
    %v3288 = vpop.f32.mrf.mxu0
    %v3289 = vpop.f32.mrf.mxu0
    %3290 = vdwg.mxu0
    %v3292 = vsel %vm3103, %v3151, 0
    %v3295 = vsel %vm3155, %v2917, 0
    %3297 = vmatprep.subr.bf16.mxu0 0
    %3298 = vmatpush1.bf16.msra.mxu0 0
    %3299 = vmatprep.subr.bf16.mxu0 0
    %3300 = vmatpush1.bf16.msra.mxu0 0
    %3301 = vmatprep.subr.bf16.mxu0 0
    %3302 = vmatpush1.bf16.msra.mxu0 0
    %3303 = vmatprep.subr.bf16.mxu0 0
    %3304 = vmatpush1.bf16.msra.mxu0 0
    %3305 = vmatprep.subr.bf16.mxu0 0
    %3306 = vmatpush1.bf16.msra.mxu0 0
    %3307 = vmatprep.subr.bf16.mxu0 0
    %3308 = vmatpush1.bf16.msra.mxu0 0
    %3309 = vmatprep.subr.bf16.mxu0 0
    %3310 = vmatpush1.bf16.msra.mxu0 0
    %3311 = vmatprep.subr.bf16.mxu0 0
    %3312 = vmatpush1.bf16.msra.mxu0 %v3295
    %3313 = vmatprep.subr.bf16.mxu0 0
    %3314 = vmatpush2.bf16.msra.mxu0 0
    %3315 = vmatprep.subr.bf16.mxu0 0
    %3316 = vmatpush2.bf16.msra.mxu0 0
    %3317 = vmatprep.subr.bf16.mxu0 0
    %3318 = vmatpush2.bf16.msra.mxu0 0
    %3319 = vmatprep.subr.bf16.mxu0 0
    %3320 = vmatpush2.bf16.msra.mxu0 0
    %3321 = vmatprep.subr.bf16.mxu0 0
    %3322 = vmatpush2.bf16.msra.mxu0 0
    %3323 = vmatprep.subr.bf16.mxu0 0
    %3324 = vmatpush2.bf16.msra.mxu0 0
    %3325 = vmatprep.subr.bf16.mxu0 0
    %3326 = vmatpush2.bf16.msra.mxu0 0
    %3327 = vmatprep.subr.bf16.mxu0 0
    %3328 = vmatpush2.bf16.msra.mxu0 0
    %3329 = vmatprep.mubr.bf16.mxu0 0
    %3330 = vmatmul.mubr.bf16.gmra.mxu0 %v3292
    %v3331 = vpop.f32.mrf.mxu0
    %v3332 = vadd.f32 0.0, %v3331
    %v3333 = vpop.f32.mrf.mxu0
    %v3334 = vpop.f32.mrf.mxu0
    %v3335 = vpop.f32.mrf.mxu0
    %3336 = vdwg.mxu0
    %v3337 = vcombine.low %v3194, %v3286
    %v3338 = vcombine.high %v3194, %v3286
    %v3340 = vunpack.c.l.s4 1983009808
    %v3341 = vunpack.c.0.s8 %v3340
    %v3342 = vlaneseq
    %v3343 = vshrl.u32 %v3342, 7
    %v3344 = vsub.s32 %v3341, %v3343
    %v3345 = vrot.slane %v3337, %v3344
    %v3347 = vunpack.c.l.s4 1983009808
    %v3348 = vunpack.c.0.s8 %v3347
    %v3349 = vlaneseq
    %v3350 = vshrl.u32 %v3349, 7
    %v3351 = vsub.s32 %v3348, %v3350
    %v3352 = vrot.slane %v3338, %v3351
    %v3353 = vcombine.low %v3240, %v3332
    %v3354 = vcombine.high %v3240, %v3332
    %v3356 = vunpack.c.l.s4 1983009808
    %v3357 = vunpack.c.0.s8 %v3356
    %v3358 = vlaneseq
    %v3359 = vshrl.u32 %v3358, 7
    %v3360 = vsub.s32 %v3357, %v3359
    %v3361 = vrot.slane %v3353, %v3360
    %v3363 = vunpack.c.l.s4 1983009808
    %v3364 = vunpack.c.0.s8 %v3363
    %v3365 = vlaneseq
    %v3366 = vshrl.u32 %v3365, 7
    %v3367 = vsub.s32 %v3364, %v3366
    %v3368 = vrot.slane %v3354, %v3367
    %v3369 = vcombine.low %v3345, %v3361
    %v3370 = vcombine.high %v3345, %v3361
    %v3372 = vunpack.c.l.s4 1934713408
    %v3373 = vunpack.c.0.s8 %v3372
    %v3374 = vlaneseq
    %v3375 = vshrl.u32 %v3374, 7
    %v3376 = vsub.s32 %v3373, %v3375
    %v3377 = vrot.slane %v3369, %v3376
    %v3379 = vunpack.c.l.s4 1934713408
    %v3380 = vunpack.c.0.s8 %v3379
    %v3381 = vlaneseq
    %v3382 = vshrl.u32 %v3381, 7
    %v3383 = vsub.s32 %v3380, %v3382
    %v3384 = vrot.slane %v3370, %v3383
    %v3385 = vcombine.low %v3352, %v3368
    %v3386 = vcombine.high %v3352, %v3368
    %v3388 = vunpack.c.l.s4 1934713408
    %v3389 = vunpack.c.0.s8 %v3388
    %v3390 = vlaneseq
    %v3391 = vshrl.u32 %v3390, 7
    %v3392 = vsub.s32 %v3389, %v3391
    %v3393 = vrot.slane %v3385, %v3392
    %v3395 = vunpack.c.l.s4 1934713408
    %v3396 = vunpack.c.0.s8 %v3395
    %v3397 = vlaneseq
    %v3398 = vshrl.u32 %v3397, 7
    %v3399 = vsub.s32 %v3396, %v3398
    %v3400 = vrot.slane %v3386, %v3399
    %v3401 = vcombine.high %v3377, 0.0
    %v3402 = vcombine.high %v3384, 0.0
    %v3403 = vcombine.high %v3393, 0.0
    %v3404 = vcombine.high %v3400, 0.0
    %v3405 = vcombine.low %v3377, %v3384
    %v3407 = vunpack.c.l.s4 1983009808
    %v3408 = vunpack.c.0.s8 %v3407
    %v3409 = vlaneseq
    %v3410 = vshrl.u32 %v3409, 7
    %v3411 = vsub.s32 %v3408, %v3410
    %v3412 = vrot.slane %v3405, %v3411
    %v3413 = vcombine.low %v3401, %v3402
    %v3415 = vunpack.c.l.s4 1983009808
    %v3416 = vunpack.c.0.s8 %v3415
    %v3417 = vlaneseq
    %v3418 = vshrl.u32 %v3417, 7
    %v3419 = vsub.s32 %v3416, %v3418
    %v3420 = vrot.slane %v3413, %v3419
    %v3421 = vcombine.low %v3393, %v3400
    %v3423 = vunpack.c.l.s4 1983009808
    %v3424 = vunpack.c.0.s8 %v3423
    %v3425 = vlaneseq
    %v3426 = vshrl.u32 %v3425, 7
    %v3427 = vsub.s32 %v3424, %v3426
    %v3428 = vrot.slane %v3421, %v3427
    %v3429 = vcombine.low %v3403, %v3404
    %v3431 = vunpack.c.l.s4 1983009808
    %v3432 = vunpack.c.0.s8 %v3431
    %v3433 = vlaneseq
    %v3434 = vshrl.u32 %v3433, 7
    %v3435 = vsub.s32 %v3432, %v3434
    %v3436 = vrot.slane %v3429, %v3435
    %v3437 = vcombine.low %v3412, %v3420
    %v3438 = vcombine.high %v3412, %v3420
    %v3440 = vunpack.c.l.s4 1934713408
    %v3441 = vunpack.c.0.s8 %v3440
    %v3442 = vlaneseq
    %v3443 = vshrl.u32 %v3442, 7
    %v3444 = vsub.s32 %v3441, %v3443
    %v3445 = vrot.slane %v3437, %v3444
    %v3447 = vunpack.c.l.s4 1934713408
    %v3448 = vunpack.c.0.s8 %v3447
    %v3449 = vlaneseq
    %v3450 = vshrl.u32 %v3449, 7
    %v3451 = vsub.s32 %v3448, %v3450
    %v3452 = vrot.slane %v3438, %v3451
    %v3453 = vcombine.low %v3428, %v3436
    %v3454 = vcombine.high %v3428, %v3436
    %v3456 = vunpack.c.l.s4 1934713408
    %v3457 = vunpack.c.0.s8 %v3456
    %v3458 = vlaneseq
    %v3459 = vshrl.u32 %v3458, 7
    %v3460 = vsub.s32 %v3457, %v3459
    %v3461 = vrot.slane %v3453, %v3460
    %v3463 = vunpack.c.l.s4 1934713408
    %v3464 = vunpack.c.0.s8 %v3463
    %v3465 = vlaneseq
    %v3466 = vshrl.u32 %v3465, 7
    %v3467 = vsub.s32 %v3464, %v3466
    %v3468 = vrot.slane %v3454, %v3467
    %v3469 = vcombine.low %v3445, %v3461
    %v3470 = vcombine.high %v3445, %v3461
    %v3471 = vcombine.low %v3452, %v3468
    %v3472 = vcombine.high %v3452, %v3468
    %3474 = vrot.lane.b32.xlu0 %v3470, 32
    %v3475 = vpop.permute.xlu0 %3474
    %3478 = vrot.lane.b32.xlu0 %v3471, 64
    %v3479 = vpop.permute.xlu0 %3478
    %3482 = vrot.lane.b32.xlu0 %v3472, 96
    %v3483 = vpop.permute.xlu0 %3482
    %v3485 = vsel %vm2918, %v3469, %v3475
    %vm3486 = vcmask 523264
    %v3487 = vsel %vm3486, %v3485, %v3479
    %vm3488 = vcmask 785408
    %v3489 = vsel %vm3488, %v3487, %v3483
    %v3490 = vpack.c.bf16 %v3489, %v3489
    %v3491 = vld [vmem:[#allocation15] sm:$0xf]
    %v3492 = vld [vmem:[#allocation15 + $0x4] sm:$0xf]
    %v3493 = vld [vmem:[#allocation15 + $0x8] sm:$0xf]
    %v3494 = vld [vmem:[#allocation15 + $0xc] sm:$0xf]
    %v3495 = vld [vmem:[#allocation15 + $0x10] sm:$0xf]
    %v3496 = vld [vmem:[#allocation15 + $0x14] sm:$0xf]
    %v3497 = vld [vmem:[#allocation15 + $0x18] sm:$0xf]
    %v3498 = vld [vmem:[#allocation15 + $0x1c] sm:$0xf]
    %v3499 = vld [vmem:[#allocation15 + $0x20] sm:$0xf]
    %v3500 = vld [vmem:[#allocation15 + $0x24] sm:$0xf]
    %v3501 = vld [vmem:[#allocation15 + $0x28] sm:$0xf]
    %v3502 = vld [vmem:[#allocation15 + $0x2c] sm:$0xf]
    %v3503 = vld [vmem:[#allocation15 + $0x30] sm:$0xf]
    %v3504 = vld [vmem:[#allocation15 + $0x34] sm:$0xf]
    %v3505 = vld [vmem:[#allocation15 + $0x38] sm:$0xf]
    %v3506 = vld [vmem:[#allocation15 + $0x3c] sm:$0xf]
    %v3507 = vld [vmem:[#allocation16] sm:$0x1]
    %v3509 = vlaneseq
    %v3510 = vshrl.u32 %v3509, 7
    %v3511 = vsub.s32 0, %v3510
    %v3512 = vrot.slane %v3507, %v3511
    %v3530 = vunpack.c.l.b16 %v3491
    %v3531 = vunpack.c.l.b16 %v3492
    %v3532 = vunpack.c.l.b16 %v3493
    %v3533 = vunpack.c.l.b16 %v3494
    %v3534 = vunpack.c.l.b16 %v3495
    %v3535 = vunpack.c.l.b16 %v3496
    %v3536 = vunpack.c.l.b16 %v3497
    %v3537 = vunpack.c.l.b16 %v3498
    %v3538 = vunpack.c.l.b16 %v3499
    %v3539 = vunpack.c.l.b16 %v3500
    %v3540 = vunpack.c.l.b16 %v3501
    %v3541 = vunpack.c.l.b16 %v3502
    %v3542 = vunpack.c.l.b16 %v3503
    %v3543 = vunpack.c.l.b16 %v3504
    %v3544 = vunpack.c.l.b16 %v3505
    %v3545 = vunpack.c.l.b16 %v3506
    %v3546 = vpack.c.b16 %v3531, %v3530
    %v3547 = vpack.c.b16 %v3533, %v3532
    %v3548 = vpack.c.b16 %v3535, %v3534
    %v3549 = vpack.c.b16 %v3537, %v3536
    %v3550 = vpack.c.b16 %v3539, %v3538
    %v3551 = vpack.c.b16 %v3541, %v3540
    %v3552 = vpack.c.b16 %v3543, %v3542
    %v3553 = vpack.c.b16 %v3545, %v3544
    %3562 = vmatprep.subr.bf16.mxu0 0
    %3563 = vmatpush1.bf16.msra.mxu0 %v3553
    %3564 = vmatprep.subr.bf16.mxu0 0
    %3565 = vmatpush1.bf16.msra.mxu0 %v3552
    %3566 = vmatprep.subr.bf16.mxu0 0
    %3567 = vmatpush1.bf16.msra.mxu0 %v3551
    %3568 = vmatprep.subr.bf16.mxu0 0
    %3569 = vmatpush1.bf16.msra.mxu0 %v3550
    %3570 = vmatprep.subr.bf16.mxu0 0
    %3571 = vmatpush1.bf16.msra.mxu0 %v3549
    %3572 = vmatprep.subr.bf16.mxu0 0
    %3573 = vmatpush1.bf16.msra.mxu0 %v3548
    %3574 = vmatprep.subr.bf16.mxu0 0
    %3575 = vmatpush1.bf16.msra.mxu0 %v3547
    %3576 = vmatprep.subr.bf16.mxu0 0
    %3577 = vmatpush1.bf16.msra.mxu0 %v3546
    %3578 = vmatprep.subr.bf16.mxu0 0
    %3579 = vmatpush2.bf16.msra.mxu0 0
    %3580 = vmatprep.subr.bf16.mxu0 0
    %3581 = vmatpush2.bf16.msra.mxu0 0
    %3582 = vmatprep.subr.bf16.mxu0 0
    %3583 = vmatpush2.bf16.msra.mxu0 0
    %3584 = vmatprep.subr.bf16.mxu0 0
    %3585 = vmatpush2.bf16.msra.mxu0 0
    %3586 = vmatprep.subr.bf16.mxu0 0
    %3587 = vmatpush2.bf16.msra.mxu0 0
    %3588 = vmatprep.subr.bf16.mxu0 0
    %3589 = vmatpush2.bf16.msra.mxu0 0
    %3590 = vmatprep.subr.bf16.mxu0 0
    %3591 = vmatpush2.bf16.msra.mxu0 0
    %3592 = vmatprep.subr.bf16.mxu0 0
    %3593 = vmatpush2.bf16.msra.mxu0 0
    %3594 = vmatprep.mubr.bf16.mxu0 0
    %3595 = vmatmul.mubr.bf16.gmra.mxu0 %v3490
    %v3596 = vpop.f32.mrf.mxu0
    %v3597 = vadd.f32 %v3512, %v3596
    %v3598 = vpop.f32.mrf.mxu0
    %v3599 = vpop.f32.mrf.mxu0
    %v3600 = vpop.f32.mrf.mxu0
    %3601 = vdwg.mxu0
    %v3602 = vadd.f32 %v2208, %v3597
    %v3603 = vld [vmem:[#allocation18] sm:$0x1]
    %v3604 = vld [vmem:[#allocation19] sm:$0x1]
    %3605 = vadd.xlane.f32.xlu0 %v3602
    %v3606 = vpop.xlane.xlu0 %3605
    %v3607 = vrcp.pop 128.0
    %v3608 = vmul.f32 %v3606, %v3607
    %v3609 = vsub.f32 %v3602, %v3608
    %v3610 = vmul.f32 %v3609, %v3609
    %3611 = vadd.xlane.f32.xlu0 %v3610
    %v3612 = vpop.xlane.xlu0 %3611
    %v3613 = vmul.f32 %v3612, %v3607
    %v3614 = vadd.f32 %v3613, 1e-05
    %v3615 = vrsqrt.pop %v3614
    %v3616 = vmul.f32 %v3609, %v3615
    %v3618 = vlaneseq
    %v3619 = vshrl.u32 %v3618, 7
    %v3620 = vsub.s32 0, %v3619
    %v3621 = vrot.slane %v3603, %v3620
    %v3623 = vmul.f32 %v3616, %v3621
    %v3625 = vlaneseq
    %v3626 = vshrl.u32 %v3625, 7
    %v3627 = vsub.s32 0, %v3626
    %v3628 = vrot.slane %v3604, %v3627
    %v3630 = vadd.f32 %v3623, %v3628
    %s3631 = smul.u32 4, 16
    %s3632 = smul.u32 %s3631, 16
    %s3633 = sshll.u32 %s3632, 4
    %3634 = dma.done [#allocation4], %s3633
    %v3635 = vpack.c.bf16 %v3630, %v3630
    %v3636 = vld [vmem:[#allocation2] sm:$0xff]
    %v3637 = vld [vmem:[#allocation2 + $0x8] sm:$0xff]
    %v3638 = vld [vmem:[#allocation2 + $0x10] sm:$0xff]
    %v3639 = vld [vmem:[#allocation2 + $0x18] sm:$0xff]
    %v3640 = vld [vmem:[#allocation2 + $0x20] sm:$0xff]
    %v3641 = vld [vmem:[#allocation2 + $0x28] sm:$0xff]
    %v3642 = vld [vmem:[#allocation2 + $0x30] sm:$0xff]
    %v3643 = vld [vmem:[#allocation2 + $0x38] sm:$0xff]
    %v3644 = vld [vmem:[#allocation2 + $0x40] sm:$0xff]
    %v3645 = vld [vmem:[#allocation2 + $0x48] sm:$0xff]
    %v3646 = vld [vmem:[#allocation2 + $0x50] sm:$0xff]
    %v3647 = vld [vmem:[#allocation2 + $0x58] sm:$0xff]
    %v3648 = vld [vmem:[#allocation2 + $0x60] sm:$0xff]
    %v3649 = vld [vmem:[#allocation2 + $0x68] sm:$0xff]
    %v3650 = vld [vmem:[#allocation2 + $0x70] sm:$0xff]
    %v3651 = vld [vmem:[#allocation2 + $0x78] sm:$0xff]
    %v3652 = vld [vmem:[#allocation2 + $0x80] sm:$0xff]
    %v3653 = vld [vmem:[#allocation2 + $0x88] sm:$0xff]
    %v3654 = vld [vmem:[#allocation2 + $0x90] sm:$0xff]
    %v3655 = vld [vmem:[#allocation2 + $0x98] sm:$0xff]
    %v3656 = vld [vmem:[#allocation2 + $0xa0] sm:$0xff]
    %v3657 = vld [vmem:[#allocation2 + $0xa8] sm:$0xff]
    %v3658 = vld [vmem:[#allocation2 + $0xb0] sm:$0xff]
    %v3659 = vld [vmem:[#allocation2 + $0xb8] sm:$0xff]
    %v3660 = vld [vmem:[#allocation2 + $0xc0] sm:$0xff]
    %v3661 = vld [vmem:[#allocation2 + $0xc8] sm:$0xff]
    %v3662 = vld [vmem:[#allocation2 + $0xd0] sm:$0xff]
    %v3663 = vld [vmem:[#allocation2 + $0xd8] sm:$0xff]
    %v3664 = vld [vmem:[#allocation2 + $0xe0] sm:$0xff]
    %v3665 = vld [vmem:[#allocation2 + $0xe8] sm:$0xff]
    %v3666 = vld [vmem:[#allocation2 + $0xf0] sm:$0xff]
    %v3667 = vld [vmem:[#allocation2 + $0xf8] sm:$0xff]
    %v3668 = vld [vmem:[#allocation2 + $0x100] sm:$0xff]
    %v3669 = vld [vmem:[#allocation2 + $0x108] sm:$0xff]
    %v3670 = vld [vmem:[#allocation2 + $0x110] sm:$0xff]
    %v3671 = vld [vmem:[#allocation2 + $0x118] sm:$0xff]
    %v3672 = vld [vmem:[#allocation2 + $0x120] sm:$0xff]
    %v3673 = vld [vmem:[#allocation2 + $0x128] sm:$0xff]
    %v3674 = vld [vmem:[#allocation2 + $0x130] sm:$0xff]
    %v3675 = vld [vmem:[#allocation2 + $0x138] sm:$0xff]
    %v3676 = vld [vmem:[#allocation2 + $0x140] sm:$0xff]
    %v3677 = vld [vmem:[#allocation2 + $0x148] sm:$0xff]
    %v3678 = vld [vmem:[#allocation2 + $0x150] sm:$0xff]
    %v3679 = vld [vmem:[#allocation2 + $0x158] sm:$0xff]
    %v3680 = vld [vmem:[#allocation2 + $0x160] sm:$0xff]
    %v3681 = vld [vmem:[#allocation2 + $0x168] sm:$0xff]
    %v3682 = vld [vmem:[#allocation2 + $0x170] sm:$0xff]
    %v3683 = vld [vmem:[#allocation2 + $0x178] sm:$0xff]
    %v3684 = vld [vmem:[#allocation2 + $0x180] sm:$0xff]
    %v3685 = vld [vmem:[#allocation2 + $0x188] sm:$0xff]
    %v3686 = vld [vmem:[#allocation2 + $0x190] sm:$0xff]
    %v3687 = vld [vmem:[#allocation2 + $0x198] sm:$0xff]
    %v3688 = vld [vmem:[#allocation2 + $0x1a0] sm:$0xff]
    %v3689 = vld [vmem:[#allocation2 + $0x1a8] sm:$0xff]
    %v3690 = vld [vmem:[#allocation2 + $0x1b0] sm:$0xff]
    %v3691 = vld [vmem:[#allocation2 + $0x1b8] sm:$0xff]
    %v3692 = vld [vmem:[#allocation2 + $0x1c0] sm:$0xff]
    %v3693 = vld [vmem:[#allocation2 + $0x1c8] sm:$0xff]
    %v3694 = vld [vmem:[#allocation2 + $0x1d0] sm:$0xff]
    %v3695 = vld [vmem:[#allocation2 + $0x1d8] sm:$0xff]
    %v3696 = vld [vmem:[#allocation2 + $0x1e0] sm:$0xff]
    %v3697 = vld [vmem:[#allocation2 + $0x1e8] sm:$0xff]
    %v3698 = vld [vmem:[#allocation2 + $0x1f0] sm:$0xff]
    %v3699 = vld [vmem:[#allocation2 + $0x1f8] sm:$0xff]
    %v3700 = vld [vmem:[#allocation2 + $0x200] sm:$0xff]
    %v3701 = vld [vmem:[#allocation2 + $0x208] sm:$0xff]
    %v3702 = vld [vmem:[#allocation2 + $0x210] sm:$0xff]
    %v3703 = vld [vmem:[#allocation2 + $0x218] sm:$0xff]
    %v3704 = vld [vmem:[#allocation2 + $0x220] sm:$0xff]
    %v3705 = vld [vmem:[#allocation2 + $0x228] sm:$0xff]
    %v3706 = vld [vmem:[#allocation2 + $0x230] sm:$0xff]
    %v3707 = vld [vmem:[#allocation2 + $0x238] sm:$0xff]
    %v3708 = vld [vmem:[#allocation2 + $0x240] sm:$0xff]
    %v3709 = vld [vmem:[#allocation2 + $0x248] sm:$0xff]
    %v3710 = vld [vmem:[#allocation2 + $0x250] sm:$0xff]
    %v3711 = vld [vmem:[#allocation2 + $0x258] sm:$0xff]
    %v3712 = vld [vmem:[#allocation2 + $0x260] sm:$0xff]
    %v3713 = vld [vmem:[#allocation2 + $0x268] sm:$0xff]
    %v3714 = vld [vmem:[#allocation2 + $0x270] sm:$0xff]
    %v3715 = vld [vmem:[#allocation2 + $0x278] sm:$0xff]
    %v3716 = vld [vmem:[#allocation2 + $0x280] sm:$0xff]
    %v3717 = vld [vmem:[#allocation2 + $0x288] sm:$0xff]
    %v3718 = vld [vmem:[#allocation2 + $0x290] sm:$0xff]
    %v3719 = vld [vmem:[#allocation2 + $0x298] sm:$0xff]
    %v3720 = vld [vmem:[#allocation2 + $0x2a0] sm:$0xff]
    %v3721 = vld [vmem:[#allocation2 + $0x2a8] sm:$0xff]
    %v3722 = vld [vmem:[#allocation2 + $0x2b0] sm:$0xff]
    %v3723 = vld [vmem:[#allocation2 + $0x2b8] sm:$0xff]
    %v3724 = vld [vmem:[#allocation2 + $0x2c0] sm:$0xff]
    %v3725 = vld [vmem:[#allocation2 + $0x2c8] sm:$0xff]
    %v3726 = vld [vmem:[#allocation2 + $0x2d0] sm:$0xff]
    %v3727 = vld [vmem:[#allocation2 + $0x2d8] sm:$0xff]
    %v3728 = vld [vmem:[#allocation2 + $0x2e0] sm:$0xff]
    %v3729 = vld [vmem:[#allocation2 + $0x2e8] sm:$0xff]
    %v3730 = vld [vmem:[#allocation2 + $0x2f0] sm:$0xff]
    %v3731 = vld [vmem:[#allocation2 + $0x2f8] sm:$0xff]
    %v3732 = vld [vmem:[#allocation2 + $0x300] sm:$0xff]
    %v3733 = vld [vmem:[#allocation2 + $0x308] sm:$0xff]
    %v3734 = vld [vmem:[#allocation2 + $0x310] sm:$0xff]
    %v3735 = vld [vmem:[#allocation2 + $0x318] sm:$0xff]
    %v3736 = vld [vmem:[#allocation2 + $0x320] sm:$0xff]
    %v3737 = vld [vmem:[#allocation2 + $0x328] sm:$0xff]
    %v3738 = vld [vmem:[#allocation2 + $0x330] sm:$0xff]
    %v3739 = vld [vmem:[#allocation2 + $0x338] sm:$0xff]
    %v3740 = vld [vmem:[#allocation2 + $0x340] sm:$0xff]
    %v3741 = vld [vmem:[#allocation2 + $0x348] sm:$0xff]
    %v3742 = vld [vmem:[#allocation2 + $0x350] sm:$0xff]
    %v3743 = vld [vmem:[#allocation2 + $0x358] sm:$0xff]
    %v3744 = vld [vmem:[#allocation2 + $0x360] sm:$0xff]
    %v3745 = vld [vmem:[#allocation2 + $0x368] sm:$0xff]
    %v3746 = vld [vmem:[#allocation2 + $0x370] sm:$0xff]
    %v3747 = vld [vmem:[#allocation2 + $0x378] sm:$0xff]
    %v3748 = vld [vmem:[#allocation2 + $0x380] sm:$0xff]
    %v3749 = vld [vmem:[#allocation2 + $0x388] sm:$0xff]
    %v3750 = vld [vmem:[#allocation2 + $0x390] sm:$0xff]
    %v3751 = vld [vmem:[#allocation2 + $0x398] sm:$0xff]
    %v3752 = vld [vmem:[#allocation2 + $0x3a0] sm:$0xff]
    %v3753 = vld [vmem:[#allocation2 + $0x3a8] sm:$0xff]
    %v3754 = vld [vmem:[#allocation2 + $0x3b0] sm:$0xff]
    %v3755 = vld [vmem:[#allocation2 + $0x3b8] sm:$0xff]
    %v3756 = vld [vmem:[#allocation2 + $0x3c0] sm:$0xff]
    %v3757 = vld [vmem:[#allocation2 + $0x3c8] sm:$0xff]
    %v3758 = vld [vmem:[#allocation2 + $0x3d0] sm:$0xff]
    %v3759 = vld [vmem:[#allocation2 + $0x3d8] sm:$0xff]
    %v3760 = vld [vmem:[#allocation2 + $0x3e0] sm:$0xff]
    %v3761 = vld [vmem:[#allocation2 + $0x3e8] sm:$0xff]
    %v3762 = vld [vmem:[#allocation2 + $0x3f0] sm:$0xff]
    %v3763 = vld [vmem:[#allocation2 + $0x3f8] sm:$0xff]
    %v3764 = vld [vmem:[%s14] sm:$0xff]
    %v3765 = vld [vmem:[%s14 + $0x8] sm:$0xff]
    %v3768 = vlaneseq
    %v3769 = vshrl.u32 %v3768, 7
    %v3770 = vsub.s32 0, %v3769
    %v3771 = vrot.slane %v3764, %v3770
    %v3772 = vlaneseq
    %v3773 = vshrl.u32 %v3772, 7
    %v3774 = vsub.s32 1, %v3773
    %v3775 = vrot.slane %v3764, %v3774
    %v3776 = vlaneseq
    %v3777 = vshrl.u32 %v3776, 7
    %v3778 = vsub.s32 2, %v3777
    %v3779 = vrot.slane %v3764, %v3778
    %v3780 = vlaneseq
    %v3781 = vshrl.u32 %v3780, 7
    %v3782 = vsub.s32 3, %v3781
    %v3783 = vrot.slane %v3764, %v3782
    %v3784 = vlaneseq
    %v3785 = vshrl.u32 %v3784, 7
    %v3786 = vsub.s32 4, %v3785
    %v3787 = vrot.slane %v3764, %v3786
    %v3788 = vlaneseq
    %v3789 = vshrl.u32 %v3788, 7
    %v3790 = vsub.s32 5, %v3789
    %v3791 = vrot.slane %v3764, %v3790
    %v3792 = vlaneseq
    %v3793 = vshrl.u32 %v3792, 7
    %v3794 = vsub.s32 6, %v3793
    %v3795 = vrot.slane %v3764, %v3794
    %v3796 = vlaneseq
    %v3797 = vshrl.u32 %v3796, 7
    %v3798 = vsub.s32 7, %v3797
    %v3799 = vrot.slane %v3764, %v3798
    %v3800 = vlaneseq
    %v3801 = vshrl.u32 %v3800, 7
    %v3802 = vsub.s32 0, %v3801
    %v3803 = vrot.slane %v3765, %v3802
    %v3804 = vlaneseq
    %v3805 = vshrl.u32 %v3804, 7
    %v3806 = vsub.s32 1, %v3805
    %v3807 = vrot.slane %v3765, %v3806
    %v3808 = vlaneseq
    %v3809 = vshrl.u32 %v3808, 7
    %v3810 = vsub.s32 2, %v3809
    %v3811 = vrot.slane %v3765, %v3810
    %v3812 = vlaneseq
    %v3813 = vshrl.u32 %v3812, 7
    %v3814 = vsub.s32 3, %v3813
    %v3815 = vrot.slane %v3765, %v3814
    %v3816 = vlaneseq
    %v3817 = vshrl.u32 %v3816, 7
    %v3818 = vsub.s32 4, %v3817
    %v3819 = vrot.slane %v3765, %v3818
    %v3820 = vlaneseq
    %v3821 = vshrl.u32 %v3820, 7
    %v3822 = vsub.s32 5, %v3821
    %v3823 = vrot.slane %v3765, %v3822
    %v3824 = vlaneseq
    %v3825 = vshrl.u32 %v3824, 7
    %v3826 = vsub.s32 6, %v3825
    %v3827 = vrot.slane %v3765, %v3826
    %v3828 = vlaneseq
    %v3829 = vshrl.u32 %v3828, 7
    %v3830 = vsub.s32 7, %v3829
    %v3831 = vrot.slane %v3765, %v3830
    %v3976 = vunpack.c.l.b16 %v3636
    %v3977 = vunpack.c.h.b16 %v3636
    %v3978 = vunpack.c.l.b16 %v3637
    %v3979 = vunpack.c.h.b16 %v3637
    %v3980 = vunpack.c.l.b16 %v3638
    %v3981 = vunpack.c.h.b16 %v3638
    %v3982 = vunpack.c.l.b16 %v3639
    %v3983 = vunpack.c.h.b16 %v3639
    %v3984 = vunpack.c.l.b16 %v3640
    %v3985 = vunpack.c.h.b16 %v3640
    %v3986 = vunpack.c.l.b16 %v3641
    %v3987 = vunpack.c.h.b16 %v3641
    %v3988 = vunpack.c.l.b16 %v3642
    %v3989 = vunpack.c.h.b16 %v3642
    %v3990 = vunpack.c.l.b16 %v3643
    %v3991 = vunpack.c.h.b16 %v3643
    %v3992 = vunpack.c.l.b16 %v3644
    %v3993 = vunpack.c.h.b16 %v3644
    %v3994 = vunpack.c.l.b16 %v3645
    %v3995 = vunpack.c.h.b16 %v3645
    %v3996 = vunpack.c.l.b16 %v3646
    %v3997 = vunpack.c.h.b16 %v3646
    %v3998 = vunpack.c.l.b16 %v3647
    %v3999 = vunpack.c.h.b16 %v3647
    %v4000 = vunpack.c.l.b16 %v3648
    %v4001 = vunpack.c.h.b16 %v3648
    %v4002 = vunpack.c.l.b16 %v3649
    %v4003 = vunpack.c.h.b16 %v3649
    %v4004 = vunpack.c.l.b16 %v3650
    %v4005 = vunpack.c.h.b16 %v3650
    %v4006 = vunpack.c.l.b16 %v3651
    %v4007 = vunpack.c.h.b16 %v3651
    %v4008 = vunpack.c.l.b16 %v3652
    %v4009 = vunpack.c.h.b16 %v3652
    %v4010 = vunpack.c.l.b16 %v3653
    %v4011 = vunpack.c.h.b16 %v3653
    %v4012 = vunpack.c.l.b16 %v3654
    %v4013 = vunpack.c.h.b16 %v3654
    %v4014 = vunpack.c.l.b16 %v3655
    %v4015 = vunpack.c.h.b16 %v3655
    %v4016 = vunpack.c.l.b16 %v3656
    %v4017 = vunpack.c.h.b16 %v3656
    %v4018 = vunpack.c.l.b16 %v3657
    %v4019 = vunpack.c.h.b16 %v3657
    %v4020 = vunpack.c.l.b16 %v3658
    %v4021 = vunpack.c.h.b16 %v3658
    %v4022 = vunpack.c.l.b16 %v3659
    %v4023 = vunpack.c.h.b16 %v3659
    %v4024 = vunpack.c.l.b16 %v3660
    %v4025 = vunpack.c.h.b16 %v3660
    %v4026 = vunpack.c.l.b16 %v3661
    %v4027 = vunpack.c.h.b16 %v3661
    %v4028 = vunpack.c.l.b16 %v3662
    %v4029 = vunpack.c.h.b16 %v3662
    %v4030 = vunpack.c.l.b16 %v3663
    %v4031 = vunpack.c.h.b16 %v3663
    %v4032 = vunpack.c.l.b16 %v3664
    %v4033 = vunpack.c.h.b16 %v3664
    %v4034 = vunpack.c.l.b16 %v3665
    %v4035 = vunpack.c.h.b16 %v3665
    %v4036 = vunpack.c.l.b16 %v3666
    %v4037 = vunpack.c.h.b16 %v3666
    %v4038 = vunpack.c.l.b16 %v3667
    %v4039 = vunpack.c.h.b16 %v3667
    %v4040 = vunpack.c.l.b16 %v3668
    %v4041 = vunpack.c.h.b16 %v3668
    %v4042 = vunpack.c.l.b16 %v3669
    %v4043 = vunpack.c.h.b16 %v3669
    %v4044 = vunpack.c.l.b16 %v3670
    %v4045 = vunpack.c.h.b16 %v3670
    %v4046 = vunpack.c.l.b16 %v3671
    %v4047 = vunpack.c.h.b16 %v3671
    %v4048 = vunpack.c.l.b16 %v3672
    %v4049 = vunpack.c.h.b16 %v3672
    %v4050 = vunpack.c.l.b16 %v3673
    %v4051 = vunpack.c.h.b16 %v3673
    %v4052 = vunpack.c.l.b16 %v3674
    %v4053 = vunpack.c.h.b16 %v3674
    %v4054 = vunpack.c.l.b16 %v3675
    %v4055 = vunpack.c.h.b16 %v3675
    %v4056 = vunpack.c.l.b16 %v3676
    %v4057 = vunpack.c.h.b16 %v3676
    %v4058 = vunpack.c.l.b16 %v3677
    %v4059 = vunpack.c.h.b16 %v3677
    %v4060 = vunpack.c.l.b16 %v3678
    %v4061 = vunpack.c.h.b16 %v3678
    %v4062 = vunpack.c.l.b16 %v3679
    %v4063 = vunpack.c.h.b16 %v3679
    %v4064 = vunpack.c.l.b16 %v3680
    %v4065 = vunpack.c.h.b16 %v3680
    %v4066 = vunpack.c.l.b16 %v3681
    %v4067 = vunpack.c.h.b16 %v3681
    %v4068 = vunpack.c.l.b16 %v3682
    %v4069 = vunpack.c.h.b16 %v3682
    %v4070 = vunpack.c.l.b16 %v3683
    %v4071 = vunpack.c.h.b16 %v3683
    %v4072 = vunpack.c.l.b16 %v3684
    %v4073 = vunpack.c.h.b16 %v3684
    %v4074 = vunpack.c.l.b16 %v3685
    %v4075 = vunpack.c.h.b16 %v3685
    %v4076 = vunpack.c.l.b16 %v3686
    %v4077 = vunpack.c.h.b16 %v3686
    %v4078 = vunpack.c.l.b16 %v3687
    %v4079 = vunpack.c.h.b16 %v3687
    %v4080 = vunpack.c.l.b16 %v3688
    %v4081 = vunpack.c.h.b16 %v3688
    %v4082 = vunpack.c.l.b16 %v3689
    %v4083 = vunpack.c.h.b16 %v3689
    %v4084 = vunpack.c.l.b16 %v3690
    %v4085 = vunpack.c.h.b16 %v3690
    %v4086 = vunpack.c.l.b16 %v3691
    %v4087 = vunpack.c.h.b16 %v3691
    %v4088 = vunpack.c.l.b16 %v3692
    %v4089 = vunpack.c.h.b16 %v3692
    %v4090 = vunpack.c.l.b16 %v3693
    %v4091 = vunpack.c.h.b16 %v3693
    %v4092 = vunpack.c.l.b16 %v3694
    %v4093 = vunpack.c.h.b16 %v3694
    %v4094 = vunpack.c.l.b16 %v3695
    %v4095 = vunpack.c.h.b16 %v3695
    %v4096 = vunpack.c.l.b16 %v3696
    %v4097 = vunpack.c.h.b16 %v3696
    %v4098 = vunpack.c.l.b16 %v3697
    %v4099 = vunpack.c.h.b16 %v3697
    %v4100 = vunpack.c.l.b16 %v3698
    %v4101 = vunpack.c.h.b16 %v3698
    %v4102 = vunpack.c.l.b16 %v3699
    %v4103 = vunpack.c.h.b16 %v3699
    %v4104 = vunpack.c.l.b16 %v3700
    %v4105 = vunpack.c.h.b16 %v3700
    %v4106 = vunpack.c.l.b16 %v3701
    %v4107 = vunpack.c.h.b16 %v3701
    %v4108 = vunpack.c.l.b16 %v3702
    %v4109 = vunpack.c.h.b16 %v3702
    %v4110 = vunpack.c.l.b16 %v3703
    %v4111 = vunpack.c.h.b16 %v3703
    %v4112 = vunpack.c.l.b16 %v3704
    %v4113 = vunpack.c.h.b16 %v3704
    %v4114 = vunpack.c.l.b16 %v3705
    %v4115 = vunpack.c.h.b16 %v3705
    %v4116 = vunpack.c.l.b16 %v3706
    %v4117 = vunpack.c.h.b16 %v3706
    %v4118 = vunpack.c.l.b16 %v3707
    %v4119 = vunpack.c.h.b16 %v3707
    %v4120 = vunpack.c.l.b16 %v3708
    %v4121 = vunpack.c.h.b16 %v3708
    %v4122 = vunpack.c.l.b16 %v3709
    %v4123 = vunpack.c.h.b16 %v3709
    %v4124 = vunpack.c.l.b16 %v3710
    %v4125 = vunpack.c.h.b16 %v3710
    %v4126 = vunpack.c.l.b16 %v3711
    %v4127 = vunpack.c.h.b16 %v3711
    %v4128 = vunpack.c.l.b16 %v3712
    %v4129 = vunpack.c.h.b16 %v3712
    %v4130 = vunpack.c.l.b16 %v3713
    %v4131 = vunpack.c.h.b16 %v3713
    %v4132 = vunpack.c.l.b16 %v3714
    %v4133 = vunpack.c.h.b16 %v3714
    %v4134 = vunpack.c.l.b16 %v3715
    %v4135 = vunpack.c.h.b16 %v3715
    %v4136 = vunpack.c.l.b16 %v3716
    %v4137 = vunpack.c.h.b16 %v3716
    %v4138 = vunpack.c.l.b16 %v3717
    %v4139 = vunpack.c.h.b16 %v3717
    %v4140 = vunpack.c.l.b16 %v3718
    %v4141 = vunpack.c.h.b16 %v3718
    %v4142 = vunpack.c.l.b16 %v3719
    %v4143 = vunpack.c.h.b16 %v3719
    %v4144 = vunpack.c.l.b16 %v3720
    %v4145 = vunpack.c.h.b16 %v3720
    %v4146 = vunpack.c.l.b16 %v3721
    %v4147 = vunpack.c.h.b16 %v3721
    %v4148 = vunpack.c.l.b16 %v3722
    %v4149 = vunpack.c.h.b16 %v3722
    %v4150 = vunpack.c.l.b16 %v3723
    %v4151 = vunpack.c.h.b16 %v3723
    %v4152 = vunpack.c.l.b16 %v3724
    %v4153 = vunpack.c.h.b16 %v3724
    %v4154 = vunpack.c.l.b16 %v3725
    %v4155 = vunpack.c.h.b16 %v3725
    %v4156 = vunpack.c.l.b16 %v3726
    %v4157 = vunpack.c.h.b16 %v3726
    %v4158 = vunpack.c.l.b16 %v3727
    %v4159 = vunpack.c.h.b16 %v3727
    %v4160 = vunpack.c.l.b16 %v3728
    %v4161 = vunpack.c.h.b16 %v3728
    %v4162 = vunpack.c.l.b16 %v3729
    %v4163 = vunpack.c.h.b16 %v3729
    %v4164 = vunpack.c.l.b16 %v3730
    %v4165 = vunpack.c.h.b16 %v3730
    %v4166 = vunpack.c.l.b16 %v3731
    %v4167 = vunpack.c.h.b16 %v3731
    %v4168 = vunpack.c.l.b16 %v3732
    %v4169 = vunpack.c.h.b16 %v3732
    %v4170 = vunpack.c.l.b16 %v3733
    %v4171 = vunpack.c.h.b16 %v3733
    %v4172 = vunpack.c.l.b16 %v3734
    %v4173 = vunpack.c.h.b16 %v3734
    %v4174 = vunpack.c.l.b16 %v3735
    %v4175 = vunpack.c.h.b16 %v3735
    %v4176 = vunpack.c.l.b16 %v3736
    %v4177 = vunpack.c.h.b16 %v3736
    %v4178 = vunpack.c.l.b16 %v3737
    %v4179 = vunpack.c.h.b16 %v3737
    %v4180 = vunpack.c.l.b16 %v3738
    %v4181 = vunpack.c.h.b16 %v3738
    %v4182 = vunpack.c.l.b16 %v3739
    %v4183 = vunpack.c.h.b16 %v3739
    %v4184 = vunpack.c.l.b16 %v3740
    %v4185 = vunpack.c.h.b16 %v3740
    %v4186 = vunpack.c.l.b16 %v3741
    %v4187 = vunpack.c.h.b16 %v3741
    %v4188 = vunpack.c.l.b16 %v3742
    %v4189 = vunpack.c.h.b16 %v3742
    %v4190 = vunpack.c.l.b16 %v3743
    %v4191 = vunpack.c.h.b16 %v3743
    %v4192 = vunpack.c.l.b16 %v3744
    %v4193 = vunpack.c.h.b16 %v3744
    %v4194 = vunpack.c.l.b16 %v3745
    %v4195 = vunpack.c.h.b16 %v3745
    %v4196 = vunpack.c.l.b16 %v3746
    %v4197 = vunpack.c.h.b16 %v3746
    %v4198 = vunpack.c.l.b16 %v3747
    %v4199 = vunpack.c.h.b16 %v3747
    %v4200 = vunpack.c.l.b16 %v3748
    %v4201 = vunpack.c.h.b16 %v3748
    %v4202 = vunpack.c.l.b16 %v3749
    %v4203 = vunpack.c.h.b16 %v3749
    %v4204 = vunpack.c.l.b16 %v3750
    %v4205 = vunpack.c.h.b16 %v3750
    %v4206 = vunpack.c.l.b16 %v3751
    %v4207 = vunpack.c.h.b16 %v3751
    %v4208 = vunpack.c.l.b16 %v3752
    %v4209 = vunpack.c.h.b16 %v3752
    %v4210 = vunpack.c.l.b16 %v3753
    %v4211 = vunpack.c.h.b16 %v3753
    %v4212 = vunpack.c.l.b16 %v3754
    %v4213 = vunpack.c.h.b16 %v3754
    %v4214 = vunpack.c.l.b16 %v3755
    %v4215 = vunpack.c.h.b16 %v3755
    %v4216 = vunpack.c.l.b16 %v3756
    %v4217 = vunpack.c.h.b16 %v3756
    %v4218 = vunpack.c.l.b16 %v3757
    %v4219 = vunpack.c.h.b16 %v3757
    %v4220 = vunpack.c.l.b16 %v3758
    %v4221 = vunpack.c.h.b16 %v3758
    %v4222 = vunpack.c.l.b16 %v3759
    %v4223 = vunpack.c.h.b16 %v3759
    %v4224 = vunpack.c.l.b16 %v3760
    %v4225 = vunpack.c.h.b16 %v3760
    %v4226 = vunpack.c.l.b16 %v3761
    %v4227 = vunpack.c.h.b16 %v3761
    %v4228 = vunpack.c.l.b16 %v3762
    %v4229 = vunpack.c.h.b16 %v3762
    %v4230 = vunpack.c.l.b16 %v3763
    %v4231 = vunpack.c.h.b16 %v3763
    %v4232 = vpack.c.b16 %v3992, %v3976
    %v4233 = vpack.c.b16 %v3993, %v3977
    %v4234 = vpack.c.b16 %v3994, %v3978
    %v4235 = vpack.c.b16 %v3995, %v3979
    %v4236 = vpack.c.b16 %v3996, %v3980
    %v4237 = vpack.c.b16 %v3997, %v3981
    %v4238 = vpack.c.b16 %v3998, %v3982
    %v4239 = vpack.c.b16 %v3999, %v3983
    %v4240 = vpack.c.b16 %v4000, %v3984
    %v4241 = vpack.c.b16 %v4001, %v3985
    %v4242 = vpack.c.b16 %v4002, %v3986
    %v4243 = vpack.c.b16 %v4003, %v3987
    %v4244 = vpack.c.b16 %v4004, %v3988
    %v4245 = vpack.c.b16 %v4005, %v3989
    %v4246 = vpack.c.b16 %v4006, %v3990
    %v4247 = vpack.c.b16 %v4007, %v3991
    %v4248 = vpack.c.b16 %v4024, %v4008
    %v4249 = vpack.c.b16 %v4025, %v4009
    %v4250 = vpack.c.b16 %v4026, %v4010
    %v4251 = vpack.c.b16 %v4027, %v4011
    %v4252 = vpack.c.b16 %v4028, %v4012
    %v4253 = vpack.c.b16 %v4029, %v4013
    %v4254 = vpack.c.b16 %v4030, %v4014
    %v4255 = vpack.c.b16 %v4031, %v4015
    %v4256 = vpack.c.b16 %v4032, %v4016
    %v4257 = vpack.c.b16 %v4033, %v4017
    %v4258 = vpack.c.b16 %v4034, %v4018
    %v4259 = vpack.c.b16 %v4035, %v4019
    %v4260 = vpack.c.b16 %v4036, %v4020
    %v4261 = vpack.c.b16 %v4037, %v4021
    %v4262 = vpack.c.b16 %v4038, %v4022
    %v4263 = vpack.c.b16 %v4039, %v4023
    %v4264 = vpack.c.b16 %v4056, %v4040
    %v4265 = vpack.c.b16 %v4057, %v4041
    %v4266 = vpack.c.b16 %v4058, %v4042
    %v4267 = vpack.c.b16 %v4059, %v4043
    %v4268 = vpack.c.b16 %v4060, %v4044
    %v4269 = vpack.c.b16 %v4061, %v4045
    %v4270 = vpack.c.b16 %v4062, %v4046
    %v4271 = vpack.c.b16 %v4063, %v4047
    %v4272 = vpack.c.b16 %v4064, %v4048
    %v4273 = vpack.c.b16 %v4065, %v4049
    %v4274 = vpack.c.b16 %v4066, %v4050
    %v4275 = vpack.c.b16 %v4067, %v4051
    %v4276 = vpack.c.b16 %v4068, %v4052
    %v4277 = vpack.c.b16 %v4069, %v4053
    %v4278 = vpack.c.b16 %v4070, %v4054
    %v4279 = vpack.c.b16 %v4071, %v4055
    %v4280 = vpack.c.b16 %v4088, %v4072
    %v4281 = vpack.c.b16 %v4089, %v4073
    %v4282 = vpack.c.b16 %v4090, %v4074
    %v4283 = vpack.c.b16 %v4091, %v4075
    %v4284 = vpack.c.b16 %v4092, %v4076
    %v4285 = vpack.c.b16 %v4093, %v4077
    %v4286 = vpack.c.b16 %v4094, %v4078
    %v4287 = vpack.c.b16 %v4095, %v4079
    %v4288 = vpack.c.b16 %v4096, %v4080
    %v4289 = vpack.c.b16 %v4097, %v4081
    %v4290 = vpack.c.b16 %v4098, %v4082
    %v4291 = vpack.c.b16 %v4099, %v4083
    %v4292 = vpack.c.b16 %v4100, %v4084
    %v4293 = vpack.c.b16 %v4101, %v4085
    %v4294 = vpack.c.b16 %v4102, %v4086
    %v4295 = vpack.c.b16 %v4103, %v4087
    %v4296 = vpack.c.b16 %v4120, %v4104
    %v4297 = vpack.c.b16 %v4121, %v4105
    %v4298 = vpack.c.b16 %v4122, %v4106
    %v4299 = vpack.c.b16 %v4123, %v4107
    %v4300 = vpack.c.b16 %v4124, %v4108
    %v4301 = vpack.c.b16 %v4125, %v4109
    %v4302 = vpack.c.b16 %v4126, %v4110
    %v4303 = vpack.c.b16 %v4127, %v4111
    %v4304 = vpack.c.b16 %v4128, %v4112
    %v4305 = vpack.c.b16 %v4129, %v4113
    %v4306 = vpack.c.b16 %v4130, %v4114
    %v4307 = vpack.c.b16 %v4131, %v4115
    %v4308 = vpack.c.b16 %v4132, %v4116
    %v4309 = vpack.c.b16 %v4133, %v4117
    %v4310 = vpack.c.b16 %v4134, %v4118
    %v4311 = vpack.c.b16 %v4135, %v4119
    %v4312 = vpack.c.b16 %v4152, %v4136
    %v4313 = vpack.c.b16 %v4153, %v4137
    %v4314 = vpack.c.b16 %v4154, %v4138
    %v4315 = vpack.c.b16 %v4155, %v4139
    %v4316 = vpack.c.b16 %v4156, %v4140
    %v4317 = vpack.c.b16 %v4157, %v4141
    %v4318 = vpack.c.b16 %v4158, %v4142
    %v4319 = vpack.c.b16 %v4159, %v4143
    %v4320 = vpack.c.b16 %v4160, %v4144
    %v4321 = vpack.c.b16 %v4161, %v4145
    %v4322 = vpack.c.b16 %v4162, %v4146
    %v4323 = vpack.c.b16 %v4163, %v4147
    %v4324 = vpack.c.b16 %v4164, %v4148
    %v4325 = vpack.c.b16 %v4165, %v4149
    %v4326 = vpack.c.b16 %v4166, %v4150
    %v4327 = vpack.c.b16 %v4167, %v4151
    %v4328 = vpack.c.b16 %v4184, %v4168
    %v4329 = vpack.c.b16 %v4185, %v4169
    %v4330 = vpack.c.b16 %v4186, %v4170
    %v4331 = vpack.c.b16 %v4187, %v4171
    %v4332 = vpack.c.b16 %v4188, %v4172
    %v4333 = vpack.c.b16 %v4189, %v4173
    %v4334 = vpack.c.b16 %v4190, %v4174
    %v4335 = vpack.c.b16 %v4191, %v4175
    %v4336 = vpack.c.b16 %v4192, %v4176
    %v4337 = vpack.c.b16 %v4193, %v4177
    %v4338 = vpack.c.b16 %v4194, %v4178
    %v4339 = vpack.c.b16 %v4195, %v4179
    %v4340 = vpack.c.b16 %v4196, %v4180
    %v4341 = vpack.c.b16 %v4197, %v4181
    %v4342 = vpack.c.b16 %v4198, %v4182
    %v4343 = vpack.c.b16 %v4199, %v4183
    %v4344 = vpack.c.b16 %v4216, %v4200
    %v4345 = vpack.c.b16 %v4217, %v4201
    %v4346 = vpack.c.b16 %v4218, %v4202
    %v4347 = vpack.c.b16 %v4219, %v4203
    %v4348 = vpack.c.b16 %v4220, %v4204
    %v4349 = vpack.c.b16 %v4221, %v4205
    %v4350 = vpack.c.b16 %v4222, %v4206
    %v4351 = vpack.c.b16 %v4223, %v4207
    %v4352 = vpack.c.b16 %v4224, %v4208
    %v4353 = vpack.c.b16 %v4225, %v4209
    %v4354 = vpack.c.b16 %v4226, %v4210
    %v4355 = vpack.c.b16 %v4227, %v4211
    %v4356 = vpack.c.b16 %v4228, %v4212
    %v4357 = vpack.c.b16 %v4229, %v4213
    %v4358 = vpack.c.b16 %v4230, %v4214
    %v4359 = vpack.c.b16 %v4231, %v4215
    %4488 = vmatprep.subr.bf16.mxu0 %v4345
    %4489 = vmatpush1.bf16.msra.mxu0 %v4344
    %4490 = vmatprep.subr.bf16.mxu0 %v4329
    %4491 = vmatpush1.bf16.msra.mxu0 %v4328
    %4492 = vmatprep.subr.bf16.mxu0 %v4313
    %4493 = vmatpush1.bf16.msra.mxu0 %v4312
    %4494 = vmatprep.subr.bf16.mxu0 %v4297
    %4495 = vmatpush1.bf16.msra.mxu0 %v4296
    %4496 = vmatprep.subr.bf16.mxu0 %v4281
    %4497 = vmatpush1.bf16.msra.mxu0 %v4280
    %4498 = vmatprep.subr.bf16.mxu0 %v4265
    %4499 = vmatpush1.bf16.msra.mxu0 %v4264
    %4500 = vmatprep.subr.bf16.mxu0 %v4249
    %4501 = vmatpush1.bf16.msra.mxu0 %v4248
    %4502 = vmatprep.subr.bf16.mxu0 %v4233
    %4503 = vmatpush1.bf16.msra.mxu0 %v4232
    %4504 = vmatprep.subr.bf16.mxu0 0
    %4505 = vmatpush2.bf16.msra.mxu0 0
    %4506 = vmatprep.subr.bf16.mxu0 0
    %4507 = vmatpush2.bf16.msra.mxu0 0
    %4508 = vmatprep.subr.bf16.mxu0 0
    %4509 = vmatpush2.bf16.msra.mxu0 0
    %4510 = vmatprep.subr.bf16.mxu0 0
    %4511 = vmatpush2.bf16.msra.mxu0 0
    %4512 = vmatprep.subr.bf16.mxu0 0
    %4513 = vmatpush2.bf16.msra.mxu0 0
    %4514 = vmatprep.subr.bf16.mxu0 0
    %4515 = vmatpush2.bf16.msra.mxu0 0
    %4516 = vmatprep.subr.bf16.mxu0 0
    %4517 = vmatpush2.bf16.msra.mxu0 0
    %4518 = vmatprep.subr.bf16.mxu0 0
    %4519 = vmatpush2.bf16.msra.mxu0 0
    %4520 = vmatprep.mubr.bf16.mxu0 0
    %4521 = vmatmul.mubr.bf16.gmra.mxu0 %v3635
    %v4522 = vpop.f32.mrf.mxu0
    %v4523 = vadd.f32 %v3771, %v4522
    %v4524 = vpop.f32.mrf.mxu0
    %v4525 = vadd.f32 %v3775, %v4524
    %v4526 = vpop.f32.mrf.mxu0
    %v4527 = vpop.f32.mrf.mxu0
    %4528 = vdwg.mxu0
    %4529 = vmatprep.subr.bf16.mxu0 %v4347
    %4530 = vmatpush1.bf16.msra.mxu0 %v4346
    %4531 = vmatprep.subr.bf16.mxu0 %v4331
    %4532 = vmatpush1.bf16.msra.mxu0 %v4330
    %4533 = vmatprep.subr.bf16.mxu0 %v4315
    %4534 = vmatpush1.bf16.msra.mxu0 %v4314
    %4535 = vmatprep.subr.bf16.mxu0 %v4299
    %4536 = vmatpush1.bf16.msra.mxu0 %v4298
    %4537 = vmatprep.subr.bf16.mxu0 %v4283
    %4538 = vmatpush1.bf16.msra.mxu0 %v4282
    %4539 = vmatprep.subr.bf16.mxu0 %v4267
    %4540 = vmatpush1.bf16.msra.mxu0 %v4266
    %4541 = vmatprep.subr.bf16.mxu0 %v4251
    %4542 = vmatpush1.bf16.msra.mxu0 %v4250
    %4543 = vmatprep.subr.bf16.mxu0 %v4235
    %4544 = vmatpush1.bf16.msra.mxu0 %v4234
    %4545 = vmatprep.subr.bf16.mxu0 0
    %4546 = vmatpush2.bf16.msra.mxu0 0
    %4547 = vmatprep.subr.bf16.mxu0 0
    %4548 = vmatpush2.bf16.msra.mxu0 0
    %4549 = vmatprep.subr.bf16.mxu0 0
    %4550 = vmatpush2.bf16.msra.mxu0 0
    %4551 = vmatprep.subr.bf16.mxu0 0
    %4552 = vmatpush2.bf16.msra.mxu0 0
    %4553 = vmatprep.subr.bf16.mxu0 0
    %4554 = vmatpush2.bf16.msra.mxu0 0
    %4555 = vmatprep.subr.bf16.mxu0 0
    %4556 = vmatpush2.bf16.msra.mxu0 0
    %4557 = vmatprep.subr.bf16.mxu0 0
    %4558 = vmatpush2.bf16.msra.mxu0 0
    %4559 = vmatprep.subr.bf16.mxu0 0
    %4560 = vmatpush2.bf16.msra.mxu0 0
    %4561 = vmatprep.mubr.bf16.mxu0 0
    %4562 = vmatmul.mubr.bf16.gmra.mxu0 %v3635
    %v4563 = vpop.f32.mrf.mxu0
    %v4564 = vadd.f32 %v3779, %v4563
    %v4565 = vpop.f32.mrf.mxu0
    %v4566 = vadd.f32 %v3783, %v4565
    %v4567 = vpop.f32.mrf.mxu0
    %v4568 = vpop.f32.mrf.mxu0
    %4569 = vdwg.mxu0
    %4570 = vmatprep.subr.bf16.mxu0 %v4349
    %4571 = vmatpush1.bf16.msra.mxu0 %v4348
    %4572 = vmatprep.subr.bf16.mxu0 %v4333
    %4573 = vmatpush1.bf16.msra.mxu0 %v4332
    %4574 = vmatprep.subr.bf16.mxu0 %v4317
    %4575 = vmatpush1.bf16.msra.mxu0 %v4316
    %4576 = vmatprep.subr.bf16.mxu0 %v4301
    %4577 = vmatpush1.bf16.msra.mxu0 %v4300
    %4578 = vmatprep.subr.bf16.mxu0 %v4285
    %4579 = vmatpush1.bf16.msra.mxu0 %v4284
    %4580 = vmatprep.subr.bf16.mxu0 %v4269
    %4581 = vmatpush1.bf16.msra.mxu0 %v4268
    %4582 = vmatprep.subr.bf16.mxu0 %v4253
    %4583 = vmatpush1.bf16.msra.mxu0 %v4252
    %4584 = vmatprep.subr.bf16.mxu0 %v4237
    %4585 = vmatpush1.bf16.msra.mxu0 %v4236
    %4586 = vmatprep.subr.bf16.mxu0 0
    %4587 = vmatpush2.bf16.msra.mxu0 0
    %4588 = vmatprep.subr.bf16.mxu0 0
    %4589 = vmatpush2.bf16.msra.mxu0 0
    %4590 = vmatprep.subr.bf16.mxu0 0
    %4591 = vmatpush2.bf16.msra.mxu0 0
    %4592 = vmatprep.subr.bf16.mxu0 0
    %4593 = vmatpush2.bf16.msra.mxu0 0
    %4594 = vmatprep.subr.bf16.mxu0 0
    %4595 = vmatpush2.bf16.msra.mxu0 0
    %4596 = vmatprep.subr.bf16.mxu0 0
    %4597 = vmatpush2.bf16.msra.mxu0 0
    %4598 = vmatprep.subr.bf16.mxu0 0
    %4599 = vmatpush2.bf16.msra.mxu0 0
    %4600 = vmatprep.subr.bf16.mxu0 0
    %4601 = vmatpush2.bf16.msra.mxu0 0
    %4602 = vmatprep.mubr.bf16.mxu0 0
    %4603 = vmatmul.mubr.bf16.gmra.mxu0 %v3635
    %v4604 = vpop.f32.mrf.mxu0
    %v4605 = vadd.f32 %v3787, %v4604
    %v4606 = vpop.f32.mrf.mxu0
    %v4607 = vadd.f32 %v3791, %v4606
    %v4608 = vpop.f32.mrf.mxu0
    %v4609 = vpop.f32.mrf.mxu0
    %4610 = vdwg.mxu0
    %4611 = vmatprep.subr.bf16.mxu0 %v4351
    %4612 = vmatpush1.bf16.msra.mxu0 %v4350
    %4613 = vmatprep.subr.bf16.mxu0 %v4335
    %4614 = vmatpush1.bf16.msra.mxu0 %v4334
    %4615 = vmatprep.subr.bf16.mxu0 %v4319
    %4616 = vmatpush1.bf16.msra.mxu0 %v4318
    %4617 = vmatprep.subr.bf16.mxu0 %v4303
    %4618 = vmatpush1.bf16.msra.mxu0 %v4302
    %4619 = vmatprep.subr.bf16.mxu0 %v4287
    %4620 = vmatpush1.bf16.msra.mxu0 %v4286
    %4621 = vmatprep.subr.bf16.mxu0 %v4271
    %4622 = vmatpush1.bf16.msra.mxu0 %v4270
    %4623 = vmatprep.subr.bf16.mxu0 %v4255
    %4624 = vmatpush1.bf16.msra.mxu0 %v4254
    %4625 = vmatprep.subr.bf16.mxu0 %v4239
    %4626 = vmatpush1.bf16.msra.mxu0 %v4238
    %4627 = vmatprep.subr.bf16.mxu0 0
    %4628 = vmatpush2.bf16.msra.mxu0 0
    %4629 = vmatprep.subr.bf16.mxu0 0
    %4630 = vmatpush2.bf16.msra.mxu0 0
    %4631 = vmatprep.subr.bf16.mxu0 0
    %4632 = vmatpush2.bf16.msra.mxu0 0
    %4633 = vmatprep.subr.bf16.mxu0 0
    %4634 = vmatpush2.bf16.msra.mxu0 0
    %4635 = vmatprep.subr.bf16.mxu0 0
    %4636 = vmatpush2.bf16.msra.mxu0 0
    %4637 = vmatprep.subr.bf16.mxu0 0
    %4638 = vmatpush2.bf16.msra.mxu0 0
    %4639 = vmatprep.subr.bf16.mxu0 0
    %4640 = vmatpush2.bf16.msra.mxu0 0
    %4641 = vmatprep.subr.bf16.mxu0 0
    %4642 = vmatpush2.bf16.msra.mxu0 0
    %4643 = vmatprep.mubr.bf16.mxu0 0
    %4644 = vmatmul.mubr.bf16.gmra.mxu0 %v3635
    %v4645 = vpop.f32.mrf.mxu0
    %v4646 = vadd.f32 %v3795, %v4645
    %v4647 = vpop.f32.mrf.mxu0
    %v4648 = vadd.f32 %v3799, %v4647
    %v4649 = vpop.f32.mrf.mxu0
    %v4650 = vpop.f32.mrf.mxu0
    %4651 = vdwg.mxu0
    %4652 = vmatprep.subr.bf16.mxu0 %v4353
    %4653 = vmatpush1.bf16.msra.mxu0 %v4352
    %4654 = vmatprep.subr.bf16.mxu0 %v4337
    %4655 = vmatpush1.bf16.msra.mxu0 %v4336
    %4656 = vmatprep.subr.bf16.mxu0 %v4321
    %4657 = vmatpush1.bf16.msra.mxu0 %v4320
    %4658 = vmatprep.subr.bf16.mxu0 %v4305
    %4659 = vmatpush1.bf16.msra.mxu0 %v4304
    %4660 = vmatprep.subr.bf16.mxu0 %v4289
    %4661 = vmatpush1.bf16.msra.mxu0 %v4288
    %4662 = vmatprep.subr.bf16.mxu0 %v4273
    %4663 = vmatpush1.bf16.msra.mxu0 %v4272
    %4664 = vmatprep.subr.bf16.mxu0 %v4257
    %4665 = vmatpush1.bf16.msra.mxu0 %v4256
    %4666 = vmatprep.subr.bf16.mxu0 %v4241
    %4667 = vmatpush1.bf16.msra.mxu0 %v4240
    %4668 = vmatprep.subr.bf16.mxu0 0
    %4669 = vmatpush2.bf16.msra.mxu0 0
    %4670 = vmatprep.subr.bf16.mxu0 0
    %4671 = vmatpush2.bf16.msra.mxu0 0
    %4672 = vmatprep.subr.bf16.mxu0 0
    %4673 = vmatpush2.bf16.msra.mxu0 0
    %4674 = vmatprep.subr.bf16.mxu0 0
    %4675 = vmatpush2.bf16.msra.mxu0 0
    %4676 = vmatprep.subr.bf16.mxu0 0
    %4677 = vmatpush2.bf16.msra.mxu0 0
    %4678 = vmatprep.subr.bf16.mxu0 0
    %4679 = vmatpush2.bf16.msra.mxu0 0
    %4680 = vmatprep.subr.bf16.mxu0 0
    %4681 = vmatpush2.bf16.msra.mxu0 0
    %4682 = vmatprep.subr.bf16.mxu0 0
    %4683 = vmatpush2.bf16.msra.mxu0 0
    %4684 = vmatprep.mubr.bf16.mxu0 0
    %4685 = vmatmul.mubr.bf16.gmra.mxu0 %v3635
    %v4686 = vpop.f32.mrf.mxu0
    %v4687 = vadd.f32 %v3803, %v4686
    %v4688 = vpop.f32.mrf.mxu0
    %v4689 = vadd.f32 %v3807, %v4688
    %v4690 = vpop.f32.mrf.mxu0
    %v4691 = vpop.f32.mrf.mxu0
    %4692 = vdwg.mxu0
    %4693 = vmatprep.subr.bf16.mxu0 %v4355
    %4694 = vmatpush1.bf16.msra.mxu0 %v4354
    %4695 = vmatprep.subr.bf16.mxu0 %v4339
    %4696 = vmatpush1.bf16.msra.mxu0 %v4338
    %4697 = vmatprep.subr.bf16.mxu0 %v4323
    %4698 = vmatpush1.bf16.msra.mxu0 %v4322
    %4699 = vmatprep.subr.bf16.mxu0 %v4307
    %4700 = vmatpush1.bf16.msra.mxu0 %v4306
    %4701 = vmatprep.subr.bf16.mxu0 %v4291
    %4702 = vmatpush1.bf16.msra.mxu0 %v4290
    %4703 = vmatprep.subr.bf16.mxu0 %v4275
    %4704 = vmatpush1.bf16.msra.mxu0 %v4274
    %4705 = vmatprep.subr.bf16.mxu0 %v4259
    %4706 = vmatpush1.bf16.msra.mxu0 %v4258
    %4707 = vmatprep.subr.bf16.mxu0 %v4243
    %4708 = vmatpush1.bf16.msra.mxu0 %v4242
    %4709 = vmatprep.subr.bf16.mxu0 0
    %4710 = vmatpush2.bf16.msra.mxu0 0
    %4711 = vmatprep.subr.bf16.mxu0 0
    %4712 = vmatpush2.bf16.msra.mxu0 0
    %4713 = vmatprep.subr.bf16.mxu0 0
    %4714 = vmatpush2.bf16.msra.mxu0 0
    %4715 = vmatprep.subr.bf16.mxu0 0
    %4716 = vmatpush2.bf16.msra.mxu0 0
    %4717 = vmatprep.subr.bf16.mxu0 0
    %4718 = vmatpush2.bf16.msra.mxu0 0
    %4719 = vmatprep.subr.bf16.mxu0 0
    %4720 = vmatpush2.bf16.msra.mxu0 0
    %4721 = vmatprep.subr.bf16.mxu0 0
    %4722 = vmatpush2.bf16.msra.mxu0 0
    %4723 = vmatprep.subr.bf16.mxu0 0
    %4724 = vmatpush2.bf16.msra.mxu0 0
    %4725 = vmatprep.mubr.bf16.mxu0 0
    %4726 = vmatmul.mubr.bf16.gmra.mxu0 %v3635
    %v4727 = vpop.f32.mrf.mxu0
    %v4728 = vadd.f32 %v3811, %v4727
    %v4729 = vpop.f32.mrf.mxu0
    %v4730 = vadd.f32 %v3815, %v4729
    %v4731 = vpop.f32.mrf.mxu0
    %v4732 = vpop.f32.mrf.mxu0
    %4733 = vdwg.mxu0
    %4734 = vmatprep.subr.bf16.mxu0 %v4357
    %4735 = vmatpush1.bf16.msra.mxu0 %v4356
    %4736 = vmatprep.subr.bf16.mxu0 %v4341
    %4737 = vmatpush1.bf16.msra.mxu0 %v4340
    %4738 = vmatprep.subr.bf16.mxu0 %v4325
    %4739 = vmatpush1.bf16.msra.mxu0 %v4324
    %4740 = vmatprep.subr.bf16.mxu0 %v4309
    %4741 = vmatpush1.bf16.msra.mxu0 %v4308
    %4742 = vmatprep.subr.bf16.mxu0 %v4293
    %4743 = vmatpush1.bf16.msra.mxu0 %v4292
    %4744 = vmatprep.subr.bf16.mxu0 %v4277
    %4745 = vmatpush1.bf16.msra.mxu0 %v4276
    %4746 = vmatprep.subr.bf16.mxu0 %v4261
    %4747 = vmatpush1.bf16.msra.mxu0 %v4260
    %4748 = vmatprep.subr.bf16.mxu0 %v4245
    %4749 = vmatpush1.bf16.msra.mxu0 %v4244
    %4750 = vmatprep.subr.bf16.mxu0 0
    %4751 = vmatpush2.bf16.msra.mxu0 0
    %4752 = vmatprep.subr.bf16.mxu0 0
    %4753 = vmatpush2.bf16.msra.mxu0 0
    %4754 = vmatprep.subr.bf16.mxu0 0
    %4755 = vmatpush2.bf16.msra.mxu0 0
    %4756 = vmatprep.subr.bf16.mxu0 0
    %4757 = vmatpush2.bf16.msra.mxu0 0
    %4758 = vmatprep.subr.bf16.mxu0 0
    %4759 = vmatpush2.bf16.msra.mxu0 0
    %4760 = vmatprep.subr.bf16.mxu0 0
    %4761 = vmatpush2.bf16.msra.mxu0 0
    %4762 = vmatprep.subr.bf16.mxu0 0
    %4763 = vmatpush2.bf16.msra.mxu0 0
    %4764 = vmatprep.subr.bf16.mxu0 0
    %4765 = vmatpush2.bf16.msra.mxu0 0
    %4766 = vmatprep.mubr.bf16.mxu0 0
    %4767 = vmatmul.mubr.bf16.gmra.mxu0 %v3635
    %v4768 = vpop.f32.mrf.mxu0
    %v4769 = vadd.f32 %v3819, %v4768
    %v4770 = vpop.f32.mrf.mxu0
    %v4771 = vadd.f32 %v3823, %v4770
    %v4772 = vpop.f32.mrf.mxu0
    %v4773 = vpop.f32.mrf.mxu0
    %4774 = vdwg.mxu0
    %4775 = vmatprep.subr.bf16.mxu0 %v4359
    %4776 = vmatpush1.bf16.msra.mxu0 %v4358
    %4777 = vmatprep.subr.bf16.mxu0 %v4343
    %4778 = vmatpush1.bf16.msra.mxu0 %v4342
    %4779 = vmatprep.subr.bf16.mxu0 %v4327
    %4780 = vmatpush1.bf16.msra.mxu0 %v4326
    %4781 = vmatprep.subr.bf16.mxu0 %v4311
    %4782 = vmatpush1.bf16.msra.mxu0 %v4310
    %4783 = vmatprep.subr.bf16.mxu0 %v4295
    %4784 = vmatpush1.bf16.msra.mxu0 %v4294
    %4785 = vmatprep.subr.bf16.mxu0 %v4279
    %4786 = vmatpush1.bf16.msra.mxu0 %v4278
    %4787 = vmatprep.subr.bf16.mxu0 %v4263
    %4788 = vmatpush1.bf16.msra.mxu0 %v4262
    %4789 = vmatprep.subr.bf16.mxu0 %v4247
    %4790 = vmatpush1.bf16.msra.mxu0 %v4246
    %4791 = vmatprep.subr.bf16.mxu0 0
    %4792 = vmatpush2.bf16.msra.mxu0 0
    %4793 = vmatprep.subr.bf16.mxu0 0
    %4794 = vmatpush2.bf16.msra.mxu0 0
    %4795 = vmatprep.subr.bf16.mxu0 0
    %4796 = vmatpush2.bf16.msra.mxu0 0
    %4797 = vmatprep.subr.bf16.mxu0 0
    %4798 = vmatpush2.bf16.msra.mxu0 0
    %4799 = vmatprep.subr.bf16.mxu0 0
    %4800 = vmatpush2.bf16.msra.mxu0 0
    %4801 = vmatprep.subr.bf16.mxu0 0
    %4802 = vmatpush2.bf16.msra.mxu0 0
    %4803 = vmatprep.subr.bf16.mxu0 0
    %4804 = vmatpush2.bf16.msra.mxu0 0
    %4805 = vmatprep.subr.bf16.mxu0 0
    %4806 = vmatpush2.bf16.msra.mxu0 0
    %4807 = vmatprep.mubr.bf16.mxu0 0
    %4808 = vmatmul.mubr.bf16.gmra.mxu0 %v3635
    %v4809 = vpop.f32.mrf.mxu0
    %v4810 = vadd.f32 %v3827, %v4809
    %v4811 = vpop.f32.mrf.mxu0
    %v4812 = vadd.f32 %v3831, %v4811
    %v4813 = vpop.f32.mrf.mxu0
    %v4814 = vpop.f32.mrf.mxu0
    %4815 = vdwg.mxu0
    %v4816 = vmax.f32 %v4523, 0.0
    %v4817 = vmax.f32 %v4525, 0.0
    %v4818 = vmax.f32 %v4564, 0.0
    %v4819 = vmax.f32 %v4566, 0.0
    %v4820 = vmax.f32 %v4605, 0.0
    %v4821 = vmax.f32 %v4607, 0.0
    %v4822 = vmax.f32 %v4646, 0.0
    %v4823 = vmax.f32 %v4648, 0.0
    %v4824 = vmax.f32 %v4687, 0.0
    %v4825 = vmax.f32 %v4689, 0.0
    %v4826 = vmax.f32 %v4728, 0.0
    %v4827 = vmax.f32 %v4730, 0.0
    %v4828 = vmax.f32 %v4769, 0.0
    %v4829 = vmax.f32 %v4771, 0.0
    %v4830 = vmax.f32 %v4810, 0.0
    %v4831 = vmax.f32 %v4812, 0.0
    %s4832 = smul.u32 4, 256
    %s4833 = smul.u32 %s4832, 1
    %s4834 = sshll.u32 %s4833, 4
    %4835 = dma.done %s563, %s4834
    %v4836 = vpack.c.bf16 %v4816, %v4816
    %v4837 = vpack.c.bf16 %v4817, %v4817
    %v4838 = vpack.c.bf16 %v4818, %v4818
    %v4839 = vpack.c.bf16 %v4819, %v4819
    %v4840 = vpack.c.bf16 %v4820, %v4820
    %v4841 = vpack.c.bf16 %v4821, %v4821
    %v4842 = vpack.c.bf16 %v4822, %v4822
    %v4843 = vpack.c.bf16 %v4823, %v4823
    %v4844 = vpack.c.bf16 %v4824, %v4824
    %v4845 = vpack.c.bf16 %v4825, %v4825
    %v4846 = vpack.c.bf16 %v4826, %v4826
    %v4847 = vpack.c.bf16 %v4827, %v4827
    %v4848 = vpack.c.bf16 %v4828, %v4828
    %v4849 = vpack.c.bf16 %v4829, %v4829
    %v4850 = vpack.c.bf16 %v4830, %v4830
    %v4851 = vpack.c.bf16 %v4831, %v4831
    %v4852 = vld [vmem:[#allocation3] sm:$0xf]
    %v4853 = vld [vmem:[#allocation3 + $0x4] sm:$0xf]
    %v4854 = vld [vmem:[#allocation3 + $0x8] sm:$0xf]
    %v4855 = vld [vmem:[#allocation3 + $0xc] sm:$0xf]
    %v4856 = vld [vmem:[#allocation3 + $0x10] sm:$0xf]
    %v4857 = vld [vmem:[#allocation3 + $0x14] sm:$0xf]
    %v4858 = vld [vmem:[#allocation3 + $0x18] sm:$0xf]
    %v4859 = vld [vmem:[#allocation3 + $0x1c] sm:$0xf]
    %v4860 = vld [vmem:[#allocation3 + $0x20] sm:$0xf]
    %v4861 = vld [vmem:[#allocation3 + $0x24] sm:$0xf]
    %v4862 = vld [vmem:[#allocation3 + $0x28] sm:$0xf]
    %v4863 = vld [vmem:[#allocation3 + $0x2c] sm:$0xf]
    %v4864 = vld [vmem:[#allocation3 + $0x30] sm:$0xf]
    %v4865 = vld [vmem:[#allocation3 + $0x34] sm:$0xf]
    %v4866 = vld [vmem:[#allocation3 + $0x38] sm:$0xf]
    %v4867 = vld [vmem:[#allocation3 + $0x3c] sm:$0xf]
    %v4868 = vld [vmem:[#allocation3 + $0x40] sm:$0xf]
    %v4869 = vld [vmem:[#allocation3 + $0x44] sm:$0xf]
    %v4870 = vld [vmem:[#allocation3 + $0x48] sm:$0xf]
    %v4871 = vld [vmem:[#allocation3 + $0x4c] sm:$0xf]
    %v4872 = vld [vmem:[#allocation3 + $0x50] sm:$0xf]
    %v4873 = vld [vmem:[#allocation3 + $0x54] sm:$0xf]
    %v4874 = vld [vmem:[#allocation3 + $0x58] sm:$0xf]
    %v4875 = vld [vmem:[#allocation3 + $0x5c] sm:$0xf]
    %v4876 = vld [vmem:[#allocation3 + $0x60] sm:$0xf]
    %v4877 = vld [vmem:[#allocation3 + $0x64] sm:$0xf]
    %v4878 = vld [vmem:[#allocation3 + $0x68] sm:$0xf]
    %v4879 = vld [vmem:[#allocation3 + $0x6c] sm:$0xf]
    %v4880 = vld [vmem:[#allocation3 + $0x70] sm:$0xf]
    %v4881 = vld [vmem:[#allocation3 + $0x74] sm:$0xf]
    %v4882 = vld [vmem:[#allocation3 + $0x78] sm:$0xf]
    %v4883 = vld [vmem:[#allocation3 + $0x7c] sm:$0xf]
    %v4884 = vld [vmem:[#allocation3 + $0x80] sm:$0xf]
    %v4885 = vld [vmem:[#allocation3 + $0x84] sm:$0xf]
    %v4886 = vld [vmem:[#allocation3 + $0x88] sm:$0xf]
    %v4887 = vld [vmem:[#allocation3 + $0x8c] sm:$0xf]
    %v4888 = vld [vmem:[#allocation3 + $0x90] sm:$0xf]
    %v4889 = vld [vmem:[#allocation3 + $0x94] sm:$0xf]
    %v4890 = vld [vmem:[#allocation3 + $0x98] sm:$0xf]
    %v4891 = vld [vmem:[#allocation3 + $0x9c] sm:$0xf]
    %v4892 = vld [vmem:[#allocation3 + $0xa0] sm:$0xf]
    %v4893 = vld [vmem:[#allocation3 + $0xa4] sm:$0xf]
    %v4894 = vld [vmem:[#allocation3 + $0xa8] sm:$0xf]
    %v4895 = vld [vmem:[#allocation3 + $0xac] sm:$0xf]
    %v4896 = vld [vmem:[#allocation3 + $0xb0] sm:$0xf]
    %v4897 = vld [vmem:[#allocation3 + $0xb4] sm:$0xf]
    %v4898 = vld [vmem:[#allocation3 + $0xb8] sm:$0xf]
    %v4899 = vld [vmem:[#allocation3 + $0xbc] sm:$0xf]
    %v4900 = vld [vmem:[#allocation3 + $0xc0] sm:$0xf]
    %v4901 = vld [vmem:[#allocation3 + $0xc4] sm:$0xf]
    %v4902 = vld [vmem:[#allocation3 + $0xc8] sm:$0xf]
    %v4903 = vld [vmem:[#allocation3 + $0xcc] sm:$0xf]
    %v4904 = vld [vmem:[#allocation3 + $0xd0] sm:$0xf]
    %v4905 = vld [vmem:[#allocation3 + $0xd4] sm:$0xf]
    %v4906 = vld [vmem:[#allocation3 + $0xd8] sm:$0xf]
    %v4907 = vld [vmem:[#allocation3 + $0xdc] sm:$0xf]
    %v4908 = vld [vmem:[#allocation3 + $0xe0] sm:$0xf]
    %v4909 = vld [vmem:[#allocation3 + $0xe4] sm:$0xf]
    %v4910 = vld [vmem:[#allocation3 + $0xe8] sm:$0xf]
    %v4911 = vld [vmem:[#allocation3 + $0xec] sm:$0xf]
    %v4912 = vld [vmem:[#allocation3 + $0xf0] sm:$0xf]
    %v4913 = vld [vmem:[#allocation3 + $0xf4] sm:$0xf]
    %v4914 = vld [vmem:[#allocation3 + $0xf8] sm:$0xf]
    %v4915 = vld [vmem:[#allocation3 + $0xfc] sm:$0xf]
    %v4916 = vld [vmem:[#allocation3 + $0x100] sm:$0xf]
    %v4917 = vld [vmem:[#allocation3 + $0x104] sm:$0xf]
    %v4918 = vld [vmem:[#allocation3 + $0x108] sm:$0xf]
    %v4919 = vld [vmem:[#allocation3 + $0x10c] sm:$0xf]
    %v4920 = vld [vmem:[#allocation3 + $0x110] sm:$0xf]
    %v4921 = vld [vmem:[#allocation3 + $0x114] sm:$0xf]
    %v4922 = vld [vmem:[#allocation3 + $0x118] sm:$0xf]
    %v4923 = vld [vmem:[#allocation3 + $0x11c] sm:$0xf]
    %v4924 = vld [vmem:[#allocation3 + $0x120] sm:$0xf]
    %v4925 = vld [vmem:[#allocation3 + $0x124] sm:$0xf]
    %v4926 = vld [vmem:[#allocation3 + $0x128] sm:$0xf]
    %v4927 = vld [vmem:[#allocation3 + $0x12c] sm:$0xf]
    %v4928 = vld [vmem:[#allocation3 + $0x130] sm:$0xf]
    %v4929 = vld [vmem:[#allocation3 + $0x134] sm:$0xf]
    %v4930 = vld [vmem:[#allocation3 + $0x138] sm:$0xf]
    %v4931 = vld [vmem:[#allocation3 + $0x13c] sm:$0xf]
    %v4932 = vld [vmem:[#allocation3 + $0x140] sm:$0xf]
    %v4933 = vld [vmem:[#allocation3 + $0x144] sm:$0xf]
    %v4934 = vld [vmem:[#allocation3 + $0x148] sm:$0xf]
    %v4935 = vld [vmem:[#allocation3 + $0x14c] sm:$0xf]
    %v4936 = vld [vmem:[#allocation3 + $0x150] sm:$0xf]
    %v4937 = vld [vmem:[#allocation3 + $0x154] sm:$0xf]
    %v4938 = vld [vmem:[#allocation3 + $0x158] sm:$0xf]
    %v4939 = vld [vmem:[#allocation3 + $0x15c] sm:$0xf]
    %v4940 = vld [vmem:[#allocation3 + $0x160] sm:$0xf]
    %v4941 = vld [vmem:[#allocation3 + $0x164] sm:$0xf]
    %v4942 = vld [vmem:[#allocation3 + $0x168] sm:$0xf]
    %v4943 = vld [vmem:[#allocation3 + $0x16c] sm:$0xf]
    %v4944 = vld [vmem:[#allocation3 + $0x170] sm:$0xf]
    %v4945 = vld [vmem:[#allocation3 + $0x174] sm:$0xf]
    %v4946 = vld [vmem:[#allocation3 + $0x178] sm:$0xf]
    %v4947 = vld [vmem:[#allocation3 + $0x17c] sm:$0xf]
    %v4948 = vld [vmem:[#allocation3 + $0x180] sm:$0xf]
    %v4949 = vld [vmem:[#allocation3 + $0x184] sm:$0xf]
    %v4950 = vld [vmem:[#allocation3 + $0x188] sm:$0xf]
    %v4951 = vld [vmem:[#allocation3 + $0x18c] sm:$0xf]
    %v4952 = vld [vmem:[#allocation3 + $0x190] sm:$0xf]
    %v4953 = vld [vmem:[#allocation3 + $0x194] sm:$0xf]
    %v4954 = vld [vmem:[#allocation3 + $0x198] sm:$0xf]
    %v4955 = vld [vmem:[#allocation3 + $0x19c] sm:$0xf]
    %v4956 = vld [vmem:[#allocation3 + $0x1a0] sm:$0xf]
    %v4957 = vld [vmem:[#allocation3 + $0x1a4] sm:$0xf]
    %v4958 = vld [vmem:[#allocation3 + $0x1a8] sm:$0xf]
    %v4959 = vld [vmem:[#allocation3 + $0x1ac] sm:$0xf]
    %v4960 = vld [vmem:[#allocation3 + $0x1b0] sm:$0xf]
    %v4961 = vld [vmem:[#allocation3 + $0x1b4] sm:$0xf]
    %v4962 = vld [vmem:[#allocation3 + $0x1b8] sm:$0xf]
    %v4963 = vld [vmem:[#allocation3 + $0x1bc] sm:$0xf]
    %v4964 = vld [vmem:[#allocation3 + $0x1c0] sm:$0xf]
    %v4965 = vld [vmem:[#allocation3 + $0x1c4] sm:$0xf]
    %v4966 = vld [vmem:[#allocation3 + $0x1c8] sm:$0xf]
    %v4967 = vld [vmem:[#allocation3 + $0x1cc] sm:$0xf]
    %v4968 = vld [vmem:[#allocation3 + $0x1d0] sm:$0xf]
    %v4969 = vld [vmem:[#allocation3 + $0x1d4] sm:$0xf]
    %v4970 = vld [vmem:[#allocation3 + $0x1d8] sm:$0xf]
    %v4971 = vld [vmem:[#allocation3 + $0x1dc] sm:$0xf]
    %v4972 = vld [vmem:[#allocation3 + $0x1e0] sm:$0xf]
    %v4973 = vld [vmem:[#allocation3 + $0x1e4] sm:$0xf]
    %v4974 = vld [vmem:[#allocation3 + $0x1e8] sm:$0xf]
    %v4975 = vld [vmem:[#allocation3 + $0x1ec] sm:$0xf]
    %v4976 = vld [vmem:[#allocation3 + $0x1f0] sm:$0xf]
    %v4977 = vld [vmem:[#allocation3 + $0x1f4] sm:$0xf]
    %v4978 = vld [vmem:[#allocation3 + $0x1f8] sm:$0xf]
    %v4979 = vld [vmem:[#allocation3 + $0x1fc] sm:$0xf]
    %v4980 = vld [vmem:[#allocation3 + $0x200] sm:$0xf]
    %v4981 = vld [vmem:[#allocation3 + $0x204] sm:$0xf]
    %v4982 = vld [vmem:[#allocation3 + $0x208] sm:$0xf]
    %v4983 = vld [vmem:[#allocation3 + $0x20c] sm:$0xf]
    %v4984 = vld [vmem:[#allocation3 + $0x210] sm:$0xf]
    %v4985 = vld [vmem:[#allocation3 + $0x214] sm:$0xf]
    %v4986 = vld [vmem:[#allocation3 + $0x218] sm:$0xf]
    %v4987 = vld [vmem:[#allocation3 + $0x21c] sm:$0xf]
    %v4988 = vld [vmem:[#allocation3 + $0x220] sm:$0xf]
    %v4989 = vld [vmem:[#allocation3 + $0x224] sm:$0xf]
    %v4990 = vld [vmem:[#allocation3 + $0x228] sm:$0xf]
    %v4991 = vld [vmem:[#allocation3 + $0x22c] sm:$0xf]
    %v4992 = vld [vmem:[#allocation3 + $0x230] sm:$0xf]
    %v4993 = vld [vmem:[#allocation3 + $0x234] sm:$0xf]
    %v4994 = vld [vmem:[#allocation3 + $0x238] sm:$0xf]
    %v4995 = vld [vmem:[#allocation3 + $0x23c] sm:$0xf]
    %v4996 = vld [vmem:[#allocation3 + $0x240] sm:$0xf]
    %v4997 = vld [vmem:[#allocation3 + $0x244] sm:$0xf]
    %v4998 = vld [vmem:[#allocation3 + $0x248] sm:$0xf]
    %v4999 = vld [vmem:[#allocation3 + $0x24c] sm:$0xf]
    %v5000 = vld [vmem:[#allocation3 + $0x250] sm:$0xf]
    %v5001 = vld [vmem:[#allocation3 + $0x254] sm:$0xf]
    %v5002 = vld [vmem:[#allocation3 + $0x258] sm:$0xf]
    %v5003 = vld [vmem:[#allocation3 + $0x25c] sm:$0xf]
    %v5004 = vld [vmem:[#allocation3 + $0x260] sm:$0xf]
    %v5005 = vld [vmem:[#allocation3 + $0x264] sm:$0xf]
    %v5006 = vld [vmem:[#allocation3 + $0x268] sm:$0xf]
    %v5007 = vld [vmem:[#allocation3 + $0x26c] sm:$0xf]
    %v5008 = vld [vmem:[#allocation3 + $0x270] sm:$0xf]
    %v5009 = vld [vmem:[#allocation3 + $0x274] sm:$0xf]
    %v5010 = vld [vmem:[#allocation3 + $0x278] sm:$0xf]
    %v5011 = vld [vmem:[#allocation3 + $0x27c] sm:$0xf]
    %v5012 = vld [vmem:[#allocation3 + $0x280] sm:$0xf]
    %v5013 = vld [vmem:[#allocation3 + $0x284] sm:$0xf]
    %v5014 = vld [vmem:[#allocation3 + $0x288] sm:$0xf]
    %v5015 = vld [vmem:[#allocation3 + $0x28c] sm:$0xf]
    %v5016 = vld [vmem:[#allocation3 + $0x290] sm:$0xf]
    %v5017 = vld [vmem:[#allocation3 + $0x294] sm:$0xf]
    %v5018 = vld [vmem:[#allocation3 + $0x298] sm:$0xf]
    %v5019 = vld [vmem:[#allocation3 + $0x29c] sm:$0xf]
    %v5020 = vld [vmem:[#allocation3 + $0x2a0] sm:$0xf]
    %v5021 = vld [vmem:[#allocation3 + $0x2a4] sm:$0xf]
    %v5022 = vld [vmem:[#allocation3 + $0x2a8] sm:$0xf]
    %v5023 = vld [vmem:[#allocation3 + $0x2ac] sm:$0xf]
    %v5024 = vld [vmem:[#allocation3 + $0x2b0] sm:$0xf]
    %v5025 = vld [vmem:[#allocation3 + $0x2b4] sm:$0xf]
    %v5026 = vld [vmem:[#allocation3 + $0x2b8] sm:$0xf]
    %v5027 = vld [vmem:[#allocation3 + $0x2bc] sm:$0xf]
    %v5028 = vld [vmem:[#allocation3 + $0x2c0] sm:$0xf]
    %v5029 = vld [vmem:[#allocation3 + $0x2c4] sm:$0xf]
    %v5030 = vld [vmem:[#allocation3 + $0x2c8] sm:$0xf]
    %v5031 = vld [vmem:[#allocation3 + $0x2cc] sm:$0xf]
    %v5032 = vld [vmem:[#allocation3 + $0x2d0] sm:$0xf]
    %v5033 = vld [vmem:[#allocation3 + $0x2d4] sm:$0xf]
    %v5034 = vld [vmem:[#allocation3 + $0x2d8] sm:$0xf]
    %v5035 = vld [vmem:[#allocation3 + $0x2dc] sm:$0xf]
    %v5036 = vld [vmem:[#allocation3 + $0x2e0] sm:$0xf]
    %v5037 = vld [vmem:[#allocation3 + $0x2e4] sm:$0xf]
    %v5038 = vld [vmem:[#allocation3 + $0x2e8] sm:$0xf]
    %v5039 = vld [vmem:[#allocation3 + $0x2ec] sm:$0xf]
    %v5040 = vld [vmem:[#allocation3 + $0x2f0] sm:$0xf]
    %v5041 = vld [vmem:[#allocation3 + $0x2f4] sm:$0xf]
    %v5042 = vld [vmem:[#allocation3 + $0x2f8] sm:$0xf]
    %v5043 = vld [vmem:[#allocation3 + $0x2fc] sm:$0xf]
    %v5044 = vld [vmem:[#allocation3 + $0x300] sm:$0xf]
    %v5045 = vld [vmem:[#allocation3 + $0x304] sm:$0xf]
    %v5046 = vld [vmem:[#allocation3 + $0x308] sm:$0xf]
    %v5047 = vld [vmem:[#allocation3 + $0x30c] sm:$0xf]
    %v5048 = vld [vmem:[#allocation3 + $0x310] sm:$0xf]
    %v5049 = vld [vmem:[#allocation3 + $0x314] sm:$0xf]
    %v5050 = vld [vmem:[#allocation3 + $0x318] sm:$0xf]
    %v5051 = vld [vmem:[#allocation3 + $0x31c] sm:$0xf]
    %v5052 = vld [vmem:[#allocation3 + $0x320] sm:$0xf]
    %v5053 = vld [vmem:[#allocation3 + $0x324] sm:$0xf]
    %v5054 = vld [vmem:[#allocation3 + $0x328] sm:$0xf]
    %v5055 = vld [vmem:[#allocation3 + $0x32c] sm:$0xf]
    %v5056 = vld [vmem:[#allocation3 + $0x330] sm:$0xf]
    %v5057 = vld [vmem:[#allocation3 + $0x334] sm:$0xf]
    %v5058 = vld [vmem:[#allocation3 + $0x338] sm:$0xf]
    %v5059 = vld [vmem:[#allocation3 + $0x33c] sm:$0xf]
    %v5060 = vld [vmem:[#allocation3 + $0x340] sm:$0xf]
    %v5061 = vld [vmem:[#allocation3 + $0x344] sm:$0xf]
    %v5062 = vld [vmem:[#allocation3 + $0x348] sm:$0xf]
    %v5063 = vld [vmem:[#allocation3 + $0x34c] sm:$0xf]
    %v5064 = vld [vmem:[#allocation3 + $0x350] sm:$0xf]
    %v5065 = vld [vmem:[#allocation3 + $0x354] sm:$0xf]
    %v5066 = vld [vmem:[#allocation3 + $0x358] sm:$0xf]
    %v5067 = vld [vmem:[#allocation3 + $0x35c] sm:$0xf]
    %v5068 = vld [vmem:[#allocation3 + $0x360] sm:$0xf]
    %v5069 = vld [vmem:[#allocation3 + $0x364] sm:$0xf]
    %v5070 = vld [vmem:[#allocation3 + $0x368] sm:$0xf]
    %v5071 = vld [vmem:[#allocation3 + $0x36c] sm:$0xf]
    %v5072 = vld [vmem:[#allocation3 + $0x370] sm:$0xf]
    %v5073 = vld [vmem:[#allocation3 + $0x374] sm:$0xf]
    %v5074 = vld [vmem:[#allocation3 + $0x378] sm:$0xf]
    %v5075 = vld [vmem:[#allocation3 + $0x37c] sm:$0xf]
    %v5076 = vld [vmem:[#allocation3 + $0x380] sm:$0xf]
    %v5077 = vld [vmem:[#allocation3 + $0x384] sm:$0xf]
    %v5078 = vld [vmem:[#allocation3 + $0x388] sm:$0xf]
    %v5079 = vld [vmem:[#allocation3 + $0x38c] sm:$0xf]
    %v5080 = vld [vmem:[#allocation3 + $0x390] sm:$0xf]
    %v5081 = vld [vmem:[#allocation3 + $0x394] sm:$0xf]
    %v5082 = vld [vmem:[#allocation3 + $0x398] sm:$0xf]
    %v5083 = vld [vmem:[#allocation3 + $0x39c] sm:$0xf]
    %v5084 = vld [vmem:[#allocation3 + $0x3a0] sm:$0xf]
    %v5085 = vld [vmem:[#allocation3 + $0x3a4] sm:$0xf]
    %v5086 = vld [vmem:[#allocation3 + $0x3a8] sm:$0xf]
    %v5087 = vld [vmem:[#allocation3 + $0x3ac] sm:$0xf]
    %v5088 = vld [vmem:[#allocation3 + $0x3b0] sm:$0xf]
    %v5089 = vld [vmem:[#allocation3 + $0x3b4] sm:$0xf]
    %v5090 = vld [vmem:[#allocation3 + $0x3b8] sm:$0xf]
    %v5091 = vld [vmem:[#allocation3 + $0x3bc] sm:$0xf]
    %v5092 = vld [vmem:[#allocation3 + $0x3c0] sm:$0xf]
    %v5093 = vld [vmem:[#allocation3 + $0x3c4] sm:$0xf]
    %v5094 = vld [vmem:[#allocation3 + $0x3c8] sm:$0xf]
    %v5095 = vld [vmem:[#allocation3 + $0x3cc] sm:$0xf]
    %v5096 = vld [vmem:[#allocation3 + $0x3d0] sm:$0xf]
    %v5097 = vld [vmem:[#allocation3 + $0x3d4] sm:$0xf]
    %v5098 = vld [vmem:[#allocation3 + $0x3d8] sm:$0xf]
    %v5099 = vld [vmem:[#allocation3 + $0x3dc] sm:$0xf]
    %v5100 = vld [vmem:[#allocation3 + $0x3e0] sm:$0xf]
    %v5101 = vld [vmem:[#allocation3 + $0x3e4] sm:$0xf]
    %v5102 = vld [vmem:[#allocation3 + $0x3e8] sm:$0xf]
    %v5103 = vld [vmem:[#allocation3 + $0x3ec] sm:$0xf]
    %v5104 = vld [vmem:[#allocation3 + $0x3f0] sm:$0xf]
    %v5105 = vld [vmem:[#allocation3 + $0x3f4] sm:$0xf]
    %v5106 = vld [vmem:[#allocation3 + $0x3f8] sm:$0xf]
    %v5107 = vld [vmem:[#allocation3 + $0x3fc] sm:$0xf]
    %v5108 = vld [vmem:[#allocation21] sm:$0x1]
    %v5110 = vlaneseq
    %v5111 = vshrl.u32 %v5110, 7
    %v5112 = vsub.s32 0, %v5111
    %v5113 = vrot.slane %v5108, %v5112
    %v5371 = vunpack.c.l.b16 %v4852
    %v5372 = vunpack.c.l.b16 %v4853
    %v5373 = vunpack.c.l.b16 %v4854
    %v5374 = vunpack.c.l.b16 %v4855
    %v5375 = vunpack.c.l.b16 %v4856
    %v5376 = vunpack.c.l.b16 %v4857
    %v5377 = vunpack.c.l.b16 %v4858
    %v5378 = vunpack.c.l.b16 %v4859
    %v5379 = vunpack.c.l.b16 %v4860
    %v5380 = vunpack.c.l.b16 %v4861
    %v5381 = vunpack.c.l.b16 %v4862
    %v5382 = vunpack.c.l.b16 %v4863
    %v5383 = vunpack.c.l.b16 %v4864
    %v5384 = vunpack.c.l.b16 %v4865
    %v5385 = vunpack.c.l.b16 %v4866
    %v5386 = vunpack.c.l.b16 %v4867
    %v5387 = vunpack.c.l.b16 %v4868
    %v5388 = vunpack.c.l.b16 %v4869
    %v5389 = vunpack.c.l.b16 %v4870
    %v5390 = vunpack.c.l.b16 %v4871
    %v5391 = vunpack.c.l.b16 %v4872
    %v5392 = vunpack.c.l.b16 %v4873
    %v5393 = vunpack.c.l.b16 %v4874
    %v5394 = vunpack.c.l.b16 %v4875
    %v5395 = vunpack.c.l.b16 %v4876
    %v5396 = vunpack.c.l.b16 %v4877
    %v5397 = vunpack.c.l.b16 %v4878
    %v5398 = vunpack.c.l.b16 %v4879
    %v5399 = vunpack.c.l.b16 %v4880
    %v5400 = vunpack.c.l.b16 %v4881
    %v5401 = vunpack.c.l.b16 %v4882
    %v5402 = vunpack.c.l.b16 %v4883
    %v5403 = vunpack.c.l.b16 %v4884
    %v5404 = vunpack.c.l.b16 %v4885
    %v5405 = vunpack.c.l.b16 %v4886
    %v5406 = vunpack.c.l.b16 %v4887
    %v5407 = vunpack.c.l.b16 %v4888
    %v5408 = vunpack.c.l.b16 %v4889
    %v5409 = vunpack.c.l.b16 %v4890
    %v5410 = vunpack.c.l.b16 %v4891
    %v5411 = vunpack.c.l.b16 %v4892
    %v5412 = vunpack.c.l.b16 %v4893
    %v5413 = vunpack.c.l.b16 %v4894
    %v5414 = vunpack.c.l.b16 %v4895
    %v5415 = vunpack.c.l.b16 %v4896
    %v5416 = vunpack.c.l.b16 %v4897
    %v5417 = vunpack.c.l.b16 %v4898
    %v5418 = vunpack.c.l.b16 %v4899
    %v5419 = vunpack.c.l.b16 %v4900
    %v5420 = vunpack.c.l.b16 %v4901
    %v5421 = vunpack.c.l.b16 %v4902
    %v5422 = vunpack.c.l.b16 %v4903
    %v5423 = vunpack.c.l.b16 %v4904
    %v5424 = vunpack.c.l.b16 %v4905
    %v5425 = vunpack.c.l.b16 %v4906
    %v5426 = vunpack.c.l.b16 %v4907
    %v5427 = vunpack.c.l.b16 %v4908
    %v5428 = vunpack.c.l.b16 %v4909
    %v5429 = vunpack.c.l.b16 %v4910
    %v5430 = vunpack.c.l.b16 %v4911
    %v5431 = vunpack.c.l.b16 %v4912
    %v5432 = vunpack.c.l.b16 %v4913
    %v5433 = vunpack.c.l.b16 %v4914
    %v5434 = vunpack.c.l.b16 %v4915
    %v5435 = vunpack.c.l.b16 %v4916
    %v5436 = vunpack.c.l.b16 %v4917
    %v5437 = vunpack.c.l.b16 %v4918
    %v5438 = vunpack.c.l.b16 %v4919
    %v5439 = vunpack.c.l.b16 %v4920
    %v5440 = vunpack.c.l.b16 %v4921
    %v5441 = vunpack.c.l.b16 %v4922
    %v5442 = vunpack.c.l.b16 %v4923
    %v5443 = vunpack.c.l.b16 %v4924
    %v5444 = vunpack.c.l.b16 %v4925
    %v5445 = vunpack.c.l.b16 %v4926
    %v5446 = vunpack.c.l.b16 %v4927
    %v5447 = vunpack.c.l.b16 %v4928
    %v5448 = vunpack.c.l.b16 %v4929
    %v5449 = vunpack.c.l.b16 %v4930
    %v5450 = vunpack.c.l.b16 %v4931
    %v5451 = vunpack.c.l.b16 %v4932
    %v5452 = vunpack.c.l.b16 %v4933
    %v5453 = vunpack.c.l.b16 %v4934
    %v5454 = vunpack.c.l.b16 %v4935
    %v5455 = vunpack.c.l.b16 %v4936
    %v5456 = vunpack.c.l.b16 %v4937
    %v5457 = vunpack.c.l.b16 %v4938
    %v5458 = vunpack.c.l.b16 %v4939
    %v5459 = vunpack.c.l.b16 %v4940
    %v5460 = vunpack.c.l.b16 %v4941
    %v5461 = vunpack.c.l.b16 %v4942
    %v5462 = vunpack.c.l.b16 %v4943
    %v5463 = vunpack.c.l.b16 %v4944
    %v5464 = vunpack.c.l.b16 %v4945
    %v5465 = vunpack.c.l.b16 %v4946
    %v5466 = vunpack.c.l.b16 %v4947
    %v5467 = vunpack.c.l.b16 %v4948
    %v5468 = vunpack.c.l.b16 %v4949
    %v5469 = vunpack.c.l.b16 %v4950
    %v5470 = vunpack.c.l.b16 %v4951
    %v5471 = vunpack.c.l.b16 %v4952
    %v5472 = vunpack.c.l.b16 %v4953
    %v5473 = vunpack.c.l.b16 %v4954
    %v5474 = vunpack.c.l.b16 %v4955
    %v5475 = vunpack.c.l.b16 %v4956
    %v5476 = vunpack.c.l.b16 %v4957
    %v5477 = vunpack.c.l.b16 %v4958
    %v5478 = vunpack.c.l.b16 %v4959
    %v5479 = vunpack.c.l.b16 %v4960
    %v5480 = vunpack.c.l.b16 %v4961
    %v5481 = vunpack.c.l.b16 %v4962
    %v5482 = vunpack.c.l.b16 %v4963
    %v5483 = vunpack.c.l.b16 %v4964
    %v5484 = vunpack.c.l.b16 %v4965
    %v5485 = vunpack.c.l.b16 %v4966
    %v5486 = vunpack.c.l.b16 %v4967
    %v5487 = vunpack.c.l.b16 %v4968
    %v5488 = vunpack.c.l.b16 %v4969
    %v5489 = vunpack.c.l.b16 %v4970
    %v5490 = vunpack.c.l.b16 %v4971
    %v5491 = vunpack.c.l.b16 %v4972
    %v5492 = vunpack.c.l.b16 %v4973
    %v5493 = vunpack.c.l.b16 %v4974
    %v5494 = vunpack.c.l.b16 %v4975
    %v5495 = vunpack.c.l.b16 %v4976
    %v5496 = vunpack.c.l.b16 %v4977
    %v5497 = vunpack.c.l.b16 %v4978
    %v5498 = vunpack.c.l.b16 %v4979
    %v5499 = vunpack.c.l.b16 %v4980
    %v5500 = vunpack.c.l.b16 %v4981
    %v5501 = vunpack.c.l.b16 %v4982
    %v5502 = vunpack.c.l.b16 %v4983
    %v5503 = vunpack.c.l.b16 %v4984
    %v5504 = vunpack.c.l.b16 %v4985
    %v5505 = vunpack.c.l.b16 %v4986
    %v5506 = vunpack.c.l.b16 %v4987
    %v5507 = vunpack.c.l.b16 %v4988
    %v5508 = vunpack.c.l.b16 %v4989
    %v5509 = vunpack.c.l.b16 %v4990
    %v5510 = vunpack.c.l.b16 %v4991
    %v5511 = vunpack.c.l.b16 %v4992
    %v5512 = vunpack.c.l.b16 %v4993
    %v5513 = vunpack.c.l.b16 %v4994
    %v5514 = vunpack.c.l.b16 %v4995
    %v5515 = vunpack.c.l.b16 %v4996
    %v5516 = vunpack.c.l.b16 %v4997
    %v5517 = vunpack.c.l.b16 %v4998
    %v5518 = vunpack.c.l.b16 %v4999
    %v5519 = vunpack.c.l.b16 %v5000
    %v5520 = vunpack.c.l.b16 %v5001
    %v5521 = vunpack.c.l.b16 %v5002
    %v5522 = vunpack.c.l.b16 %v5003
    %v5523 = vunpack.c.l.b16 %v5004
    %v5524 = vunpack.c.l.b16 %v5005
    %v5525 = vunpack.c.l.b16 %v5006
    %v5526 = vunpack.c.l.b16 %v5007
    %v5527 = vunpack.c.l.b16 %v5008
    %v5528 = vunpack.c.l.b16 %v5009
    %v5529 = vunpack.c.l.b16 %v5010
    %v5530 = vunpack.c.l.b16 %v5011
    %v5531 = vunpack.c.l.b16 %v5012
    %v5532 = vunpack.c.l.b16 %v5013
    %v5533 = vunpack.c.l.b16 %v5014
    %v5534 = vunpack.c.l.b16 %v5015
    %v5535 = vunpack.c.l.b16 %v5016
    %v5536 = vunpack.c.l.b16 %v5017
    %v5537 = vunpack.c.l.b16 %v5018
    %v5538 = vunpack.c.l.b16 %v5019
    %v5539 = vunpack.c.l.b16 %v5020
    %v5540 = vunpack.c.l.b16 %v5021
    %v5541 = vunpack.c.l.b16 %v5022
    %v5542 = vunpack.c.l.b16 %v5023
    %v5543 = vunpack.c.l.b16 %v5024
    %v5544 = vunpack.c.l.b16 %v5025
    %v5545 = vunpack.c.l.b16 %v5026
    %v5546 = vunpack.c.l.b16 %v5027
    %v5547 = vunpack.c.l.b16 %v5028
    %v5548 = vunpack.c.l.b16 %v5029
    %v5549 = vunpack.c.l.b16 %v5030
    %v5550 = vunpack.c.l.b16 %v5031
    %v5551 = vunpack.c.l.b16 %v5032
    %v5552 = vunpack.c.l.b16 %v5033
    %v5553 = vunpack.c.l.b16 %v5034
    %v5554 = vunpack.c.l.b16 %v5035
    %v5555 = vunpack.c.l.b16 %v5036
    %v5556 = vunpack.c.l.b16 %v5037
    %v5557 = vunpack.c.l.b16 %v5038
    %v5558 = vunpack.c.l.b16 %v5039
    %v5559 = vunpack.c.l.b16 %v5040
    %v5560 = vunpack.c.l.b16 %v5041
    %v5561 = vunpack.c.l.b16 %v5042
    %v5562 = vunpack.c.l.b16 %v5043
    %v5563 = vunpack.c.l.b16 %v5044
    %v5564 = vunpack.c.l.b16 %v5045
    %v5565 = vunpack.c.l.b16 %v5046
    %v5566 = vunpack.c.l.b16 %v5047
    %v5567 = vunpack.c.l.b16 %v5048
    %v5568 = vunpack.c.l.b16 %v5049
    %v5569 = vunpack.c.l.b16 %v5050
    %v5570 = vunpack.c.l.b16 %v5051
    %v5571 = vunpack.c.l.b16 %v5052
    %v5572 = vunpack.c.l.b16 %v5053
    %v5573 = vunpack.c.l.b16 %v5054
    %v5574 = vunpack.c.l.b16 %v5055
    %v5575 = vunpack.c.l.b16 %v5056
    %v5576 = vunpack.c.l.b16 %v5057
    %v5577 = vunpack.c.l.b16 %v5058
    %v5578 = vunpack.c.l.b16 %v5059
    %v5579 = vunpack.c.l.b16 %v5060
    %v5580 = vunpack.c.l.b16 %v5061
    %v5581 = vunpack.c.l.b16 %v5062
    %v5582 = vunpack.c.l.b16 %v5063
    %v5583 = vunpack.c.l.b16 %v5064
    %v5584 = vunpack.c.l.b16 %v5065
    %v5585 = vunpack.c.l.b16 %v5066
    %v5586 = vunpack.c.l.b16 %v5067
    %v5587 = vunpack.c.l.b16 %v5068
    %v5588 = vunpack.c.l.b16 %v5069
    %v5589 = vunpack.c.l.b16 %v5070
    %v5590 = vunpack.c.l.b16 %v5071
    %v5591 = vunpack.c.l.b16 %v5072
    %v5592 = vunpack.c.l.b16 %v5073
    %v5593 = vunpack.c.l.b16 %v5074
    %v5594 = vunpack.c.l.b16 %v5075
    %v5595 = vunpack.c.l.b16 %v5076
    %v5596 = vunpack.c.l.b16 %v5077
    %v5597 = vunpack.c.l.b16 %v5078
    %v5598 = vunpack.c.l.b16 %v5079
    %v5599 = vunpack.c.l.b16 %v5080
    %v5600 = vunpack.c.l.b16 %v5081
    %v5601 = vunpack.c.l.b16 %v5082
    %v5602 = vunpack.c.l.b16 %v5083
    %v5603 = vunpack.c.l.b16 %v5084
    %v5604 = vunpack.c.l.b16 %v5085
    %v5605 = vunpack.c.l.b16 %v5086
    %v5606 = vunpack.c.l.b16 %v5087
    %v5607 = vunpack.c.l.b16 %v5088
    %v5608 = vunpack.c.l.b16 %v5089
    %v5609 = vunpack.c.l.b16 %v5090
    %v5610 = vunpack.c.l.b16 %v5091
    %v5611 = vunpack.c.l.b16 %v5092
    %v5612 = vunpack.c.l.b16 %v5093
    %v5613 = vunpack.c.l.b16 %v5094
    %v5614 = vunpack.c.l.b16 %v5095
    %v5615 = vunpack.c.l.b16 %v5096
    %v5616 = vunpack.c.l.b16 %v5097
    %v5617 = vunpack.c.l.b16 %v5098
    %v5618 = vunpack.c.l.b16 %v5099
    %v5619 = vunpack.c.l.b16 %v5100
    %v5620 = vunpack.c.l.b16 %v5101
    %v5621 = vunpack.c.l.b16 %v5102
    %v5622 = vunpack.c.l.b16 %v5103
    %v5623 = vunpack.c.l.b16 %v5104
    %v5624 = vunpack.c.l.b16 %v5105
    %v5625 = vunpack.c.l.b16 %v5106
    %v5626 = vunpack.c.l.b16 %v5107
    %v5627 = vpack.c.b16 %v5372, %v5371
    %v5628 = vpack.c.b16 %v5374, %v5373
    %v5629 = vpack.c.b16 %v5376, %v5375
    %v5630 = vpack.c.b16 %v5378, %v5377
    %v5631 = vpack.c.b16 %v5380, %v5379
    %v5632 = vpack.c.b16 %v5382, %v5381
    %v5633 = vpack.c.b16 %v5384, %v5383
    %v5634 = vpack.c.b16 %v5386, %v5385
    %v5635 = vpack.c.b16 %v5388, %v5387
    %v5636 = vpack.c.b16 %v5390, %v5389
    %v5637 = vpack.c.b16 %v5392, %v5391
    %v5638 = vpack.c.b16 %v5394, %v5393
    %v5639 = vpack.c.b16 %v5396, %v5395
    %v5640 = vpack.c.b16 %v5398, %v5397
    %v5641 = vpack.c.b16 %v5400, %v5399
    %v5642 = vpack.c.b16 %v5402, %v5401
    %v5643 = vpack.c.b16 %v5404, %v5403
    %v5644 = vpack.c.b16 %v5406, %v5405
    %v5645 = vpack.c.b16 %v5408, %v5407
    %v5646 = vpack.c.b16 %v5410, %v5409
    %v5647 = vpack.c.b16 %v5412, %v5411
    %v5648 = vpack.c.b16 %v5414, %v5413
    %v5649 = vpack.c.b16 %v5416, %v5415
    %v5650 = vpack.c.b16 %v5418, %v5417
    %v5651 = vpack.c.b16 %v5420, %v5419
    %v5652 = vpack.c.b16 %v5422, %v5421
    %v5653 = vpack.c.b16 %v5424, %v5423
    %v5654 = vpack.c.b16 %v5426, %v5425
    %v5655 = vpack.c.b16 %v5428, %v5427
    %v5656 = vpack.c.b16 %v5430, %v5429
    %v5657 = vpack.c.b16 %v5432, %v5431
    %v5658 = vpack.c.b16 %v5434, %v5433
    %v5659 = vpack.c.b16 %v5436, %v5435
    %v5660 = vpack.c.b16 %v5438, %v5437
    %v5661 = vpack.c.b16 %v5440, %v5439
    %v5662 = vpack.c.b16 %v5442, %v5441
    %v5663 = vpack.c.b16 %v5444, %v5443
    %v5664 = vpack.c.b16 %v5446, %v5445
    %v5665 = vpack.c.b16 %v5448, %v5447
    %v5666 = vpack.c.b16 %v5450, %v5449
    %v5667 = vpack.c.b16 %v5452, %v5451
    %v5668 = vpack.c.b16 %v5454, %v5453
    %v5669 = vpack.c.b16 %v5456, %v5455
    %v5670 = vpack.c.b16 %v5458, %v5457
    %v5671 = vpack.c.b16 %v5460, %v5459
    %v5672 = vpack.c.b16 %v5462, %v5461
    %v5673 = vpack.c.b16 %v5464, %v5463
    %v5674 = vpack.c.b16 %v5466, %v5465
    %v5675 = vpack.c.b16 %v5468, %v5467
    %v5676 = vpack.c.b16 %v5470, %v5469
    %v5677 = vpack.c.b16 %v5472, %v5471
    %v5678 = vpack.c.b16 %v5474, %v5473
    %v5679 = vpack.c.b16 %v5476, %v5475
    %v5680 = vpack.c.b16 %v5478, %v5477
    %v5681 = vpack.c.b16 %v5480, %v5479
    %v5682 = vpack.c.b16 %v5482, %v5481
    %v5683 = vpack.c.b16 %v5484, %v5483
    %v5684 = vpack.c.b16 %v5486, %v5485
    %v5685 = vpack.c.b16 %v5488, %v5487
    %v5686 = vpack.c.b16 %v5490, %v5489
    %v5687 = vpack.c.b16 %v5492, %v5491
    %v5688 = vpack.c.b16 %v5494, %v5493
    %v5689 = vpack.c.b16 %v5496, %v5495
    %v5690 = vpack.c.b16 %v5498, %v5497
    %v5691 = vpack.c.b16 %v5500, %v5499
    %v5692 = vpack.c.b16 %v5502, %v5501
    %v5693 = vpack.c.b16 %v5504, %v5503
    %v5694 = vpack.c.b16 %v5506, %v5505
    %v5695 = vpack.c.b16 %v5508, %v5507
    %v5696 = vpack.c.b16 %v5510, %v5509
    %v5697 = vpack.c.b16 %v5512, %v5511
    %v5698 = vpack.c.b16 %v5514, %v5513
    %v5699 = vpack.c.b16 %v5516, %v5515
    %v5700 = vpack.c.b16 %v5518, %v5517
    %v5701 = vpack.c.b16 %v5520, %v5519
    %v5702 = vpack.c.b16 %v5522, %v5521
    %v5703 = vpack.c.b16 %v5524, %v5523
    %v5704 = vpack.c.b16 %v5526, %v5525
    %v5705 = vpack.c.b16 %v5528, %v5527
    %v5706 = vpack.c.b16 %v5530, %v5529
    %v5707 = vpack.c.b16 %v5532, %v5531
    %v5708 = vpack.c.b16 %v5534, %v5533
    %v5709 = vpack.c.b16 %v5536, %v5535
    %v5710 = vpack.c.b16 %v5538, %v5537
    %v5711 = vpack.c.b16 %v5540, %v5539
    %v5712 = vpack.c.b16 %v5542, %v5541
    %v5713 = vpack.c.b16 %v5544, %v5543
    %v5714 = vpack.c.b16 %v5546, %v5545
    %v5715 = vpack.c.b16 %v5548, %v5547
    %v5716 = vpack.c.b16 %v5550, %v5549
    %v5717 = vpack.c.b16 %v5552, %v5551
    %v5718 = vpack.c.b16 %v5554, %v5553
    %v5719 = vpack.c.b16 %v5556, %v5555
    %v5720 = vpack.c.b16 %v5558, %v5557
    %v5721 = vpack.c.b16 %v5560, %v5559
    %v5722 = vpack.c.b16 %v5562, %v5561
    %v5723 = vpack.c.b16 %v5564, %v5563
    %v5724 = vpack.c.b16 %v5566, %v5565
    %v5725 = vpack.c.b16 %v5568, %v5567
    %v5726 = vpack.c.b16 %v5570, %v5569
    %v5727 = vpack.c.b16 %v5572, %v5571
    %v5728 = vpack.c.b16 %v5574, %v5573
    %v5729 = vpack.c.b16 %v5576, %v5575
    %v5730 = vpack.c.b16 %v5578, %v5577
    %v5731 = vpack.c.b16 %v5580, %v5579
    %v5732 = vpack.c.b16 %v5582, %v5581
    %v5733 = vpack.c.b16 %v5584, %v5583
    %v5734 = vpack.c.b16 %v5586, %v5585
    %v5735 = vpack.c.b16 %v5588, %v5587
    %v5736 = vpack.c.b16 %v5590, %v5589
    %v5737 = vpack.c.b16 %v5592, %v5591
    %v5738 = vpack.c.b16 %v5594, %v5593
    %v5739 = vpack.c.b16 %v5596, %v5595
    %v5740 = vpack.c.b16 %v5598, %v5597
    %v5741 = vpack.c.b16 %v5600, %v5599
    %v5742 = vpack.c.b16 %v5602, %v5601
    %v5743 = vpack.c.b16 %v5604, %v5603
    %v5744 = vpack.c.b16 %v5606, %v5605
    %v5745 = vpack.c.b16 %v5608, %v5607
    %v5746 = vpack.c.b16 %v5610, %v5609
    %v5747 = vpack.c.b16 %v5612, %v5611
    %v5748 = vpack.c.b16 %v5614, %v5613
    %v5749 = vpack.c.b16 %v5616, %v5615
    %v5750 = vpack.c.b16 %v5618, %v5617
    %v5751 = vpack.c.b16 %v5620, %v5619
    %v5752 = vpack.c.b16 %v5622, %v5621
    %v5753 = vpack.c.b16 %v5624, %v5623
    %v5754 = vpack.c.b16 %v5626, %v5625
    %5883 = vmatprep.subr.bf16.mxu0 0
    %5884 = vmatpush1.bf16.msra.mxu0 %v5634
    %5885 = vmatprep.subr.bf16.mxu0 0
    %5886 = vmatpush1.bf16.msra.mxu0 %v5633
    %5887 = vmatprep.subr.bf16.mxu0 0
    %5888 = vmatpush1.bf16.msra.mxu0 %v5632
    %5889 = vmatprep.subr.bf16.mxu0 0
    %5890 = vmatpush1.bf16.msra.mxu0 %v5631
    %5891 = vmatprep.subr.bf16.mxu0 0
    %5892 = vmatpush1.bf16.msra.mxu0 %v5630
    %5893 = vmatprep.subr.bf16.mxu0 0
    %5894 = vmatpush1.bf16.msra.mxu0 %v5629
    %5895 = vmatprep.subr.bf16.mxu0 0
    %5896 = vmatpush1.bf16.msra.mxu0 %v5628
    %5897 = vmatprep.subr.bf16.mxu0 0
    %5898 = vmatpush1.bf16.msra.mxu0 %v5627
    %5899 = vmatprep.subr.bf16.mxu0 0
    %5900 = vmatpush2.bf16.msra.mxu0 %v5642
    %5901 = vmatprep.subr.bf16.mxu0 0
    %5902 = vmatpush2.bf16.msra.mxu0 %v5641
    %5903 = vmatprep.subr.bf16.mxu0 0
    %5904 = vmatpush2.bf16.msra.mxu0 %v5640
    %5905 = vmatprep.subr.bf16.mxu0 0
    %5906 = vmatpush2.bf16.msra.mxu0 %v5639
    %5907 = vmatprep.subr.bf16.mxu0 0
    %5908 = vmatpush2.bf16.msra.mxu0 %v5638
    %5909 = vmatprep.subr.bf16.mxu0 0
    %5910 = vmatpush2.bf16.msra.mxu0 %v5637
    %5911 = vmatprep.subr.bf16.mxu0 0
    %5912 = vmatpush2.bf16.msra.mxu0 %v5636
    %5913 = vmatprep.subr.bf16.mxu0 0
    %5914 = vmatpush2.bf16.msra.mxu0 %v5635
    %5915 = vmatprep.mubr.bf16.mxu0 %v4837
    %5916 = vmatmul.mubr.bf16.gmra.mxu0 %v4836
    %v5917 = vpop.f32.mrf.mxu0
    %v5918 = vadd.f32 %v5113, %v5917
    %v5919 = vpop.f32.mrf.mxu0
    %v5920 = vpop.f32.mrf.mxu0
    %v5921 = vpop.f32.mrf.mxu0
    %5922 = vdwg.mxu0
    %5923 = vmatprep.subr.bf16.mxu0 0
    %5924 = vmatpush1.bf16.msra.mxu0 %v5650
    %5925 = vmatprep.subr.bf16.mxu0 0
    %5926 = vmatpush1.bf16.msra.mxu0 %v5649
    %5927 = vmatprep.subr.bf16.mxu0 0
    %5928 = vmatpush1.bf16.msra.mxu0 %v5648
    %5929 = vmatprep.subr.bf16.mxu0 0
    %5930 = vmatpush1.bf16.msra.mxu0 %v5647
    %5931 = vmatprep.subr.bf16.mxu0 0
    %5932 = vmatpush1.bf16.msra.mxu0 %v5646
    %5933 = vmatprep.subr.bf16.mxu0 0
    %5934 = vmatpush1.bf16.msra.mxu0 %v5645
    %5935 = vmatprep.subr.bf16.mxu0 0
    %5936 = vmatpush1.bf16.msra.mxu0 %v5644
    %5937 = vmatprep.subr.bf16.mxu0 0
    %5938 = vmatpush1.bf16.msra.mxu0 %v5643
    %5939 = vmatprep.subr.bf16.mxu0 0
    %5940 = vmatpush2.bf16.msra.mxu0 %v5658
    %5941 = vmatprep.subr.bf16.mxu0 0
    %5942 = vmatpush2.bf16.msra.mxu0 %v5657
    %5943 = vmatprep.subr.bf16.mxu0 0
    %5944 = vmatpush2.bf16.msra.mxu0 %v5656
    %5945 = vmatprep.subr.bf16.mxu0 0
    %5946 = vmatpush2.bf16.msra.mxu0 %v5655
    %5947 = vmatprep.subr.bf16.mxu0 0
    %5948 = vmatpush2.bf16.msra.mxu0 %v5654
    %5949 = vmatprep.subr.bf16.mxu0 0
    %5950 = vmatpush2.bf16.msra.mxu0 %v5653
    %5951 = vmatprep.subr.bf16.mxu0 0
    %5952 = vmatpush2.bf16.msra.mxu0 %v5652
    %5953 = vmatprep.subr.bf16.mxu0 0
    %5954 = vmatpush2.bf16.msra.mxu0 %v5651
    %5955 = vmatprep.mubr.bf16.mxu0 %v4839
    %5956 = vmatmul.mubr.bf16.gmra.mxu0 %v4838
    %v5957 = vpop.f32.mrf.mxu0
    %v5958 = vadd.f32 %v5918, %v5957
    %v5959 = vpop.f32.mrf.mxu0
    %v5960 = vpop.f32.mrf.mxu0
    %v5961 = vpop.f32.mrf.mxu0
    %5962 = vdwg.mxu0
    %5963 = vmatprep.subr.bf16.mxu0 0
    %5964 = vmatpush1.bf16.msra.mxu0 %v5666
    %5965 = vmatprep.subr.bf16.mxu0 0
    %5966 = vmatpush1.bf16.msra.mxu0 %v5665
    %5967 = vmatprep.subr.bf16.mxu0 0
    %5968 = vmatpush1.bf16.msra.mxu0 %v5664
    %5969 = vmatprep.subr.bf16.mxu0 0
    %5970 = vmatpush1.bf16.msra.mxu0 %v5663
    %5971 = vmatprep.subr.bf16.mxu0 0
    %5972 = vmatpush1.bf16.msra.mxu0 %v5662
    %5973 = vmatprep.subr.bf16.mxu0 0
    %5974 = vmatpush1.bf16.msra.mxu0 %v5661
    %5975 = vmatprep.subr.bf16.mxu0 0
    %5976 = vmatpush1.bf16.msra.mxu0 %v5660
    %5977 = vmatprep.subr.bf16.mxu0 0
    %5978 = vmatpush1.bf16.msra.mxu0 %v5659
    %5979 = vmatprep.subr.bf16.mxu0 0
    %5980 = vmatpush2.bf16.msra.mxu0 %v5674
    %5981 = vmatprep.subr.bf16.mxu0 0
    %5982 = vmatpush2.bf16.msra.mxu0 %v5673
    %5983 = vmatprep.subr.bf16.mxu0 0
    %5984 = vmatpush2.bf16.msra.mxu0 %v5672
    %5985 = vmatprep.subr.bf16.mxu0 0
    %5986 = vmatpush2.bf16.msra.mxu0 %v5671
    %5987 = vmatprep.subr.bf16.mxu0 0
    %5988 = vmatpush2.bf16.msra.mxu0 %v5670
    %5989 = vmatprep.subr.bf16.mxu0 0
    %5990 = vmatpush2.bf16.msra.mxu0 %v5669
    %5991 = vmatprep.subr.bf16.mxu0 0
    %5992 = vmatpush2.bf16.msra.mxu0 %v5668
    %5993 = vmatprep.subr.bf16.mxu0 0
    %5994 = vmatpush2.bf16.msra.mxu0 %v5667
    %5995 = vmatprep.mubr.bf16.mxu0 %v4841
    %5996 = vmatmul.mubr.bf16.gmra.mxu0 %v4840
    %v5997 = vpop.f32.mrf.mxu0
    %v5998 = vadd.f32 %v5958, %v5997
    %v5999 = vpop.f32.mrf.mxu0
    %v6000 = vpop.f32.mrf.mxu0
    %v6001 = vpop.f32.mrf.mxu0
    %6002 = vdwg.mxu0
    %6003 = vmatprep.subr.bf16.mxu0 0
    %6004 = vmatpush1.bf16.msra.mxu0 %v5682
    %6005 = vmatprep.subr.bf16.mxu0 0
    %6006 = vmatpush1.bf16.msra.mxu0 %v5681
    %6007 = vmatprep.subr.bf16.mxu0 0
    %6008 = vmatpush1.bf16.msra.mxu0 %v5680
    %6009 = vmatprep.subr.bf16.mxu0 0
    %6010 = vmatpush1.bf16.msra.mxu0 %v5679
    %6011 = vmatprep.subr.bf16.mxu0 0
    %6012 = vmatpush1.bf16.msra.mxu0 %v5678
    %6013 = vmatprep.subr.bf16.mxu0 0
    %6014 = vmatpush1.bf16.msra.mxu0 %v5677
    %6015 = vmatprep.subr.bf16.mxu0 0
    %6016 = vmatpush1.bf16.msra.mxu0 %v5676
    %6017 = vmatprep.subr.bf16.mxu0 0
    %6018 = vmatpush1.bf16.msra.mxu0 %v5675
    %6019 = vmatprep.subr.bf16.mxu0 0
    %6020 = vmatpush2.bf16.msra.mxu0 %v5690
    %6021 = vmatprep.subr.bf16.mxu0 0
    %6022 = vmatpush2.bf16.msra.mxu0 %v5689
    %6023 = vmatprep.subr.bf16.mxu0 0
    %6024 = vmatpush2.bf16.msra.mxu0 %v5688
    %6025 = vmatprep.subr.bf16.mxu0 0
    %6026 = vmatpush2.bf16.msra.mxu0 %v5687
    %6027 = vmatprep.subr.bf16.mxu0 0
    %6028 = vmatpush2.bf16.msra.mxu0 %v5686
    %6029 = vmatprep.subr.bf16.mxu0 0
    %6030 = vmatpush2.bf16.msra.mxu0 %v5685
    %6031 = vmatprep.subr.bf16.mxu0 0
    %6032 = vmatpush2.bf16.msra.mxu0 %v5684
    %6033 = vmatprep.subr.bf16.mxu0 0
    %6034 = vmatpush2.bf16.msra.mxu0 %v5683
    %6035 = vmatprep.mubr.bf16.mxu0 %v4843
    %6036 = vmatmul.mubr.bf16.gmra.mxu0 %v4842
    %v6037 = vpop.f32.mrf.mxu0
    %v6038 = vadd.f32 %v5998, %v6037
    %v6039 = vpop.f32.mrf.mxu0
    %v6040 = vpop.f32.mrf.mxu0
    %v6041 = vpop.f32.mrf.mxu0
    %6042 = vdwg.mxu0
    %6043 = vmatprep.subr.bf16.mxu0 0
    %6044 = vmatpush1.bf16.msra.mxu0 %v5698
    %6045 = vmatprep.subr.bf16.mxu0 0
    %6046 = vmatpush1.bf16.msra.mxu0 %v5697
    %6047 = vmatprep.subr.bf16.mxu0 0
    %6048 = vmatpush1.bf16.msra.mxu0 %v5696
    %6049 = vmatprep.subr.bf16.mxu0 0
    %6050 = vmatpush1.bf16.msra.mxu0 %v5695
    %6051 = vmatprep.subr.bf16.mxu0 0
    %6052 = vmatpush1.bf16.msra.mxu0 %v5694
    %6053 = vmatprep.subr.bf16.mxu0 0
    %6054 = vmatpush1.bf16.msra.mxu0 %v5693
    %6055 = vmatprep.subr.bf16.mxu0 0
    %6056 = vmatpush1.bf16.msra.mxu0 %v5692
    %6057 = vmatprep.subr.bf16.mxu0 0
    %6058 = vmatpush1.bf16.msra.mxu0 %v5691
    %6059 = vmatprep.subr.bf16.mxu0 0
    %6060 = vmatpush2.bf16.msra.mxu0 %v5706
    %6061 = vmatprep.subr.bf16.mxu0 0
    %6062 = vmatpush2.bf16.msra.mxu0 %v5705
    %6063 = vmatprep.subr.bf16.mxu0 0
    %6064 = vmatpush2.bf16.msra.mxu0 %v5704
    %6065 = vmatprep.subr.bf16.mxu0 0
    %6066 = vmatpush2.bf16.msra.mxu0 %v5703
    %6067 = vmatprep.subr.bf16.mxu0 0
    %6068 = vmatpush2.bf16.msra.mxu0 %v5702
    %6069 = vmatprep.subr.bf16.mxu0 0
    %6070 = vmatpush2.bf16.msra.mxu0 %v5701
    %6071 = vmatprep.subr.bf16.mxu0 0
    %6072 = vmatpush2.bf16.msra.mxu0 %v5700
    %6073 = vmatprep.subr.bf16.mxu0 0
    %6074 = vmatpush2.bf16.msra.mxu0 %v5699
    %6075 = vmatprep.mubr.bf16.mxu0 %v4845
    %6076 = vmatmul.mubr.bf16.gmra.mxu0 %v4844
    %v6077 = vpop.f32.mrf.mxu0
    %v6078 = vadd.f32 %v6038, %v6077
    %v6079 = vpop.f32.mrf.mxu0
    %v6080 = vpop.f32.mrf.mxu0
    %v6081 = vpop.f32.mrf.mxu0
    %6082 = vdwg.mxu0
    %6083 = vmatprep.subr.bf16.mxu0 0
    %6084 = vmatpush1.bf16.msra.mxu0 %v5714
    %6085 = vmatprep.subr.bf16.mxu0 0
    %6086 = vmatpush1.bf16.msra.mxu0 %v5713
    %6087 = vmatprep.subr.bf16.mxu0 0
    %6088 = vmatpush1.bf16.msra.mxu0 %v5712
    %6089 = vmatprep.subr.bf16.mxu0 0
    %6090 = vmatpush1.bf16.msra.mxu0 %v5711
    %6091 = vmatprep.subr.bf16.mxu0 0
    %6092 = vmatpush1.bf16.msra.mxu0 %v5710
    %6093 = vmatprep.subr.bf16.mxu0 0
    %6094 = vmatpush1.bf16.msra.mxu0 %v5709
    %6095 = vmatprep.subr.bf16.mxu0 0
    %6096 = vmatpush1.bf16.msra.mxu0 %v5708
    %6097 = vmatprep.subr.bf16.mxu0 0
    %6098 = vmatpush1.bf16.msra.mxu0 %v5707
    %6099 = vmatprep.subr.bf16.mxu0 0
    %6100 = vmatpush2.bf16.msra.mxu0 %v5722
    %6101 = vmatprep.subr.bf16.mxu0 0
    %6102 = vmatpush2.bf16.msra.mxu0 %v5721
    %6103 = vmatprep.subr.bf16.mxu0 0
    %6104 = vmatpush2.bf16.msra.mxu0 %v5720
    %6105 = vmatprep.subr.bf16.mxu0 0
    %6106 = vmatpush2.bf16.msra.mxu0 %v5719
    %6107 = vmatprep.subr.bf16.mxu0 0
    %6108 = vmatpush2.bf16.msra.mxu0 %v5718
    %6109 = vmatprep.subr.bf16.mxu0 0
    %6110 = vmatpush2.bf16.msra.mxu0 %v5717
    %6111 = vmatprep.subr.bf16.mxu0 0
    %6112 = vmatpush2.bf16.msra.mxu0 %v5716
    %6113 = vmatprep.subr.bf16.mxu0 0
    %6114 = vmatpush2.bf16.msra.mxu0 %v5715
    %6115 = vmatprep.mubr.bf16.mxu0 %v4847
    %6116 = vmatmul.mubr.bf16.gmra.mxu0 %v4846
    %v6117 = vpop.f32.mrf.mxu0
    %v6118 = vadd.f32 %v6078, %v6117
    %v6119 = vpop.f32.mrf.mxu0
    %v6120 = vpop.f32.mrf.mxu0
    %v6121 = vpop.f32.mrf.mxu0
    %6122 = vdwg.mxu0
    %6123 = vmatprep.subr.bf16.mxu0 0
    %6124 = vmatpush1.bf16.msra.mxu0 %v5730
    %6125 = vmatprep.subr.bf16.mxu0 0
    %6126 = vmatpush1.bf16.msra.mxu0 %v5729
    %6127 = vmatprep.subr.bf16.mxu0 0
    %6128 = vmatpush1.bf16.msra.mxu0 %v5728
    %6129 = vmatprep.subr.bf16.mxu0 0
    %6130 = vmatpush1.bf16.msra.mxu0 %v5727
    %6131 = vmatprep.subr.bf16.mxu0 0
    %6132 = vmatpush1.bf16.msra.mxu0 %v5726
    %6133 = vmatprep.subr.bf16.mxu0 0
    %6134 = vmatpush1.bf16.msra.mxu0 %v5725
    %6135 = vmatprep.subr.bf16.mxu0 0
    %6136 = vmatpush1.bf16.msra.mxu0 %v5724
    %6137 = vmatprep.subr.bf16.mxu0 0
    %6138 = vmatpush1.bf16.msra.mxu0 %v5723
    %6139 = vmatprep.subr.bf16.mxu0 0
    %6140 = vmatpush2.bf16.msra.mxu0 %v5738
    %6141 = vmatprep.subr.bf16.mxu0 0
    %6142 = vmatpush2.bf16.msra.mxu0 %v5737
    %6143 = vmatprep.subr.bf16.mxu0 0
    %6144 = vmatpush2.bf16.msra.mxu0 %v5736
    %6145 = vmatprep.subr.bf16.mxu0 0
    %6146 = vmatpush2.bf16.msra.mxu0 %v5735
    %6147 = vmatprep.subr.bf16.mxu0 0
    %6148 = vmatpush2.bf16.msra.mxu0 %v5734
    %6149 = vmatprep.subr.bf16.mxu0 0
    %6150 = vmatpush2.bf16.msra.mxu0 %v5733
    %6151 = vmatprep.subr.bf16.mxu0 0
    %6152 = vmatpush2.bf16.msra.mxu0 %v5732
    %6153 = vmatprep.subr.bf16.mxu0 0
    %6154 = vmatpush2.bf16.msra.mxu0 %v5731
    %6155 = vmatprep.mubr.bf16.mxu0 %v4849
    %6156 = vmatmul.mubr.bf16.gmra.mxu0 %v4848
    %v6157 = vpop.f32.mrf.mxu0
    %v6158 = vadd.f32 %v6118, %v6157
    %v6159 = vpop.f32.mrf.mxu0
    %v6160 = vpop.f32.mrf.mxu0
    %v6161 = vpop.f32.mrf.mxu0
    %6162 = vdwg.mxu0
    %6163 = vmatprep.subr.bf16.mxu0 0
    %6164 = vmatpush1.bf16.msra.mxu0 %v5746
    %6165 = vmatprep.subr.bf16.mxu0 0
    %6166 = vmatpush1.bf16.msra.mxu0 %v5745
    %6167 = vmatprep.subr.bf16.mxu0 0
    %6168 = vmatpush1.bf16.msra.mxu0 %v5744
    %6169 = vmatprep.subr.bf16.mxu0 0
    %6170 = vmatpush1.bf16.msra.mxu0 %v5743
    %6171 = vmatprep.subr.bf16.mxu0 0
    %6172 = vmatpush1.bf16.msra.mxu0 %v5742
    %6173 = vmatprep.subr.bf16.mxu0 0
    %6174 = vmatpush1.bf16.msra.mxu0 %v5741
    %6175 = vmatprep.subr.bf16.mxu0 0
    %6176 = vmatpush1.bf16.msra.mxu0 %v5740
    %6177 = vmatprep.subr.bf16.mxu0 0
    %6178 = vmatpush1.bf16.msra.mxu0 %v5739
    %6179 = vmatprep.subr.bf16.mxu0 0
    %6180 = vmatpush2.bf16.msra.mxu0 %v5754
    %6181 = vmatprep.subr.bf16.mxu0 0
    %6182 = vmatpush2.bf16.msra.mxu0 %v5753
    %6183 = vmatprep.subr.bf16.mxu0 0
    %6184 = vmatpush2.bf16.msra.mxu0 %v5752
    %6185 = vmatprep.subr.bf16.mxu0 0
    %6186 = vmatpush2.bf16.msra.mxu0 %v5751
    %6187 = vmatprep.subr.bf16.mxu0 0
    %6188 = vmatpush2.bf16.msra.mxu0 %v5750
    %6189 = vmatprep.subr.bf16.mxu0 0
    %6190 = vmatpush2.bf16.msra.mxu0 %v5749
    %6191 = vmatprep.subr.bf16.mxu0 0
    %6192 = vmatpush2.bf16.msra.mxu0 %v5748
    %6193 = vmatprep.subr.bf16.mxu0 0
    %6194 = vmatpush2.bf16.msra.mxu0 %v5747
    %6195 = vmatprep.mubr.bf16.mxu0 %v4851
    %6196 = vmatmul.mubr.bf16.gmra.mxu0 %v4850
    %v6197 = vpop.f32.mrf.mxu0
    %v6198 = vadd.f32 %v6158, %v6197
    %v6199 = vpop.f32.mrf.mxu0
    %v6200 = vpop.f32.mrf.mxu0
    %v6201 = vpop.f32.mrf.mxu0
    %6202 = vdwg.mxu0
    %v6203 = vadd.f32 %v3630, %v6198
    %v6204 = vld [vmem:[#allocation22] sm:$0x1]
    %v6205 = vld [vmem:[#allocation24] sm:$0x1]
    %6206 = vadd.xlane.f32.xlu0 %v6203
    %v6207 = vpop.xlane.xlu0 %6206
    %v6208 = vmul.f32 %v6207, %v3607
    %v6209 = vsub.f32 %v6203, %v6208
    %v6210 = vmul.f32 %v6209, %v6209
    %6211 = vadd.xlane.f32.xlu0 %v6210
    %v6212 = vpop.xlane.xlu0 %6211
    %v6213 = vmul.f32 %v6212, %v3607
    %v6214 = vadd.f32 %v6213, 1e-05
    %v6215 = vrsqrt.pop %v6214
    %v6216 = vmul.f32 %v6209, %v6215
    %v6218 = vlaneseq
    %v6219 = vshrl.u32 %v6218, 7
    %v6220 = vsub.s32 0, %v6219
    %v6221 = vrot.slane %v6204, %v6220
    %v6223 = vmul.f32 %v6216, %v6221
    %v6225 = vlaneseq
    %v6226 = vshrl.u32 %v6225, 7
    %v6227 = vsub.s32 0, %v6226
    %v6228 = vrot.slane %v6205, %v6227
    %v6230 = vadd.f32 %v6223, %v6228
    %v6231 = vpack.c.bf16 %v6230, %v6230
    %v6232 = vld [vmem:[%s19] sm:$0xf]
    %v6233 = vld [vmem:[%s19 + $0x4] sm:$0xf]
    %v6234 = vld [vmem:[%s19 + $0x8] sm:$0xf]
    %v6235 = vld [vmem:[%s19 + $0xc] sm:$0xf]
    %v6236 = vld [vmem:[%s19 + $0x10] sm:$0xf]
    %v6237 = vld [vmem:[%s19 + $0x14] sm:$0xf]
    %v6238 = vld [vmem:[%s19 + $0x18] sm:$0xf]
    %v6239 = vld [vmem:[%s19 + $0x1c] sm:$0xf]
    %v6240 = vld [vmem:[%s19 + $0x20] sm:$0xf]
    %v6241 = vld [vmem:[%s19 + $0x24] sm:$0xf]
    %v6242 = vld [vmem:[%s19 + $0x28] sm:$0xf]
    %v6243 = vld [vmem:[%s19 + $0x2c] sm:$0xf]
    %v6244 = vld [vmem:[%s19 + $0x30] sm:$0xf]
    %v6245 = vld [vmem:[%s19 + $0x34] sm:$0xf]
    %v6246 = vld [vmem:[%s19 + $0x38] sm:$0xf]
    %v6247 = vld [vmem:[%s19 + $0x3c] sm:$0xf]
    %v6248 = vld [vmem:[#allocation25] sm:$0x1]
    %v6250 = vlaneseq
    %v6251 = vshrl.u32 %v6250, 7
    %v6252 = vsub.s32 0, %v6251
    %v6253 = vrot.slane %v6248, %v6252
    %v6271 = vunpack.c.l.b16 %v6232
    %v6272 = vunpack.c.l.b16 %v6233
    %v6273 = vunpack.c.l.b16 %v6234
    %v6274 = vunpack.c.l.b16 %v6235
    %v6275 = vunpack.c.l.b16 %v6236
    %v6276 = vunpack.c.l.b16 %v6237
    %v6277 = vunpack.c.l.b16 %v6238
    %v6278 = vunpack.c.l.b16 %v6239
    %v6279 = vunpack.c.l.b16 %v6240
    %v6280 = vunpack.c.l.b16 %v6241
    %v6281 = vunpack.c.l.b16 %v6242
    %v6282 = vunpack.c.l.b16 %v6243
    %v6283 = vunpack.c.l.b16 %v6244
    %v6284 = vunpack.c.l.b16 %v6245
    %v6285 = vunpack.c.l.b16 %v6246
    %v6286 = vunpack.c.l.b16 %v6247
    %v6287 = vpack.c.b16 %v6272, %v6271
    %v6288 = vpack.c.b16 %v6274, %v6273
    %v6289 = vpack.c.b16 %v6276, %v6275
    %v6290 = vpack.c.b16 %v6278, %v6277
    %v6291 = vpack.c.b16 %v6280, %v6279
    %v6292 = vpack.c.b16 %v6282, %v6281
    %v6293 = vpack.c.b16 %v6284, %v6283
    %v6294 = vpack.c.b16 %v6286, %v6285
    %6303 = vmatprep.subr.bf16.mxu0 0
    %6304 = vmatpush1.bf16.msra.mxu0 %v6294
    %6305 = vmatprep.subr.bf16.mxu0 0
    %6306 = vmatpush1.bf16.msra.mxu0 %v6293
    %6307 = vmatprep.subr.bf16.mxu0 0
    %6308 = vmatpush1.bf16.msra.mxu0 %v6292
    %6309 = vmatprep.subr.bf16.mxu0 0
    %6310 = vmatpush1.bf16.msra.mxu0 %v6291
    %6311 = vmatprep.subr.bf16.mxu0 0
    %6312 = vmatpush1.bf16.msra.mxu0 %v6290
    %6313 = vmatprep.subr.bf16.mxu0 0
    %6314 = vmatpush1.bf16.msra.mxu0 %v6289
    %6315 = vmatprep.subr.bf16.mxu0 0
    %6316 = vmatpush1.bf16.msra.mxu0 %v6288
    %6317 = vmatprep.subr.bf16.mxu0 0
    %6318 = vmatpush1.bf16.msra.mxu0 %v6287
    %6319 = vmatprep.subr.bf16.mxu0 0
    %6320 = vmatpush2.bf16.msra.mxu0 0
    %6321 = vmatprep.subr.bf16.mxu0 0
    %6322 = vmatpush2.bf16.msra.mxu0 0
    %6323 = vmatprep.subr.bf16.mxu0 0
    %6324 = vmatpush2.bf16.msra.mxu0 0
    %6325 = vmatprep.subr.bf16.mxu0 0
    %6326 = vmatpush2.bf16.msra.mxu0 0
    %6327 = vmatprep.subr.bf16.mxu0 0
    %6328 = vmatpush2.bf16.msra.mxu0 0
    %6329 = vmatprep.subr.bf16.mxu0 0
    %6330 = vmatpush2.bf16.msra.mxu0 0
    %6331 = vmatprep.subr.bf16.mxu0 0
    %6332 = vmatpush2.bf16.msra.mxu0 0
    %6333 = vmatprep.subr.bf16.mxu0 0
    %6334 = vmatpush2.bf16.msra.mxu0 0
    %6335 = vmatprep.mubr.bf16.mxu0 0
    %6336 = vmatmul.mubr.bf16.gmra.mxu0 %v6231
    %v6337 = vpop.f32.mrf.mxu0
    %v6338 = vadd.f32 %v6253, %v6337
    %v6339 = vpop.f32.mrf.mxu0
    %v6340 = vpop.f32.mrf.mxu0
    %v6341 = vpop.f32.mrf.mxu0
    %6342 = vdwg.mxu0
    %v6343 = vmax.f32 %v6338, 0.0
    %v6344 = vpack.c.bf16 %v6343, %v6343
    %v6345 = vld [vmem:[#allocation27] sm:$0xf]
    %v6346 = vld [vmem:[#allocation27 + $0x4] sm:$0xf]
    %v6347 = vld [vmem:[#allocation27 + $0x8] sm:$0xf]
    %v6348 = vld [vmem:[#allocation27 + $0xc] sm:$0xf]
    %v6349 = vld [vmem:[#allocation27 + $0x10] sm:$0xf]
    %v6350 = vld [vmem:[#allocation27 + $0x14] sm:$0xf]
    %v6351 = vld [vmem:[#allocation27 + $0x18] sm:$0xf]
    %v6352 = vld [vmem:[#allocation27 + $0x1c] sm:$0xf]
    %v6353 = vld [vmem:[#allocation28] sm:$0x1]
    %v6355 = vlaneseq
    %v6356 = vshrl.u32 %v6355, 7
    %v6357 = vsub.s32 0, %v6356
    %v6358 = vrot.slane %v6353, %v6357
    %v6368 = vunpack.c.l.b16 %v6345
    %v6369 = vunpack.c.l.b16 %v6346
    %v6370 = vunpack.c.l.b16 %v6347
    %v6371 = vunpack.c.l.b16 %v6348
    %v6372 = vunpack.c.l.b16 %v6349
    %v6373 = vunpack.c.l.b16 %v6350
    %v6374 = vunpack.c.l.b16 %v6351
    %v6375 = vunpack.c.l.b16 %v6352
    %v6376 = vpack.c.b16 %v6369, %v6368
    %v6377 = vpack.c.b16 %v6371, %v6370
    %v6378 = vpack.c.b16 %v6373, %v6372
    %v6379 = vpack.c.b16 %v6375, %v6374
    %v6385 = vsel %vm3486, %v6344, 0
    %6387 = vmatprep.subr.bf16.mxu0 0
    %6388 = vmatpush1.bf16.msra.mxu0 0
    %6389 = vmatprep.subr.bf16.mxu0 0
    %6390 = vmatpush1.bf16.msra.mxu0 0
    %6391 = vmatprep.subr.bf16.mxu0 0
    %6392 = vmatpush1.bf16.msra.mxu0 0
    %6393 = vmatprep.subr.bf16.mxu0 0
    %6394 = vmatpush1.bf16.msra.mxu0 0
    %6395 = vmatprep.subr.bf16.mxu0 0
    %6396 = vmatpush1.bf16.msra.mxu0 %v6379
    %6397 = vmatprep.subr.bf16.mxu0 0
    %6398 = vmatpush1.bf16.msra.mxu0 %v6378
    %6399 = vmatprep.subr.bf16.mxu0 0
    %6400 = vmatpush1.bf16.msra.mxu0 %v6377
    %6401 = vmatprep.subr.bf16.mxu0 0
    %6402 = vmatpush1.bf16.msra.mxu0 %v6376
    %6403 = vmatprep.subr.bf16.mxu0 0
    %6404 = vmatpush2.bf16.msra.mxu0 0
    %6405 = vmatprep.subr.bf16.mxu0 0
    %6406 = vmatpush2.bf16.msra.mxu0 0
    %6407 = vmatprep.subr.bf16.mxu0 0
    %6408 = vmatpush2.bf16.msra.mxu0 0
    %6409 = vmatprep.subr.bf16.mxu0 0
    %6410 = vmatpush2.bf16.msra.mxu0 0
    %6411 = vmatprep.subr.bf16.mxu0 0
    %6412 = vmatpush2.bf16.msra.mxu0 0
    %6413 = vmatprep.subr.bf16.mxu0 0
    %6414 = vmatpush2.bf16.msra.mxu0 0
    %6415 = vmatprep.subr.bf16.mxu0 0
    %6416 = vmatpush2.bf16.msra.mxu0 0
    %6417 = vmatprep.subr.bf16.mxu0 0
    %6418 = vmatpush2.bf16.msra.mxu0 0
    %6419 = vmatprep.mubr.bf16.mxu0 0
    %6420 = vmatmul.mubr.bf16.gmra.mxu0 %v6385
    %v6421 = vpop.f32.mrf.mxu0
    %v6422 = vadd.f32 %v6358, %v6421
    %v6423 = vpop.f32.mrf.mxu0
    %v6424 = vpop.f32.mrf.mxu0
    %v6425 = vpop.f32.mrf.mxu0
    %6426 = vdwg.mxu0
    %6427 = vst [vmem:[%s23] sm:$0xff] %v6422
    // Predicated region
    $region188: #{model_forward.1} parent=1 // pred_check
      _
    $region189: #{model_forward.1} parent=1 // pred_check_branch
      %6429 = sbr.rel (0) target = $region191
    $region190: #{model_forward.1} parent=1 // pred_region
      _
    $region191: #{model_forward.1} parent=1 // pred_fallthru
      _
    // Predicated region
    $region192: #{model_forward.1} parent=1 // pred_check
      _
    $region193: #{model_forward.1} parent=1 // pred_check_branch
      %6431 = sbr.rel (0) target = $region195
    $region194: #{model_forward.1} parent=1 // pred_region
      _
    $region195: #{model_forward.1} parent=1 // pred_fallthru
      _
    %6432 = vsyncpa [#allocation6], 1
    %6433 = vsyncpa [#allocation8], 1
    %6434 = vsyncpa [#allocation11], 1
    %6435 = vsyncpa [#allocation14], 1
    %6436 = vsyncpa [#allocation17], 1
    %6437 = vsyncpa [#allocation20], 1
    %6438 = vsyncpa [#allocation23], 1
    %6439 = vsyncpa [#allocation26], 1
    %6440 = vsyncpa [#allocation29], 1
  %6441 = vsyncmov [#allocation4]
  %s6442 = vpop.sfrf %6441
  %p6443 = scmp.eq.s32.totalorder %s6442, 0
  %p6444 = pneg %p6443
  %6446 = shalt.err (%p6444)
  %s6447 = scalar_lea.sflag [#allocation4], 1
  %6448 = vsyncmov %s6447
  %s6449 = vpop.sfrf %6448
  %p6450 = scmp.eq.s32.totalorder %s6449, 0
  %p6451 = pneg %p6450
  %6453 = shalt.err (%p6451)

</llo_original>
